<compile_context>
chip_gen: v7x
topology: tpu7x:2x2x1
jax: 0.10.0
libtpu: 0.0.40
codegen_flags: <defaults>
</compile_context>

<pallas_src>
import numpy as np
import jax
import jax.numpy as jnp
from jax.experimental import pallas as pl
from jax.experimental.pallas import tpu as pltpu

# ----------------------------- configuration -------------------------------
B = 2            # batch
L1, L2 = 4, 2    # channels of modality 1 / modality 2
P = 8            # spatial patch size
E = 64           # encoder_embed_dim (must be 64: Mutual_info(64, 64))
C = 6            # num_classes
HEADS = 4
DIM_HEAD = 16    # HEADS * DIM_HEAD == E
MLP_DIM = 32
D1 = L1 * P * P  # 256
D2 = L2 * P * P  # 128
NUM_TOKENS = 7   # cls + 6 modality/scale tokens
BN = B * NUM_TOKENS
DEC_DIM = 3 * D1 + 3 * D2   # 1152 packed feature / reconstruction width
EMB_OUT = 7 * E             # 448: 6 token columns + CNN-branch columns
HEAD_OUT_PAD = 128          # lane-dense padded width for the 6 fused heads (6*C=36)
LN_EPS = 1e-5               # PyTorch nn.LayerNorm default


def _mxu_dot(a, b):
    """bf16-operand matmul with fp32 accumulation (MXU-native path)."""
    return jnp.dot(a.astype(jnp.bfloat16), b.astype(jnp.bfloat16),
                   preferred_element_type=jnp.float32)


def _layernorm(x, g, b):
    mu = jnp.mean(x, axis=-1, keepdims=True)
    var = jnp.mean((x - mu) * (x - mu), axis=-1, keepdims=True)
    return (x - mu) * jax.lax.rsqrt(var + LN_EPS) * g + b


# ------------------------------ fused kernel --------------------------------
def _mma_kernel(feat_ref, emb_w, emb_b, tokpos, attn_bias, pool_sel, perm,
                ln_ref, qkv_w, qkv_b, proj_w, proj_b,
                wm1, bm1, wm2, bm2, heads_w, heads_b,
                dec_w, dec_b, dec_scale,
                mi_w1, mi_b1, mi_w2, mi_b2, xishu,
                head_out_ref, fused_ref, loss_ref, seq_scr):
    feat = feat_ref[...]                                   # [B, 1152]

    # ---- all 6 patch embeddings + CNN branch: ONE packed matmul ----
    # TODO(synk): encoder_A_and_B reference definition unavailable; linear
    # patch embeddings + linear/ReLU CNN branch are used as stand-ins.
    tok = _mxu_dot(feat, emb_w[...]) + emb_b[...]          # [B, 7E]
    x_cnn = jnp.maximum(tok[:, 6 * E:7 * E], 0.0)
    x_fuse1 = (tok[:, 0:E] + tok[:, E:2 * E] + tok[:, 2 * E:3 * E]) * (1.0 / 3.0)
    x_fuse2 = (tok[:, 3 * E:4 * E] + tok[:, 4 * E:5 * E] + tok[:, 5 * E:6 * E]) * (1.0 / 3.0)

    # ---- assemble cls + 6 tokens + pos sequence in VMEM scratch ----
    tp = tokpos[...]                                       # row 0 = cls + pos[0]
    for b_i in range(B):
        base = b_i * NUM_TOKENS
        seq_scr[base:base + 1, :] = tp[0:1, :]
        for t in range(6):
            seq_scr[base + 1 + t:base + 2 + t, :] = (
                tok[b_i:b_i + 1, t * E:(t + 1) * E] + tp[t + 1:t + 2, :])
    seq = seq_scr[...]                                     # [BN, E] fp32

    # ---- transformer fusion block (depth-1 stand-in) ----
    # TODO(synk): en_depth unknown (encoder reference unavailable); one block.
    ln = ln_ref[...]
    h = _layernorm(seq, ln[0:1, :], ln[1:2, :])
    qkv = _mxu_dot(h, qkv_w[...]) + qkv_b[...]             # [BN, 3E] (one matmul)
    bias = attn_bias[...]                                  # precomputed block-diag mask
    scale = 1.0 / (DIM_HEAD ** 0.5)
    heads_o = []
    for hd in range(HEADS):
        lo = hd * DIM_HEAD
        q = qkv[:, lo:lo + DIM_HEAD]
        k = qkv[:, E + lo:E + lo + DIM_HEAD]
        v = qkv[:, 2 * E + lo:2 * E + lo + DIM_HEAD]
        s = jax.lax.dot_general(
            q.astype(jnp.bfloat16), k.astype(jnp.bfloat16),
            (((1,), (1,)), ((), ())),
            preferred_element_type=jnp.float32) * scale + bias   # [BN, BN]
        s = s - jnp.max(s, axis=-1, keepdims=True)
        p = jnp.exp(s)
        p = p * pl.reciprocal(jnp.sum(p, axis=-1, keepdims=True), approx=True)
        heads_o.append(_mxu_dot(p, v))                     # [BN, Dh]
    o = jnp.concatenate(heads_o, axis=1)                   # lane concat -> [BN, E]
    seq = seq + _mxu_dot(o, proj_w[...]) + proj_b[...]     # single proj matmul

    h2 = _layernorm(seq, ln[2:3, :], ln[3:4, :])
    m = jax.nn.gelu(_mxu_dot(h2, wm1[...]) + bm1[...])
    seq = seq + _mxu_dot(m, wm2[...]) + bm2[...]

    # ---- pooled outputs (cls row, mean of the 6 tokens) via one bf16 matmul ----
    pooled = _mxu_dot(pool_sel[...], seq)                  # [2B, E]
    x_vit = pooled[0:B, :]
    x_tf = pooled[B:2 * B, :] * (1.0 / (NUM_TOKENS - 1))

    # ---- 6 classification / auxiliary heads: one lane-dense matmul ----
    # TODO(synk): classification reference unavailable; joint head assumes
    # [x_vit | x_cnn] input order.
    slab = jnp.concatenate([x_fuse1, x_fuse2, x_cnn, x_vit], axis=1)   # [B, 4E]
    head_out_ref[...] = (_mxu_dot(slab, heads_w[...]) + heads_b[...]
                         ).astype(head_out_ref.dtype)

    # ---- decoder reconstruction loss against the already-resident feature ----
    # TODO(synk): decoder reference definition unavailable; fused linear
    # reconstruction + sum of six per-target MSE means is used as a stand-in.
    recon = _mxu_dot(x_vit, dec_w[...]) + dec_b[...]       # [B, 1152]
    d = recon - feat
    con = jnp.sum(d * d * dec_scale[...], axis=(0, 1), keepdims=True)  # [1,1]

    # ---- 3 MINE-style mutual-information estimators ----
    # TODO(synk): Mutual_info reference definition unavailable; MINE-style
    # MLP(128->64->1) lower-bound estimator is used as a stand-in.
    # Shuffled marginals = roll-by-1 along the batch, done in-kernel via a
    # tiny permutation matmul (no wrapper round trip).
    x2_marg = _mxu_dot(perm[...], x_fuse2)
    xt_marg = _mxu_dot(perm[...], x_tf)

    def mine(x, y, y_marg, idx):
        w1 = mi_w1[idx]                                    # [2E, 64]
        b1 = mi_b1[idx:idx + 1, :]
        w2 = mi_w2[idx:idx + 1, :]                         # second layer (transposed)
        b2 = mi_b2[idx:idx + 1, :]
        hx = _mxu_dot(x, w1[0:E, :])                       # shared across joint/marg
        wy = w1[E:2 * E, :]

        def score(yy):
            hh = jnp.maximum(hx + _mxu_dot(yy, wy) + b1, 0.0)
            return jnp.sum(hh * w2, axis=-1, keepdims=True) + b2      # [B,1]

        tj = score(y)
        tm = score(y_marg)
        return (jnp.mean(tj, axis=0, keepdims=True)
                - jnp.log(jnp.mean(jnp.exp(tm), axis=0, keepdims=True) + 1e-8))

    xs = xishu[...]                                        # [1, 2]
    mutual = (mine(x_fuse1, x_fuse2, x2_marg, 0)
              - xs[:, 0:1] * mine(x_tf, x_fuse2, x2_marg, 1)
              - xs[:, 1:2] * mine(x_fuse1, x_tf, xt_marg, 2))          # [1,1]

    # ---- consolidated small outputs ----
    fused_ref[...] = jnp.concatenate([x_fuse1, x_fuse2, x_tf], axis=1)  # [B, 3E]
    col = jax.lax.broadcasted_iota(jnp.int32, (1, 128), 1)
    loss_ref[...] = (jnp.where(col == 0, con, 0.0)
                     + jnp.where(col == 1, mutual, 0.0))


# ------------------------------ parameters ----------------------------------
def init_params(key):
    keys = iter(jax.random.split(key, 32))

    def rnd(shape, scale=0.02):
        return jax.random.normal(next(keys), shape, jnp.float32) * scale

    # packed embedding weight: block-diag per-scale embeddings + dense CNN cols
    emb_w = jnp.zeros((DEC_DIM, EMB_OUT), jnp.float32)
    offs = (0, D1, 2 * D1, 3 * D1, 3 * D1 + D2, 3 * D1 + 2 * D2)
    widths = (D1, D1, D1, D2, D2, D2)
    for i, (o, wd) in enumerate(zip(offs, widths)):
        emb_w = emb_w.at[o:o + wd, i * E:(i + 1) * E].set(rnd((wd, E)))
    emb_w = emb_w.at[:, 6 * E:7 * E].set(rnd((DEC_DIM, E)))   # CNN-branch stand-in
    emb_b = jnp.zeros((1, EMB_OUT), jnp.float32)

    cls = rnd((1, E))
    pos = rnd((NUM_TOKENS, E))
    tokpos = pos.at[0:1, :].add(cls)          # fold cls token into pos row 0

    ln = jnp.concatenate([jnp.ones((1, E), jnp.float32),
                          jnp.zeros((1, E), jnp.float32),
                          jnp.ones((1, E), jnp.float32),
                          jnp.zeros((1, E), jnp.float32)], axis=0)

    qkv_w = rnd((E, 3 * E)); qkv_b = jnp.zeros((1, 3 * E), jnp.float32)
    proj_w = rnd((E, E));    proj_b = jnp.zeros((1, E), jnp.float32)
    wm1 = rnd((E, MLP_DIM)); bm1 = jnp.zeros((1, MLP_DIM), jnp.float32)
    wm2 = rnd((MLP_DIM, E)); bm2 = jnp.zeros((1, E), jnp.float32)

    # fused heads slab: input rows [x_fuse1 | x_fuse2 | x_cnn | x_vit]
    hw = jnp.zeros((4 * E, HEAD_OUT_PAD), jnp.float32)
    hw = hw.at[0:E,         0 * C:1 * C].set(rnd((E, C)))   # x1_out
    hw = hw.at[E:2 * E,     1 * C:2 * C].set(rnd((E, C)))   # x2_out
    hw = hw.at[2 * E:3 * E, 2 * C:3 * C].set(rnd((E, C)))   # x1c_out
    hw = hw.at[3 * E:4 * E, 3 * C:4 * C].set(rnd((E, C)))   # x_cls_trans
    hw = hw.at[2 * E:3 * E, 4 * C:5 * C].set(rnd((E, C)))   # x_cls_cnn
    cj = rnd((2 * E, C))                                    # joint head [x_vit|x_cnn]
    hw = hw.at[3 * E:4 * E, 5 * C:6 * C].set(cj[:E])
    hw = hw.at[2 * E:3 * E, 5 * C:6 * C].set(cj[E:])
    hb = jnp.zeros((1, HEAD_OUT_PAD), jnp.float32)

    dec_w = rnd((E, DEC_DIM)); dec_b = jnp.zeros((1, DEC_DIM), jnp.float32)

    # MINE MLPs 2E -> 64 -> 1 (second layer stored transposed)
    mi_w1 = jnp.stack([rnd((2 * E, 64)) for _ in range(3)], axis=0)   # [3,128,64]
    mi_b1 = jnp.zeros((3, 64), jnp.float32)
    mi_w2 = rnd((3, 64))
    mi_b2 = jnp.zeros((3, 1), jnp.float32)

    xishu = jnp.full((1, 2), 0.5, jnp.float32)

    # ---------- derived constants (baked once, passed as kernel inputs) ----------
    rb = np.arange(BN)[:, None] // NUM_TOKENS
    cb = np.arange(BN)[None, :] // NUM_TOKENS
    attn_bias = jnp.asarray(np.where(rb == cb, 0.0, -1e30).astype(np.float32))

    sel = np.zeros((2 * B, BN), np.float32)
    for b_i in range(B):
        sel[b_i, b_i * NUM_TOKENS] = 1.0                         # cls token row
        sel[B + b_i, b_i * NUM_TOKENS + 1:(b_i + 1) * NUM_TOKENS] = 1.0   # token sum
    pool_sel = jnp.asarray(sel)

    pm = np.zeros((B, B), np.float32)
    for i in range(B):
        pm[i, (i - 1) % B] = 1.0                                 # roll-by-1 marginal
    perm = jnp.asarray(pm)

    dsc = np.concatenate([np.full((3 * D1,), 1.0 / (B * D1), np.float32),
                          np.full((3 * D2,), 1.0 / (B * D2), np.float32)])[None, :]
    dec_scale = jnp.asarray(dsc)

    return dict(emb_w=emb_w, emb_b=emb_b, tokpos=tokpos, ln=ln,
                qkv_w=qkv_w, qkv_b=qkv_b, proj_w=proj_w, proj_b=proj_b,
                wm1=wm1, bm1=bm1, wm2=wm2, bm2=bm2,
                heads_w=hw, heads_b=hb, dec_w=dec_w, dec_b=dec_b,
                mi_w1=mi_w1, mi_b1=mi_b1, mi_w2=mi_w2, mi_b2=mi_b2,
                xishu=xishu, attn_bias=attn_bias, pool_sel=pool_sel,
                perm=perm, dec_scale=dec_scale)


# ------------------------------ MMA forward ---------------------------------
def mma_forward(params, img11, img21, img12, img22, img13, img23):
    b = img11.shape[0]
    # packed feature [B, 1152] in order [f11|f12|f13|f21|f22|f23] (matches the
    # embedding / decoder weight packing); reused in-kernel as decoder target.
    feat = jnp.concatenate(
        [img11.reshape(b, -1), img12.reshape(b, -1), img13.reshape(b, -1),
         img21.reshape(b, -1), img22.reshape(b, -1), img23.reshape(b, -1)], axis=1)

    head_out, fused, loss = pl.pallas_call(
        _mma_kernel,
        out_shape=(jax.ShapeDtypeStruct((b, HEAD_OUT_PAD), jnp.float32),
                   jax.ShapeDtypeStruct((b, 3 * E), jnp.float32),
                   jax.ShapeDtypeStruct((1, 128), jnp.float32)),
        scratch_shapes=[pltpu.VMEM((b * NUM_TOKENS, E), jnp.float32)],
    )(feat,
      params["emb_w"], params["emb_b"], params["tokpos"],
      params["attn_bias"], params["pool_sel"], params["perm"], params["ln"],
      params["qkv_w"], params["qkv_b"], params["proj_w"], params["proj_b"],
      params["wm1"], params["bm1"], params["wm2"], params["bm2"],
      params["heads_w"], params["heads_b"],
      params["dec_w"], params["dec_b"], params["dec_scale"],
      params["mi_w1"], params["mi_b1"], params["mi_w2"], params["mi_b2"],
      params["xishu"])

    x1_out      = head_out[:, 0 * C:1 * C]
    x2_out      = head_out[:, 1 * C:2 * C]
    x1c_out     = head_out[:, 2 * C:3 * C]
    x_cls_trans = head_out[:, 3 * C:4 * C]
    x_cls_cnn   = head_out[:, 4 * C:5 * C]
    x_cls       = head_out[:, 5 * C:6 * C]

    x_fuse1 = fused[:, 0:E]
    x_fuse2 = fused[:, E:2 * E]
    x_transfusion = fused[:, 2 * E:3 * E]

    con_loss = loss[0, 0]
    mutual_loss = loss[0, 1]

    return (x_cls, x_cls_cnn, x_cls_trans, x1_out, x2_out, con_loss,
            x1c_out, mutual_loss, x_fuse1, x_fuse2, x_transfusion)


# ---------------------------------- main -------------------------------------
if __name__ == "__main__":
    root = jax.random.PRNGKey(0)
    pkey, dkey = jax.random.split(root)
    params = init_params(pkey)

    ks = jax.random.split(dkey, 6)
    img11 = jax.random.normal(ks[0], (B, L1, P, P), jnp.float32)
    img21 = jax.random.normal(ks[1], (B, L2, P, P), jnp.float32)
    img12 = jax.random.normal(ks[2], (B, L1, P, P), jnp.float32)
    img22 = jax.random.normal(ks[3], (B, L2, P, P), jnp.float32)
    img13 = jax.random.normal(ks[4], (B, L1, P, P), jnp.float32)
    img23 = jax.random.normal(ks[5], (B, L2, P, P), jnp.float32)

    mma_fn = jax.jit(mma_forward)
    outs = mma_fn(params, img11, img21, img12, img22, img13, img23)
    jax.block_until_ready(outs)
    print("KERNEL_OK")
</pallas_src>

<mosaic_0001>
module attributes {stable_mosaic.version = 11 : i64} {
  func.func @_mma_kernel(%arg0: memref<2x1152xf32, #tpu.memory_space<vmem>>, %arg1: memref<1152x448xf32, #tpu.memory_space<vmem>>, %arg2: memref<1x448xf32, #tpu.memory_space<vmem>>, %arg3: memref<7x64xf32, #tpu.memory_space<vmem>>, %arg4: memref<14x14xf32, #tpu.memory_space<vmem>>, %arg5: memref<4x14xf32, #tpu.memory_space<vmem>>, %arg6: memref<2x2xf32, #tpu.memory_space<vmem>>, %arg7: memref<4x64xf32, #tpu.memory_space<vmem>>, %arg8: memref<64x192xf32, #tpu.memory_space<vmem>>, %arg9: memref<1x192xf32, #tpu.memory_space<vmem>>, %arg10: memref<64x64xf32, #tpu.memory_space<vmem>>, %arg11: memref<1x64xf32, #tpu.memory_space<vmem>>, %arg12: memref<64x32xf32, #tpu.memory_space<vmem>>, %arg13: memref<1x32xf32, #tpu.memory_space<vmem>>, %arg14: memref<32x64xf32, #tpu.memory_space<vmem>>, %arg15: memref<1x64xf32, #tpu.memory_space<vmem>>, %arg16: memref<256x128xf32, #tpu.memory_space<vmem>>, %arg17: memref<1x128xf32, #tpu.memory_space<vmem>>, %arg18: memref<64x1152xf32, #tpu.memory_space<vmem>>, %arg19: memref<1x1152xf32, #tpu.memory_space<vmem>>, %arg20: memref<1x1152xf32, #tpu.memory_space<vmem>>, %arg21: memref<3x128x64xf32, #tpu.memory_space<vmem>>, %arg22: memref<3x64xf32, #tpu.memory_space<vmem>>, %arg23: memref<3x64xf32, #tpu.memory_space<vmem>>, %arg24: memref<3x1xf32, #tpu.memory_space<vmem>>, %arg25: memref<1x2xf32, #tpu.memory_space<vmem>>, %arg26: memref<2x128xf32, #tpu.memory_space<vmem>>, %arg27: memref<2x192xf32, #tpu.memory_space<vmem>>, %arg28: memref<1x128xf32, #tpu.memory_space<vmem>>, %arg29: memref<14x64xf32, #tpu.memory_space<vmem>>) attributes {dimension_semantics = [], scalar_prefetch = 0 : i64, scratch_operands = 1 : i64, tpu.core_type = #tpu.core_type<tc>} {
    %c0 = arith.constant 0 : index
    %c0_0 = arith.constant 0 : index
    %0 = vector.load %arg0[%c0, %c0_0] : memref<2x1152xf32, #tpu.memory_space<vmem>>, vector<2x1152xf32>
    %c0_1 = arith.constant 0 : index
    %c0_2 = arith.constant 0 : index
    %1 = vector.load %arg1[%c0_1, %c0_2] : memref<1152x448xf32, #tpu.memory_space<vmem>>, vector<1152x448xf32>
    %2 = arith.truncf %0 : vector<2x1152xf32> to vector<2x1152xbf16>
    %3 = arith.truncf %1 : vector<1152x448xf32> to vector<1152x448xbf16>
    %cst = arith.constant dense<0.000000e+00> : vector<2x448xf32>
    %4 = tpu.matmul %2, %3, %cst {dimension_numbers = #tpu.dot_dimension_numbers<[1], [0], [0], [1], [0, 0, 1, 1], [], []>} : vector<2x1152xbf16>, vector<1152x448xbf16>, vector<2x448xf32> -> vector<2x448xf32>
    %c0_3 = arith.constant 0 : index
    %c0_4 = arith.constant 0 : index
    %5 = vector.load %arg2[%c0_3, %c0_4] : memref<1x448xf32, #tpu.memory_space<vmem>>, vector<1x448xf32>
    %6 = vector.broadcast %5 : vector<1x448xf32> to vector<2x448xf32>
    %7 = arith.addf %4, %6 : vector<2x448xf32>
    %8 = vector.extract_strided_slice %7 {offsets = [0, 384], sizes = [2, 64], strides = [1, 1]} : vector<2x448xf32> to vector<2x64xf32>
    %cst_5 = arith.constant 0.000000e+00 : f32
    %9 = vector.broadcast %cst_5 : f32 to vector<2x64xf32>
    %10 = arith.maximumf %8, %9 : vector<2x64xf32>
    %11 = vector.extract_strided_slice %7 {offsets = [0, 0], sizes = [2, 64], strides = [1, 1]} : vector<2x448xf32> to vector<2x64xf32>
    %12 = vector.extract_strided_slice %7 {offsets = [0, 64], sizes = [2, 64], strides = [1, 1]} : vector<2x448xf32> to vector<2x64xf32>
    %13 = arith.addf %11, %12 : vector<2x64xf32>
    %14 = vector.extract_strided_slice %7 {offsets = [0, 128], sizes = [2, 64], strides = [1, 1]} : vector<2x448xf32> to vector<2x64xf32>
    %15 = arith.addf %13, %14 : vector<2x64xf32>
    %cst_6 = arith.constant 0.333333343 : f32
    %16 = vector.broadcast %cst_6 : f32 to vector<2x64xf32>
    %17 = arith.mulf %15, %16 : vector<2x64xf32>
    %18 = vector.extract_strided_slice %7 {offsets = [0, 192], sizes = [2, 64], strides = [1, 1]} : vector<2x448xf32> to vector<2x64xf32>
    %19 = vector.extract_strided_slice %7 {offsets = [0, 256], sizes = [2, 64], strides = [1, 1]} : vector<2x448xf32> to vector<2x64xf32>
    %20 = arith.addf %18, %19 : vector<2x64xf32>
    %21 = vector.extract_strided_slice %7 {offsets = [0, 320], sizes = [2, 64], strides = [1, 1]} : vector<2x448xf32> to vector<2x64xf32>
    %22 = arith.addf %20, %21 : vector<2x64xf32>
    %cst_7 = arith.constant 0.333333343 : f32
    %23 = vector.broadcast %cst_7 : f32 to vector<2x64xf32>
    %24 = arith.mulf %22, %23 : vector<2x64xf32>
    %c0_8 = arith.constant 0 : index
    %c0_9 = arith.constant 0 : index
    %25 = vector.load %arg3[%c0_8, %c0_9] : memref<7x64xf32, #tpu.memory_space<vmem>>, vector<7x64xf32>
    %26 = vector.extract_strided_slice %25 {offsets = [0, 0], sizes = [1, 64], strides = [1, 1]} : vector<7x64xf32> to vector<1x64xf32>
    %c0_10 = arith.constant 0 : index
    %c0_11 = arith.constant 0 : index
    %27 = vector.load %arg29[%c0_10, %c0_11] : memref<14x64xf32, #tpu.memory_space<vmem>>, vector<1x64xf32>
    tpu.vector_store %arg29[%c0_10, %c0_11], %26 {strides = array<i32>} : memref<14x64xf32, #tpu.memory_space<vmem>>, vector<1x64xf32>,
    %28 = vector.extract_strided_slice %7 {offsets = [0, 0], sizes = [1, 64], strides = [1, 1]} : vector<2x448xf32> to vector<1x64xf32>
    %29 = vector.extract_strided_slice %25 {offsets = [1, 0], sizes = [1, 64], strides = [1, 1]} : vector<7x64xf32> to vector<1x64xf32>
    %30 = arith.addf %28, %29 : vector<1x64xf32>
    %c1 = arith.constant 1 : index
    %c0_12 = arith.constant 0 : index
    %31 = vector.load %arg29[%c1, %c0_12] : memref<14x64xf32, #tpu.memory_space<vmem>>, vector<1x64xf32>
    tpu.vector_store %arg29[%c1, %c0_12], %30 {strides = array<i32>} : memref<14x64xf32, #tpu.memory_space<vmem>>, vector<1x64xf32>,
    %32 = vector.extract_strided_slice %7 {offsets = [0, 64], sizes = [1, 64], strides = [1, 1]} : vector<2x448xf32> to vector<1x64xf32>
    %33 = vector.extract_strided_slice %25 {offsets = [2, 0], sizes = [1, 64], strides = [1, 1]} : vector<7x64xf32> to vector<1x64xf32>
    %34 = arith.addf %32, %33 : vector<1x64xf32>
    %c2 = arith.constant 2 : index
    %c0_13 = arith.constant 0 : index
    %35 = vector.load %arg29[%c2, %c0_13] : memref<14x64xf32, #tpu.memory_space<vmem>>, vector<1x64xf32>
    tpu.vector_store %arg29[%c2, %c0_13], %34 {strides = array<i32>} : memref<14x64xf32, #tpu.memory_space<vmem>>, vector<1x64xf32>,
    %36 = vector.extract_strided_slice %7 {offsets = [0, 128], sizes = [1, 64], strides = [1, 1]} : vector<2x448xf32> to vector<1x64xf32>
    %37 = vector.extract_strided_slice %25 {offsets = [3, 0], sizes = [1, 64], strides = [1, 1]} : vector<7x64xf32> to vector<1x64xf32>
    %38 = arith.addf %36, %37 : vector<1x64xf32>
    %c3 = arith.constant 3 : index
    %c0_14 = arith.constant 0 : index
    %39 = vector.load %arg29[%c3, %c0_14] : memref<14x64xf32, #tpu.memory_space<vmem>>, vector<1x64xf32>
    tpu.vector_store %arg29[%c3, %c0_14], %38 {strides = array<i32>} : memref<14x64xf32, #tpu.memory_space<vmem>>, vector<1x64xf32>,
    %40 = vector.extract_strided_slice %7 {offsets = [0, 192], sizes = [1, 64], strides = [1, 1]} : vector<2x448xf32> to vector<1x64xf32>
    %41 = vector.extract_strided_slice %25 {offsets = [4, 0], sizes = [1, 64], strides = [1, 1]} : vector<7x64xf32> to vector<1x64xf32>
    %42 = arith.addf %40, %41 : vector<1x64xf32>
    %c4 = arith.constant 4 : index
    %c0_15 = arith.constant 0 : index
    %43 = vector.load %arg29[%c4, %c0_15] : memref<14x64xf32, #tpu.memory_space<vmem>>, vector<1x64xf32>
    tpu.vector_store %arg29[%c4, %c0_15], %42 {strides = array<i32>} : memref<14x64xf32, #tpu.memory_space<vmem>>, vector<1x64xf32>,
    %44 = vector.extract_strided_slice %7 {offsets = [0, 256], sizes = [1, 64], strides = [1, 1]} : vector<2x448xf32> to vector<1x64xf32>
    %45 = vector.extract_strided_slice %25 {offsets = [5, 0], sizes = [1, 64], strides = [1, 1]} : vector<7x64xf32> to vector<1x64xf32>
    %46 = arith.addf %44, %45 : vector<1x64xf32>
    %c5 = arith.constant 5 : index
    %c0_16 = arith.constant 0 : index
    %47 = vector.load %arg29[%c5, %c0_16] : memref<14x64xf32, #tpu.memory_space<vmem>>, vector<1x64xf32>
    tpu.vector_store %arg29[%c5, %c0_16], %46 {strides = array<i32>} : memref<14x64xf32, #tpu.memory_space<vmem>>, vector<1x64xf32>,
    %48 = vector.extract_strided_slice %7 {offsets = [0, 320], sizes = [1, 64], strides = [1, 1]} : vector<2x448xf32> to vector<1x64xf32>
    %49 = vector.extract_strided_slice %25 {offsets = [6, 0], sizes = [1, 64], strides = [1, 1]} : vector<7x64xf32> to vector<1x64xf32>
    %50 = arith.addf %48, %49 : vector<1x64xf32>
    %c6 = arith.constant 6 : index
    %c0_17 = arith.constant 0 : index
    %51 = vector.load %arg29[%c6, %c0_17] : memref<14x64xf32, #tpu.memory_space<vmem>>, vector<1x64xf32>
    tpu.vector_store %arg29[%c6, %c0_17], %50 {strides = array<i32>} : memref<14x64xf32, #tpu.memory_space<vmem>>, vector<1x64xf32>,
    %52 = vector.extract_strided_slice %25 {offsets = [0, 0], sizes = [1, 64], strides = [1, 1]} : vector<7x64xf32> to vector<1x64xf32>
    %c7 = arith.constant 7 : index
    %c0_18 = arith.constant 0 : index
    %53 = vector.load %arg29[%c7, %c0_18] : memref<14x64xf32, #tpu.memory_space<vmem>>, vector<1x64xf32>
    tpu.vector_store %arg29[%c7, %c0_18], %52 {strides = array<i32>} : memref<14x64xf32, #tpu.memory_space<vmem>>, vector<1x64xf32>,
    %54 = vector.extract_strided_slice %7 {offsets = [1, 0], sizes = [1, 64], strides = [1, 1]} : vector<2x448xf32> to vector<1x64xf32>
    %55 = vector.extract_strided_slice %25 {offsets = [1, 0], sizes = [1, 64], strides = [1, 1]} : vector<7x64xf32> to vector<1x64xf32>
    %56 = arith.addf %54, %55 : vector<1x64xf32>
    %c8 = arith.constant 8 : index
    %c0_19 = arith.constant 0 : index
    %57 = vector.load %arg29[%c8, %c0_19] : memref<14x64xf32, #tpu.memory_space<vmem>>, vector<1x64xf32>
    tpu.vector_store %arg29[%c8, %c0_19], %56 {strides = array<i32>} : memref<14x64xf32, #tpu.memory_space<vmem>>, vector<1x64xf32>,
    %58 = vector.extract_strided_slice %7 {offsets = [1, 64], sizes = [1, 64], strides = [1, 1]} : vector<2x448xf32> to vector<1x64xf32>
    %59 = vector.extract_strided_slice %25 {offsets = [2, 0], sizes = [1, 64], strides = [1, 1]} : vector<7x64xf32> to vector<1x64xf32>
    %60 = arith.addf %58, %59 : vector<1x64xf32>
    %c9 = arith.constant 9 : index
    %c0_20 = arith.constant 0 : index
    %61 = vector.load %arg29[%c9, %c0_20] : memref<14x64xf32, #tpu.memory_space<vmem>>, vector<1x64xf32>
    tpu.vector_store %arg29[%c9, %c0_20], %60 {strides = array<i32>} : memref<14x64xf32, #tpu.memory_space<vmem>>, vector<1x64xf32>,
    %62 = vector.extract_strided_slice %7 {offsets = [1, 128], sizes = [1, 64], strides = [1, 1]} : vector<2x448xf32> to vector<1x64xf32>
    %63 = vector.extract_strided_slice %25 {offsets = [3, 0], sizes = [1, 64], strides = [1, 1]} : vector<7x64xf32> to vector<1x64xf32>
    %64 = arith.addf %62, %63 : vector<1x64xf32>
    %c10 = arith.constant 10 : index
    %c0_21 = arith.constant 0 : index
    %65 = vector.load %arg29[%c10, %c0_21] : memref<14x64xf32, #tpu.memory_space<vmem>>, vector<1x64xf32>
    tpu.vector_store %arg29[%c10, %c0_21], %64 {strides = array<i32>} : memref<14x64xf32, #tpu.memory_space<vmem>>, vector<1x64xf32>,
    %66 = vector.extract_strided_slice %7 {offsets = [1, 192], sizes = [1, 64], strides = [1, 1]} : vector<2x448xf32> to vector<1x64xf32>
    %67 = vector.extract_strided_slice %25 {offsets = [4, 0], sizes = [1, 64], strides = [1, 1]} : vector<7x64xf32> to vector<1x64xf32>
    %68 = arith.addf %66, %67 : vector<1x64xf32>
    %c11 = arith.constant 11 : index
    %c0_22 = arith.constant 0 : index
    %69 = vector.load %arg29[%c11, %c0_22] : memref<14x64xf32, #tpu.memory_space<vmem>>, vector<1x64xf32>
    tpu.vector_store %arg29[%c11, %c0_22], %68 {strides = array<i32>} : memref<14x64xf32, #tpu.memory_space<vmem>>, vector<1x64xf32>,
    %70 = vector.extract_strided_slice %7 {offsets = [1, 256], sizes = [1, 64], strides = [1, 1]} : vector<2x448xf32> to vector<1x64xf32>
    %71 = vector.extract_strided_slice %25 {offsets = [5, 0], sizes = [1, 64], strides = [1, 1]} : vector<7x64xf32> to vector<1x64xf32>
    %72 = arith.addf %70, %71 : vector<1x64xf32>
    %c12 = arith.constant 12 : index
    %c0_23 = arith.constant 0 : index
    %73 = vector.load %arg29[%c12, %c0_23] : memref<14x64xf32, #tpu.memory_space<vmem>>, vector<1x64xf32>
    tpu.vector_store %arg29[%c12, %c0_23], %72 {strides = array<i32>} : memref<14x64xf32, #tpu.memory_space<vmem>>, vector<1x64xf32>,
    %74 = vector.extract_strided_slice %7 {offsets = [1, 320], sizes = [1, 64], strides = [1, 1]} : vector<2x448xf32> to vector<1x64xf32>
    %75 = vector.extract_strided_slice %25 {offsets = [6, 0], sizes = [1, 64], strides = [1, 1]} : vector<7x64xf32> to vector<1x64xf32>
    %76 = arith.addf %74, %75 : vector<1x64xf32>
    %c13 = arith.constant 13 : index
    %c0_24 = arith.constant 0 : index
    %77 = vector.load %arg29[%c13, %c0_24] : memref<14x64xf32, #tpu.memory_space<vmem>>, vector<1x64xf32>
    tpu.vector_store %arg29[%c13, %c0_24], %76 {strides = array<i32>} : memref<14x64xf32, #tpu.memory_space<vmem>>, vector<1x64xf32>,
    %c0_25 = arith.constant 0 : index
    %c0_26 = arith.constant 0 : index
    %78 = vector.load %arg29[%c0_25, %c0_26] : memref<14x64xf32, #tpu.memory_space<vmem>>, vector<14x64xf32>
    %c0_27 = arith.constant 0 : index
    %c0_28 = arith.constant 0 : index
    %79 = vector.load %arg7[%c0_27, %c0_28] : memref<4x64xf32, #tpu.memory_space<vmem>>, vector<4x64xf32>
    %80 = vector.extract_strided_slice %79 {offsets = [0, 0], sizes = [1, 64], strides = [1, 1]} : vector<4x64xf32> to vector<1x64xf32>
    %81 = vector.extract_strided_slice %79 {offsets = [1, 0], sizes = [1, 64], strides = [1, 1]} : vector<4x64xf32> to vector<1x64xf32>
    %cst_29 = arith.constant dense<0.000000e+00> : vector<14xf32>
    %82 = vector.multi_reduction <add>, %78, %cst_29 [1] : vector<14x64xf32> to vector<14xf32>
    %83 = vector.shape_cast %82 : vector<14xf32> to vector<14x1xf32>
    %cst_30 = arith.constant 6.400000e+01 : f32
    %84 = vector.broadcast %cst_30 : f32 to vector<14x1xf32>
    %85 = arith.divf %83, %84 : vector<14x1xf32>
    %86 = vector.broadcast %85 : vector<14x1xf32> to vector<14x64xf32>
    %87 = arith.subf %78, %86 : vector<14x64xf32>
    %88 = vector.broadcast %85 : vector<14x1xf32> to vector<14x64xf32>
    %89 = arith.subf %78, %88 : vector<14x64xf32>
    %90 = arith.mulf %87, %89 : vector<14x64xf32>
    %cst_31 = arith.constant dense<0.000000e+00> : vector<14xf32>
    %91 = vector.multi_reduction <add>, %90, %cst_31 [1] : vector<14x64xf32> to vector<14xf32>
    %92 = vector.shape_cast %91 : vector<14xf32> to vector<14x1xf32>
    %cst_32 = arith.constant 6.400000e+01 : f32
    %93 = vector.broadcast %cst_32 : f32 to vector<14x1xf32>
    %94 = arith.divf %92, %93 : vector<14x1xf32>
    %95 = vector.broadcast %85 : vector<14x1xf32> to vector<14x64xf32>
    %96 = arith.subf %78, %95 : vector<14x64xf32>
    %cst_33 = arith.constant 9.99999974E-6 : f32
    %97 = vector.broadcast %cst_33 : f32 to vector<14x1xf32>
    %98 = arith.addf %94, %97 : vector<14x1xf32>
    %99 = math.rsqrt %98 : vector<14x1xf32>
    %100 = vector.broadcast %99 : vector<14x1xf32> to vector<14x64xf32>
    %101 = arith.mulf %96, %100 : vector<14x64xf32>
    %102 = vector.broadcast %80 : vector<1x64xf32> to vector<14x64xf32>
    %103 = arith.mulf %101, %102 : vector<14x64xf32>
    %104 = vector.broadcast %81 : vector<1x64xf32> to vector<14x64xf32>
    %105 = arith.addf %103, %104 : vector<14x64xf32>
    %c0_34 = arith.constant 0 : index
    %c0_35 = arith.constant 0 : index
    %106 = vector.load %arg8[%c0_34, %c0_35] : memref<64x192xf32, #tpu.memory_space<vmem>>, vector<64x192xf32>
    %107 = arith.truncf %105 : vector<14x64xf32> to vector<14x64xbf16>
    %108 = arith.truncf %106 : vector<64x192xf32> to vector<64x192xbf16>
    %cst_36 = arith.constant dense<0.000000e+00> : vector<14x192xf32>
    %109 = tpu.matmul %107, %108, %cst_36 {dimension_numbers = #tpu.dot_dimension_numbers<[1], [0], [0], [1], [0, 0, 1, 1], [], []>} : vector<14x64xbf16>, vector<64x192xbf16>, vector<14x192xf32> -> vector<14x192xf32>
    %c0_37 = arith.constant 0 : index
    %c0_38 = arith.constant 0 : index
    %110 = vector.load %arg9[%c0_37, %c0_38] : memref<1x192xf32, #tpu.memory_space<vmem>>, vector<1x192xf32>
    %111 = vector.broadcast %110 : vector<1x192xf32> to vector<14x192xf32>
    %112 = arith.addf %109, %111 : vector<14x192xf32>
    %c0_39 = arith.constant 0 : index
    %c0_40 = arith.constant 0 : index
    %113 = vector.load %arg4[%c0_39, %c0_40] : memref<14x14xf32, #tpu.memory_space<vmem>>, vector<14x14xf32>
    %114 = vector.extract_strided_slice %112 {offsets = [0, 0], sizes = [14, 16], strides = [1, 1]} : vector<14x192xf32> to vector<14x16xf32>
    %115 = vector.extract_strided_slice %112 {offsets = [0, 64], sizes = [14, 16], strides = [1, 1]} : vector<14x192xf32> to vector<14x16xf32>
    %116 = vector.extract_strided_slice %112 {offsets = [0, 128], sizes = [14, 16], strides = [1, 1]} : vector<14x192xf32> to vector<14x16xf32>
    %117 = arith.truncf %114 : vector<14x16xf32> to vector<14x16xbf16>
    %118 = arith.truncf %115 : vector<14x16xf32> to vector<14x16xbf16>
    %cst_41 = arith.constant dense<0.000000e+00> : vector<14x14xf32>
    %119 = tpu.matmul %117, %118, %cst_41 {dimension_numbers = #tpu.dot_dimension_numbers<[1], [1], [0], [0], [0, 0, 1, 0], [], []>} : vector<14x16xbf16>, vector<14x16xbf16>, vector<14x14xf32> -> vector<14x14xf32>
    %cst_42 = arith.constant 2.500000e-01 : f32
    %120 = vector.broadcast %cst_42 : f32 to vector<14x14xf32>
    %121 = arith.mulf %119, %120 : vector<14x14xf32>
    %122 = arith.addf %121, %113 : vector<14x14xf32>
    %cst_43 = arith.constant dense<0xFF800000> : vector<14xf32>
    %123 = vector.multi_reduction <maximumf>, %122, %cst_43 [1] : vector<14x14xf32> to vector<14xf32>
    %124 = vector.shape_cast %123 : vector<14xf32> to vector<14x1xf32>
    %125 = vector.broadcast %124 : vector<14x1xf32> to vector<14x14xf32>
    %126 = arith.subf %122, %125 : vector<14x14xf32>
    %127 = math.exp %126 : vector<14x14xf32>
    %cst_44 = arith.constant dense<0.000000e+00> : vector<14xf32>
    %128 = vector.multi_reduction <add>, %127, %cst_44 [1] : vector<14x14xf32> to vector<14xf32>
    %129 = vector.shape_cast %128 : vector<14xf32> to vector<14x1xf32>
    %130 = tpu.reciprocal %129 {approx = true} : vector<14x1xf32> -> vector<14x1xf32>
    %131 = vector.broadcast %130 : vector<14x1xf32> to vector<14x14xf32>
    %132 = arith.mulf %127, %131 : vector<14x14xf32>
    %133 = arith.truncf %132 : vector<14x14xf32> to vector<14x14xbf16>
    %134 = arith.truncf %116 : vector<14x16xf32> to vector<14x16xbf16>
    %cst_45 = arith.constant dense<0.000000e+00> : vector<14x16xf32>
    %135 = tpu.matmul %133, %134, %cst_45 {dimension_numbers = #tpu.dot_dimension_numbers<[1], [0], [0], [1], [0, 0, 1, 1], [], []>} : vector<14x14xbf16>, vector<14x16xbf16>, vector<14x16xf32> -> vector<14x16xf32>
    %136 = vector.extract_strided_slice %112 {offsets = [0, 16], sizes = [14, 16], strides = [1, 1]} : vector<14x192xf32> to vector<14x16xf32>
    %137 = vector.extract_strided_slice %112 {offsets = [0, 80], sizes = [14, 16], strides = [1, 1]} : vector<14x192xf32> to vector<14x16xf32>
    %138 = vector.extract_strided_slice %112 {offsets = [0, 144], sizes = [14, 16], strides = [1, 1]} : vector<14x192xf32> to vector<14x16xf32>
    %139 = arith.truncf %136 : vector<14x16xf32> to vector<14x16xbf16>
    %140 = arith.truncf %137 : vector<14x16xf32> to vector<14x16xbf16>
    %cst_46 = arith.constant dense<0.000000e+00> : vector<14x14xf32>
    %141 = tpu.matmul %139, %140, %cst_46 {dimension_numbers = #tpu.dot_dimension_numbers<[1], [1], [0], [0], [0, 0, 1, 0], [], []>} : vector<14x16xbf16>, vector<14x16xbf16>, vector<14x14xf32> -> vector<14x14xf32>
    %cst_47 = arith.constant 2.500000e-01 : f32
    %142 = vector.broadcast %cst_47 : f32 to vector<14x14xf32>
    %143 = arith.mulf %141, %142 : vector<14x14xf32>
    %144 = arith.addf %143, %113 : vector<14x14xf32>
    %cst_48 = arith.constant dense<0xFF800000> : vector<14xf32>
    %145 = vector.multi_reduction <maximumf>, %144, %cst_48 [1] : vector<14x14xf32> to vector<14xf32>
    %146 = vector.shape_cast %145 : vector<14xf32> to vector<14x1xf32>
    %147 = vector.broadcast %146 : vector<14x1xf32> to vector<14x14xf32>
    %148 = arith.subf %144, %147 : vector<14x14xf32>
    %149 = math.exp %148 : vector<14x14xf32>
    %cst_49 = arith.constant dense<0.000000e+00> : vector<14xf32>
    %150 = vector.multi_reduction <add>, %149, %cst_49 [1] : vector<14x14xf32> to vector<14xf32>
    %151 = vector.shape_cast %150 : vector<14xf32> to vector<14x1xf32>
    %152 = tpu.reciprocal %151 {approx = true} : vector<14x1xf32> -> vector<14x1xf32>
    %153 = vector.broadcast %152 : vector<14x1xf32> to vector<14x14xf32>
    %154 = arith.mulf %149, %153 : vector<14x14xf32>
    %155 = arith.truncf %154 : vector<14x14xf32> to vector<14x14xbf16>
    %156 = arith.truncf %138 : vector<14x16xf32> to vector<14x16xbf16>
    %cst_50 = arith.constant dense<0.000000e+00> : vector<14x16xf32>
    %157 = tpu.matmul %155, %156, %cst_50 {dimension_numbers = #tpu.dot_dimension_numbers<[1], [0], [0], [1], [0, 0, 1, 1], [], []>} : vector<14x14xbf16>, vector<14x16xbf16>, vector<14x16xf32> -> vector<14x16xf32>
    %158 = vector.extract_strided_slice %112 {offsets = [0, 32], sizes = [14, 16], strides = [1, 1]} : vector<14x192xf32> to vector<14x16xf32>
    %159 = vector.extract_strided_slice %112 {offsets = [0, 96], sizes = [14, 16], strides = [1, 1]} : vector<14x192xf32> to vector<14x16xf32>
    %160 = vector.extract_strided_slice %112 {offsets = [0, 160], sizes = [14, 16], strides = [1, 1]} : vector<14x192xf32> to vector<14x16xf32>
    %161 = arith.truncf %158 : vector<14x16xf32> to vector<14x16xbf16>
    %162 = arith.truncf %159 : vector<14x16xf32> to vector<14x16xbf16>
    %cst_51 = arith.constant dense<0.000000e+00> : vector<14x14xf32>
    %163 = tpu.matmul %161, %162, %cst_51 {dimension_numbers = #tpu.dot_dimension_numbers<[1], [1], [0], [0], [0, 0, 1, 0], [], []>} : vector<14x16xbf16>, vector<14x16xbf16>, vector<14x14xf32> -> vector<14x14xf32>
    %cst_52 = arith.constant 2.500000e-01 : f32
    %164 = vector.broadcast %cst_52 : f32 to vector<14x14xf32>
    %165 = arith.mulf %163, %164 : vector<14x14xf32>
    %166 = arith.addf %165, %113 : vector<14x14xf32>
    %cst_53 = arith.constant dense<0xFF800000> : vector<14xf32>
    %167 = vector.multi_reduction <maximumf>, %166, %cst_53 [1] : vector<14x14xf32> to vector<14xf32>
    %168 = vector.shape_cast %167 : vector<14xf32> to vector<14x1xf32>
    %169 = vector.broadcast %168 : vector<14x1xf32> to vector<14x14xf32>
    %170 = arith.subf %166, %169 : vector<14x14xf32>
    %171 = math.exp %170 : vector<14x14xf32>
    %cst_54 = arith.constant dense<0.000000e+00> : vector<14xf32>
    %172 = vector.multi_reduction <add>, %171, %cst_54 [1] : vector<14x14xf32> to vector<14xf32>
    %173 = vector.shape_cast %172 : vector<14xf32> to vector<14x1xf32>
    %174 = tpu.reciprocal %173 {approx = true} : vector<14x1xf32> -> vector<14x1xf32>
    %175 = vector.broadcast %174 : vector<14x1xf32> to vector<14x14xf32>
    %176 = arith.mulf %171, %175 : vector<14x14xf32>
    %177 = arith.truncf %176 : vector<14x14xf32> to vector<14x14xbf16>
    %178 = arith.truncf %160 : vector<14x16xf32> to vector<14x16xbf16>
    %cst_55 = arith.constant dense<0.000000e+00> : vector<14x16xf32>
    %179 = tpu.matmul %177, %178, %cst_55 {dimension_numbers = #tpu.dot_dimension_numbers<[1], [0], [0], [1], [0, 0, 1, 1], [], []>} : vector<14x14xbf16>, vector<14x16xbf16>, vector<14x16xf32> -> vector<14x16xf32>
    %180 = vector.extract_strided_slice %112 {offsets = [0, 48], sizes = [14, 16], strides = [1, 1]} : vector<14x192xf32> to vector<14x16xf32>
    %181 = vector.extract_strided_slice %112 {offsets = [0, 112], sizes = [14, 16], strides = [1, 1]} : vector<14x192xf32> to vector<14x16xf32>
    %182 = vector.extract_strided_slice %112 {offsets = [0, 176], sizes = [14, 16], strides = [1, 1]} : vector<14x192xf32> to vector<14x16xf32>
    %183 = arith.truncf %180 : vector<14x16xf32> to vector<14x16xbf16>
    %184 = arith.truncf %181 : vector<14x16xf32> to vector<14x16xbf16>
    %cst_56 = arith.constant dense<0.000000e+00> : vector<14x14xf32>
    %185 = tpu.matmul %183, %184, %cst_56 {dimension_numbers = #tpu.dot_dimension_numbers<[1], [1], [0], [0], [0, 0, 1, 0], [], []>} : vector<14x16xbf16>, vector<14x16xbf16>, vector<14x14xf32> -> vector<14x14xf32>
    %cst_57 = arith.constant 2.500000e-01 : f32
    %186 = vector.broadcast %cst_57 : f32 to vector<14x14xf32>
    %187 = arith.mulf %185, %186 : vector<14x14xf32>
    %188 = arith.addf %187, %113 : vector<14x14xf32>
    %cst_58 = arith.constant dense<0xFF800000> : vector<14xf32>
    %189 = vector.multi_reduction <maximumf>, %188, %cst_58 [1] : vector<14x14xf32> to vector<14xf32>
    %190 = vector.shape_cast %189 : vector<14xf32> to vector<14x1xf32>
    %191 = vector.broadcast %190 : vector<14x1xf32> to vector<14x14xf32>
    %192 = arith.subf %188, %191 : vector<14x14xf32>
    %193 = math.exp %192 : vector<14x14xf32>
    %cst_59 = arith.constant dense<0.000000e+00> : vector<14xf32>
    %194 = vector.multi_reduction <add>, %193, %cst_59 [1] : vector<14x14xf32> to vector<14xf32>
    %195 = vector.shape_cast %194 : vector<14xf32> to vector<14x1xf32>
    %196 = tpu.reciprocal %195 {approx = true} : vector<14x1xf32> -> vector<14x1xf32>
    %197 = vector.broadcast %196 : vector<14x1xf32> to vector<14x14xf32>
    %198 = arith.mulf %193, %197 : vector<14x14xf32>
    %199 = arith.truncf %198 : vector<14x14xf32> to vector<14x14xbf16>
    %200 = arith.truncf %182 : vector<14x16xf32> to vector<14x16xbf16>
    %cst_60 = arith.constant dense<0.000000e+00> : vector<14x16xf32>
    %201 = tpu.matmul %199, %200, %cst_60 {dimension_numbers = #tpu.dot_dimension_numbers<[1], [0], [0], [1], [0, 0, 1, 1], [], []>} : vector<14x14xbf16>, vector<14x16xbf16>, vector<14x16xf32> -> vector<14x16xf32>
    %202 = tpu.concatenate %135, %157, %179, %201 in 1 : vector<14x16xf32>, vector<14x16xf32>, vector<14x16xf32>, vector<14x16xf32> -> vector<14x64xf32>
    %c0_61 = arith.constant 0 : index
    %c0_62 = arith.constant 0 : index
    %203 = vector.load %arg10[%c0_61, %c0_62] : memref<64x64xf32, #tpu.memory_space<vmem>>, vector<64x64xf32>
    %204 = arith.truncf %202 : vector<14x64xf32> to vector<14x64xbf16>
    %205 = arith.truncf %203 : vector<64x64xf32> to vector<64x64xbf16>
    %cst_63 = arith.constant dense<0.000000e+00> : vector<14x64xf32>
    %206 = tpu.matmul %204, %205, %cst_63 {dimension_numbers = #tpu.dot_dimension_numbers<[1], [0], [0], [1], [0, 0, 1, 1], [], []>} : vector<14x64xbf16>, vector<64x64xbf16>, vector<14x64xf32> -> vector<14x64xf32>
    %207 = arith.addf %78, %206 : vector<14x64xf32>
    %c0_64 = arith.constant 0 : index
    %c0_65 = arith.constant 0 : index
    %208 = vector.load %arg11[%c0_64, %c0_65] : memref<1x64xf32, #tpu.memory_space<vmem>>, vector<1x64xf32>
    %209 = vector.broadcast %208 : vector<1x64xf32> to vector<14x64xf32>
    %210 = arith.addf %207, %209 : vector<14x64xf32>
    %211 = vector.extract_strided_slice %79 {offsets = [2, 0], sizes = [1, 64], strides = [1, 1]} : vector<4x64xf32> to vector<1x64xf32>
    %212 = vector.extract_strided_slice %79 {offsets = [3, 0], sizes = [1, 64], strides = [1, 1]} : vector<4x64xf32> to vector<1x64xf32>
    %cst_66 = arith.constant dense<0.000000e+00> : vector<14xf32>
    %213 = vector.multi_reduction <add>, %210, %cst_66 [1] : vector<14x64xf32> to vector<14xf32>
    %214 = vector.shape_cast %213 : vector<14xf32> to vector<14x1xf32>
    %cst_67 = arith.constant 6.400000e+01 : f32
    %215 = vector.broadcast %cst_67 : f32 to vector<14x1xf32>
    %216 = arith.divf %214, %215 : vector<14x1xf32>
    %217 = vector.broadcast %216 : vector<14x1xf32> to vector<14x64xf32>
    %218 = arith.subf %210, %217 : vector<14x64xf32>
    %219 = vector.broadcast %216 : vector<14x1xf32> to vector<14x64xf32>
    %220 = arith.subf %210, %219 : vector<14x64xf32>
    %221 = arith.mulf %218, %220 : vector<14x64xf32>
    %cst_68 = arith.constant dense<0.000000e+00> : vector<14xf32>
    %222 = vector.multi_reduction <add>, %221, %cst_68 [1] : vector<14x64xf32> to vector<14xf32>
    %223 = vector.shape_cast %222 : vector<14xf32> to vector<14x1xf32>
    %cst_69 = arith.constant 6.400000e+01 : f32
    %224 = vector.broadcast %cst_69 : f32 to vector<14x1xf32>
    %225 = arith.divf %223, %224 : vector<14x1xf32>
    %226 = vector.broadcast %216 : vector<14x1xf32> to vector<14x64xf32>
    %227 = arith.subf %210, %226 : vector<14x64xf32>
    %cst_70 = arith.constant 9.99999974E-6 : f32
    %228 = vector.broadcast %cst_70 : f32 to vector<14x1xf32>
    %229 = arith.addf %225, %228 : vector<14x1xf32>
    %230 = math.rsqrt %229 : vector<14x1xf32>
    %231 = vector.broadcast %230 : vector<14x1xf32> to vector<14x64xf32>
    %232 = arith.mulf %227, %231 : vector<14x64xf32>
    %233 = vector.broadcast %211 : vector<1x64xf32> to vector<14x64xf32>
    %234 = arith.mulf %232, %233 : vector<14x64xf32>
    %235 = vector.broadcast %212 : vector<1x64xf32> to vector<14x64xf32>
    %236 = arith.addf %234, %235 : vector<14x64xf32>
    %c0_71 = arith.constant 0 : index
    %c0_72 = arith.constant 0 : index
    %237 = vector.load %arg12[%c0_71, %c0_72] : memref<64x32xf32, #tpu.memory_space<vmem>>, vector<64x32xf32>
    %238 = arith.truncf %236 : vector<14x64xf32> to vector<14x64xbf16>
    %239 = arith.truncf %237 : vector<64x32xf32> to vector<64x32xbf16>
    %cst_73 = arith.constant dense<0.000000e+00> : vector<14x32xf32>
    %240 = tpu.matmul %238, %239, %cst_73 {dimension_numbers = #tpu.dot_dimension_numbers<[1], [0], [0], [1], [0, 0, 1, 1], [], []>} : vector<14x64xbf16>, vector<64x32xbf16>, vector<14x32xf32> -> vector<14x32xf32>
    %c0_74 = arith.constant 0 : index
    %c0_75 = arith.constant 0 : index
    %241 = vector.load %arg13[%c0_74, %c0_75] : memref<1x32xf32, #tpu.memory_space<vmem>>, vector<1x32xf32>
    %242 = vector.broadcast %241 : vector<1x32xf32> to vector<14x32xf32>
    %243 = arith.addf %240, %242 : vector<14x32xf32>
    %244 = arith.mulf %243, %243 : vector<14x32xf32>
    %245 = arith.mulf %243, %244 : vector<14x32xf32>
    %cst_76 = arith.constant 4.471500e-02 : f32
    %246 = vector.broadcast %cst_76 : f32 to vector<14x32xf32>
    %247 = arith.mulf %246, %245 : vector<14x32xf32>
    %248 = arith.addf %243, %247 : vector<14x32xf32>
    %cst_77 = arith.constant 0.797884583 : f32
    %249 = vector.broadcast %cst_77 : f32 to vector<14x32xf32>
    %250 = arith.mulf %249, %248 : vector<14x32xf32>
    %251 = math.tanh %250 : vector<14x32xf32>
    %cst_78 = arith.constant 1.000000e+00 : f32
    %252 = vector.broadcast %cst_78 : f32 to vector<14x32xf32>
    %253 = arith.addf %252, %251 : vector<14x32xf32>
    %cst_79 = arith.constant 5.000000e-01 : f32
    %254 = vector.broadcast %cst_79 : f32 to vector<14x32xf32>
    %255 = arith.mulf %254, %253 : vector<14x32xf32>
    %256 = arith.mulf %243, %255 : vector<14x32xf32>
    %c0_80 = arith.constant 0 : index
    %c0_81 = arith.constant 0 : index
    %257 = vector.load %arg14[%c0_80, %c0_81] : memref<32x64xf32, #tpu.memory_space<vmem>>, vector<32x64xf32>
    %258 = arith.truncf %256 : vector<14x32xf32> to vector<14x32xbf16>
    %259 = arith.truncf %257 : vector<32x64xf32> to vector<32x64xbf16>
    %cst_82 = arith.constant dense<0.000000e+00> : vector<14x64xf32>
    %260 = tpu.matmul %258, %259, %cst_82 {dimension_numbers = #tpu.dot_dimension_numbers<[1], [0], [0], [1], [0, 0, 1, 1], [], []>} : vector<14x32xbf16>, vector<32x64xbf16>, vector<14x64xf32> -> vector<14x64xf32>
    %261 = arith.addf %210, %260 : vector<14x64xf32>
    %c0_83 = arith.constant 0 : index
    %c0_84 = arith.constant 0 : index
    %262 = vector.load %arg15[%c0_83, %c0_84] : memref<1x64xf32, #tpu.memory_space<vmem>>, vector<1x64xf32>
    %263 = vector.broadcast %262 : vector<1x64xf32> to vector<14x64xf32>
    %264 = arith.addf %261, %263 : vector<14x64xf32>
    %c0_85 = arith.constant 0 : index
    %c0_86 = arith.constant 0 : index
    %265 = vector.load %arg5[%c0_85, %c0_86] : memref<4x14xf32, #tpu.memory_space<vmem>>, vector<4x14xf32>
    %266 = arith.truncf %265 : vector<4x14xf32> to vector<4x14xbf16>
    %267 = arith.truncf %264 : vector<14x64xf32> to vector<14x64xbf16>
    %cst_87 = arith.constant dense<0.000000e+00> : vector<4x64xf32>
    %268 = tpu.matmul %266, %267, %cst_87 {dimension_numbers = #tpu.dot_dimension_numbers<[1], [0], [0], [1], [0, 0, 1, 1], [], []>} : vector<4x14xbf16>, vector<14x64xbf16>, vector<4x64xf32> -> vector<4x64xf32>
    %269 = vector.extract_strided_slice %268 {offsets = [0, 0], sizes = [2, 64], strides = [1, 1]} : vector<4x64xf32> to vector<2x64xf32>
    %270 = vector.extract_strided_slice %268 {offsets = [2, 0], sizes = [2, 64], strides = [1, 1]} : vector<4x64xf32> to vector<2x64xf32>
    %cst_88 = arith.constant 0.166666672 : f32
    %271 = vector.broadcast %cst_88 : f32 to vector<2x64xf32>
    %272 = arith.mulf %270, %271 : vector<2x64xf32>
    %273 = tpu.concatenate %17, %24, %10, %269 in 1 : vector<2x64xf32>, vector<2x64xf32>, vector<2x64xf32>, vector<2x64xf32> -> vector<2x256xf32>
    %c0_89 = arith.constant 0 : index
    %c0_90 = arith.constant 0 : index
    %274 = vector.load %arg16[%c0_89, %c0_90] : memref<256x128xf32, #tpu.memory_space<vmem>>, vector<256x128xf32>
    %275 = arith.truncf %273 : vector<2x256xf32> to vector<2x256xbf16>
    %276 = arith.truncf %274 : vector<256x128xf32> to vector<256x128xbf16>
    %cst_91 = arith.constant dense<0.000000e+00> : vector<2x128xf32>
    %277 = tpu.matmul %275, %276, %cst_91 {dimension_numbers = #tpu.dot_dimension_numbers<[1], [0], [0], [1], [0, 0, 1, 1], [], []>} : vector<2x256xbf16>, vector<256x128xbf16>, vector<2x128xf32> -> vector<2x128xf32>
    %c0_92 = arith.constant 0 : index
    %c0_93 = arith.constant 0 : index
    %278 = vector.load %arg17[%c0_92, %c0_93] : memref<1x128xf32, #tpu.memory_space<vmem>>, vector<1x128xf32>
    %279 = vector.broadcast %278 : vector<1x128xf32> to vector<2x128xf32>
    %280 = arith.addf %277, %279 : vector<2x128xf32>
    %c0_94 = arith.constant 0 : index
    %c0_95 = arith.constant 0 : index
    %281 = vector.load %arg26[%c0_94, %c0_95] : memref<2x128xf32, #tpu.memory_space<vmem>>, vector<2x128xf32>
    tpu.vector_store %arg26[%c0_94, %c0_95], %280 {strides = array<i32>} : memref<2x128xf32, #tpu.memory_space<vmem>>, vector<2x128xf32>,
    %c0_96 = arith.constant 0 : index
    %c0_97 = arith.constant 0 : index
    %282 = vector.load %arg18[%c0_96, %c0_97] : memref<64x1152xf32, #tpu.memory_space<vmem>>, vector<64x1152xf32>
    %283 = arith.truncf %269 : vector<2x64xf32> to vector<2x64xbf16>
    %284 = arith.truncf %282 : vector<64x1152xf32> to vector<64x1152xbf16>
    %cst_98 = arith.constant dense<0.000000e+00> : vector<2x1152xf32>
    %285 = tpu.matmul %283, %284, %cst_98 {dimension_numbers = #tpu.dot_dimension_numbers<[1], [0], [0], [1], [0, 0, 1, 1], [], []>} : vector<2x64xbf16>, vector<64x1152xbf16>, vector<2x1152xf32> -> vector<2x1152xf32>
    %c0_99 = arith.constant 0 : index
    %c0_100 = arith.constant 0 : index
    %286 = vector.load %arg19[%c0_99, %c0_100] : memref<1x1152xf32, #tpu.memory_space<vmem>>, vector<1x1152xf32>
    %287 = vector.broadcast %286 : vector<1x1152xf32> to vector<2x1152xf32>
    %288 = arith.addf %285, %287 : vector<2x1152xf32>
    %289 = arith.subf %288, %0 : vector<2x1152xf32>
    %290 = arith.mulf %289, %289 : vector<2x1152xf32>
    %c0_101 = arith.constant 0 : index
    %c0_102 = arith.constant 0 : index
    %291 = vector.load %arg20[%c0_101, %c0_102] : memref<1x1152xf32, #tpu.memory_space<vmem>>, vector<1x1152xf32>
    %292 = vector.broadcast %291 : vector<1x1152xf32> to vector<2x1152xf32>
    %293 = arith.mulf %290, %292 : vector<2x1152xf32>
    %294 = vector.shape_cast %293 : vector<2x1152xf32> to vector<1x2x1152xf32>
    %cst_103 = arith.constant dense<0.000000e+00> : vector<1xf32>
    %295 = vector.multi_reduction <add>, %294, %cst_103 [1, 2] : vector<1x2x1152xf32> to vector<1xf32>
    %296 = vector.shape_cast %295 : vector<1xf32> to vector<1x1x1xf32>
    %297 = vector.extract %296[0, 0, 0] : f32 from vector<1x1x1xf32>
    %298 = vector.broadcast %297 : f32 to vector<1x1xf32>
    %c0_104 = arith.constant 0 : index
    %c0_105 = arith.constant 0 : index
    %299 = vector.load %arg6[%c0_104, %c0_105] : memref<2x2xf32, #tpu.memory_space<vmem>>, vector<2x2xf32>
    %300 = arith.truncf %299 : vector<2x2xf32> to vector<2x2xbf16>
    %301 = arith.truncf %24 : vector<2x64xf32> to vector<2x64xbf16>
    %cst_106 = arith.constant dense<0.000000e+00> : vector<2x64xf32>
    %302 = tpu.matmul %300, %301, %cst_106 {dimension_numbers = #tpu.dot_dimension_numbers<[1], [0], [0], [1], [0, 0, 1, 1], [], []>} : vector<2x2xbf16>, vector<2x64xbf16>, vector<2x64xf32> -> vector<2x64xf32>
    %c0_107 = arith.constant 0 : index
    %c0_108 = arith.constant 0 : index
    %303 = vector.load %arg6[%c0_107, %c0_108] : memref<2x2xf32, #tpu.memory_space<vmem>>, vector<2x2xf32>
    %304 = arith.truncf %303 : vector<2x2xf32> to vector<2x2xbf16>
    %305 = arith.truncf %272 : vector<2x64xf32> to vector<2x64xbf16>
    %cst_109 = arith.constant dense<0.000000e+00> : vector<2x64xf32>
    %306 = tpu.matmul %304, %305, %cst_109 {dimension_numbers = #tpu.dot_dimension_numbers<[1], [0], [0], [1], [0, 0, 1, 1], [], []>} : vector<2x2xbf16>, vector<2x64xbf16>, vector<2x64xf32> -> vector<2x64xf32>
    %c0_110 = arith.constant 0 : index
    %c0_111 = arith.constant 0 : index
    %307 = vector.load %arg25[%c0_110, %c0_111] : memref<1x2xf32, #tpu.memory_space<vmem>>, vector<1x2xf32>
    %c0_112 = arith.constant 0 : index
    %c0_113 = arith.constant 0 : index
    %c0_114 = arith.constant 0 : index
    %308 = vector.load %arg21[%c0_112, %c0_113, %c0_114] : memref<3x128x64xf32, #tpu.memory_space<vmem>>, vector<1x128x64xf32>
    %309 = vector.shape_cast %308 : vector<1x128x64xf32> to vector<128x64xf32>
    %c0_115 = arith.constant 0 : index
    %c0_116 = arith.constant 0 : index
    %310 = vector.load %arg22[%c0_115, %c0_116] : memref<3x64xf32, #tpu.memory_space<vmem>>, vector<1x64xf32>
    %c0_117 = arith.constant 0 : index
    %c0_118 = arith.constant 0 : index
    %311 = vector.load %arg23[%c0_117, %c0_118] : memref<3x64xf32, #tpu.memory_space<vmem>>, vector<1x64xf32>
    %c0_119 = arith.constant 0 : index
    %c0_120 = arith.constant 0 : index
    %312 = vector.load %arg24[%c0_119, %c0_120] : memref<3x1xf32, #tpu.memory_space<vmem>>, vector<1x1xf32>
    %313 = vector.extract_strided_slice %309 {offsets = [0, 0], sizes = [64, 64], strides = [1, 1]} : vector<128x64xf32> to vector<64x64xf32>
    %314 = arith.truncf %17 : vector<2x64xf32> to vector<2x64xbf16>
    %315 = arith.truncf %313 : vector<64x64xf32> to vector<64x64xbf16>
    %cst_121 = arith.constant dense<0.000000e+00> : vector<2x64xf32>
    %316 = tpu.matmul %314, %315, %cst_121 {dimension_numbers = #tpu.dot_dimension_numbers<[1], [0], [0], [1], [0, 0, 1, 1], [], []>} : vector<2x64xbf16>, vector<64x64xbf16>, vector<2x64xf32> -> vector<2x64xf32>
    %317 = vector.extract_strided_slice %309 {offsets = [64, 0], sizes = [64, 64], strides = [1, 1]} : vector<128x64xf32> to vector<64x64xf32>
    %318 = arith.truncf %24 : vector<2x64xf32> to vector<2x64xbf16>
    %319 = arith.truncf %317 : vector<64x64xf32> to vector<64x64xbf16>
    %cst_122 = arith.constant dense<0.000000e+00> : vector<2x64xf32>
    %320 = tpu.matmul %318, %319, %cst_122 {dimension_numbers = #tpu.dot_dimension_numbers<[1], [0], [0], [1], [0, 0, 1, 1], [], []>} : vector<2x64xbf16>, vector<64x64xbf16>, vector<2x64xf32> -> vector<2x64xf32>
    %321 = arith.addf %316, %320 : vector<2x64xf32>
    %322 = vector.broadcast %310 : vector<1x64xf32> to vector<2x64xf32>
    %323 = arith.addf %321, %322 : vector<2x64xf32>
    %cst_123 = arith.constant 0.000000e+00 : f32
    %324 = vector.broadcast %cst_123 : f32 to vector<2x64xf32>
    %325 = arith.maximumf %323, %324 : vector<2x64xf32>
    %326 = vector.broadcast %311 : vector<1x64xf32> to vector<2x64xf32>
    %327 = arith.mulf %325, %326 : vector<2x64xf32>
    %cst_124 = arith.constant dense<0.000000e+00> : vector<2xf32>
    %328 = vector.multi_reduction <add>, %327, %cst_124 [1] : vector<2x64xf32> to vector<2xf32>
    %329 = vector.shape_cast %328 : vector<2xf32> to vector<2x1xf32>
    %330 = vector.broadcast %312 : vector<1x1xf32> to vector<2x1xf32>
    %331 = arith.addf %329, %330 : vector<2x1xf32>
    %332 = arith.truncf %302 : vector<2x64xf32> to vector<2x64xbf16>
    %333 = arith.truncf %317 : vector<64x64xf32> to vector<64x64xbf16>
    %cst_125 = arith.constant dense<0.000000e+00> : vector<2x64xf32>
    %334 = tpu.matmul %332, %333, %cst_125 {dimension_numbers = #tpu.dot_dimension_numbers<[1], [0], [0], [1], [0, 0, 1, 1], [], []>} : vector<2x64xbf16>, vector<64x64xbf16>, vector<2x64xf32> -> vector<2x64xf32>
    %335 = arith.addf %316, %334 : vector<2x64xf32>
    %336 = vector.broadcast %310 : vector<1x64xf32> to vector<2x64xf32>
    %337 = arith.addf %335, %336 : vector<2x64xf32>
    %cst_126 = arith.constant 0.000000e+00 : f32
    %338 = vector.broadcast %cst_126 : f32 to vector<2x64xf32>
    %339 = arith.maximumf %337, %338 : vector<2x64xf32>
    %340 = vector.broadcast %311 : vector<1x64xf32> to vector<2x64xf32>
    %341 = arith.mulf %339, %340 : vector<2x64xf32>
    %cst_127 = arith.constant dense<0.000000e+00> : vector<2xf32>
    %342 = vector.multi_reduction <add>, %341, %cst_127 [1] : vector<2x64xf32> to vector<2xf32>
    %343 = vector.shape_cast %342 : vector<2xf32> to vector<2x1xf32>
    %344 = vector.broadcast %312 : vector<1x1xf32> to vector<2x1xf32>
    %345 = arith.addf %343, %344 : vector<2x1xf32>
    %cst_128 = arith.constant dense<0.000000e+00> : vector<1xf32>
    %346 = vector.multi_reduction <add>, %331, %cst_128 [0] : vector<2x1xf32> to vector<1xf32>
    %347 = vector.shape_cast %346 : vector<1xf32> to vector<1x1xf32>
    %cst_129 = arith.constant 2.000000e+00 : f32
    %348 = vector.broadcast %cst_129 : f32 to vector<1x1xf32>
    %349 = arith.divf %347, %348 : vector<1x1xf32>
    %350 = math.exp %345 : vector<2x1xf32>
    %cst_130 = arith.constant dense<0.000000e+00> : vector<1xf32>
    %351 = vector.multi_reduction <add>, %350, %cst_130 [0] : vector<2x1xf32> to vector<1xf32>
    %352 = vector.shape_cast %351 : vector<1xf32> to vector<1x1xf32>
    %cst_131 = arith.constant 2.000000e+00 : f32
    %353 = vector.broadcast %cst_131 : f32 to vector<1x1xf32>
    %354 = arith.divf %352, %353 : vector<1x1xf32>
    %cst_132 = arith.constant 9.99999993E-9 : f32
    %355 = vector.broadcast %cst_132 : f32 to vector<1x1xf32>
    %356 = arith.addf %354, %355 : vector<1x1xf32>
    %357 = math.log %356 : vector<1x1xf32>
    %358 = arith.subf %349, %357 : vector<1x1xf32>
    %359 = vector.extract_strided_slice %307 {offsets = [0, 0], sizes = [1, 1], strides = [1, 1]} : vector<1x2xf32> to vector<1x1xf32>
    %c1_133 = arith.constant 1 : index
    %c0_134 = arith.constant 0 : index
    %c0_135 = arith.constant 0 : index
    %360 = vector.load %arg21[%c1_133, %c0_134, %c0_135] : memref<3x128x64xf32, #tpu.memory_space<vmem>>, vector<1x128x64xf32>
    %361 = vector.shape_cast %360 : vector<1x128x64xf32> to vector<128x64xf32>
    %c1_136 = arith.constant 1 : index
    %c0_137 = arith.constant 0 : index
    %362 = vector.load %arg22[%c1_136, %c0_137] : memref<3x64xf32, #tpu.memory_space<vmem>>, vector<1x64xf32>
    %c1_138 = arith.constant 1 : index
    %c0_139 = arith.constant 0 : index
    %363 = vector.load %arg23[%c1_138, %c0_139] : memref<3x64xf32, #tpu.memory_space<vmem>>, vector<1x64xf32>
    %c1_140 = arith.constant 1 : index
    %c0_141 = arith.constant 0 : index
    %364 = vector.load %arg24[%c1_140, %c0_141] : memref<3x1xf32, #tpu.memory_space<vmem>>, vector<1x1xf32>
    %365 = vector.extract_strided_slice %361 {offsets = [0, 0], sizes = [64, 64], strides = [1, 1]} : vector<128x64xf32> to vector<64x64xf32>
    %366 = arith.truncf %272 : vector<2x64xf32> to vector<2x64xbf16>
    %367 = arith.truncf %365 : vector<64x64xf32> to vector<64x64xbf16>
    %cst_142 = arith.constant dense<0.000000e+00> : vector<2x64xf32>
    %368 = tpu.matmul %366, %367, %cst_142 {dimension_numbers = #tpu.dot_dimension_numbers<[1], [0], [0], [1], [0, 0, 1, 1], [], []>} : vector<2x64xbf16>, vector<64x64xbf16>, vector<2x64xf32> -> vector<2x64xf32>
    %369 = vector.extract_strided_slice %361 {offsets = [64, 0], sizes = [64, 64], strides = [1, 1]} : vector<128x64xf32> to vector<64x64xf32>
    %370 = arith.truncf %24 : vector<2x64xf32> to vector<2x64xbf16>
    %371 = arith.truncf %369 : vector<64x64xf32> to vector<64x64xbf16>
    %cst_143 = arith.constant dense<0.000000e+00> : vector<2x64xf32>
    %372 = tpu.matmul %370, %371, %cst_143 {dimension_numbers = #tpu.dot_dimension_numbers<[1], [0], [0], [1], [0, 0, 1, 1], [], []>} : vector<2x64xbf16>, vector<64x64xbf16>, vector<2x64xf32> -> vector<2x64xf32>
    %373 = arith.addf %368, %372 : vector<2x64xf32>
    %374 = vector.broadcast %362 : vector<1x64xf32> to vector<2x64xf32>
    %375 = arith.addf %373, %374 : vector<2x64xf32>
    %cst_144 = arith.constant 0.000000e+00 : f32
    %376 = vector.broadcast %cst_144 : f32 to vector<2x64xf32>
    %377 = arith.maximumf %375, %376 : vector<2x64xf32>
    %378 = vector.broadcast %363 : vector<1x64xf32> to vector<2x64xf32>
    %379 = arith.mulf %377, %378 : vector<2x64xf32>
    %cst_145 = arith.constant dense<0.000000e+00> : vector<2xf32>
    %380 = vector.multi_reduction <add>, %379, %cst_145 [1] : vector<2x64xf32> to vector<2xf32>
    %381 = vector.shape_cast %380 : vector<2xf32> to vector<2x1xf32>
    %382 = vector.broadcast %364 : vector<1x1xf32> to vector<2x1xf32>
    %383 = arith.addf %381, %382 : vector<2x1xf32>
    %384 = arith.truncf %302 : vector<2x64xf32> to vector<2x64xbf16>
    %385 = arith.truncf %369 : vector<64x64xf32> to vector<64x64xbf16>
    %cst_146 = arith.constant dense<0.000000e+00> : vector<2x64xf32>
    %386 = tpu.matmul %384, %385, %cst_146 {dimension_numbers = #tpu.dot_dimension_numbers<[1], [0], [0], [1], [0, 0, 1, 1], [], []>} : vector<2x64xbf16>, vector<64x64xbf16>, vector<2x64xf32> -> vector<2x64xf32>
    %387 = arith.addf %368, %386 : vector<2x64xf32>
    %388 = vector.broadcast %362 : vector<1x64xf32> to vector<2x64xf32>
    %389 = arith.addf %387, %388 : vector<2x64xf32>
    %cst_147 = arith.constant 0.000000e+00 : f32
    %390 = vector.broadcast %cst_147 : f32 to vector<2x64xf32>
    %391 = arith.maximumf %389, %390 : vector<2x64xf32>
    %392 = vector.broadcast %363 : vector<1x64xf32> to vector<2x64xf32>
    %393 = arith.mulf %391, %392 : vector<2x64xf32>
    %cst_148 = arith.constant dense<0.000000e+00> : vector<2xf32>
    %394 = vector.multi_reduction <add>, %393, %cst_148 [1] : vector<2x64xf32> to vector<2xf32>
    %395 = vector.shape_cast %394 : vector<2xf32> to vector<2x1xf32>
    %396 = vector.broadcast %364 : vector<1x1xf32> to vector<2x1xf32>
    %397 = arith.addf %395, %396 : vector<2x1xf32>
    %cst_149 = arith.constant dense<0.000000e+00> : vector<1xf32>
    %398 = vector.multi_reduction <add>, %383, %cst_149 [0] : vector<2x1xf32> to vector<1xf32>
    %399 = vector.shape_cast %398 : vector<1xf32> to vector<1x1xf32>
    %cst_150 = arith.constant 2.000000e+00 : f32
    %400 = vector.broadcast %cst_150 : f32 to vector<1x1xf32>
    %401 = arith.divf %399, %400 : vector<1x1xf32>
    %402 = math.exp %397 : vector<2x1xf32>
    %cst_151 = arith.constant dense<0.000000e+00> : vector<1xf32>
    %403 = vector.multi_reduction <add>, %402, %cst_151 [0] : vector<2x1xf32> to vector<1xf32>
    %404 = vector.shape_cast %403 : vector<1xf32> to vector<1x1xf32>
    %cst_152 = arith.constant 2.000000e+00 : f32
    %405 = vector.broadcast %cst_152 : f32 to vector<1x1xf32>
    %406 = arith.divf %404, %405 : vector<1x1xf32>
    %cst_153 = arith.constant 9.99999993E-9 : f32
    %407 = vector.broadcast %cst_153 : f32 to vector<1x1xf32>
    %408 = arith.addf %406, %407 : vector<1x1xf32>
    %409 = math.log %408 : vector<1x1xf32>
    %410 = arith.subf %401, %409 : vector<1x1xf32>
    %411 = arith.mulf %359, %410 : vector<1x1xf32>
    %412 = arith.subf %358, %411 : vector<1x1xf32>
    %413 = vector.extract_strided_slice %307 {offsets = [0, 1], sizes = [1, 1], strides = [1, 1]} : vector<1x2xf32> to vector<1x1xf32>
    %c2_154 = arith.constant 2 : index
    %c0_155 = arith.constant 0 : index
    %c0_156 = arith.constant 0 : index
    %414 = vector.load %arg21[%c2_154, %c0_155, %c0_156] : memref<3x128x64xf32, #tpu.memory_space<vmem>>, vector<1x128x64xf32>
    %415 = vector.shape_cast %414 : vector<1x128x64xf32> to vector<128x64xf32>
    %c2_157 = arith.constant 2 : index
    %c0_158 = arith.constant 0 : index
    %416 = vector.load %arg22[%c2_157, %c0_158] : memref<3x64xf32, #tpu.memory_space<vmem>>, vector<1x64xf32>
    %c2_159 = arith.constant 2 : index
    %c0_160 = arith.constant 0 : index
    %417 = vector.load %arg23[%c2_159, %c0_160] : memref<3x64xf32, #tpu.memory_space<vmem>>, vector<1x64xf32>
    %c2_161 = arith.constant 2 : index
    %c0_162 = arith.constant 0 : index
    %418 = vector.load %arg24[%c2_161, %c0_162] : memref<3x1xf32, #tpu.memory_space<vmem>>, vector<1x1xf32>
    %419 = vector.extract_strided_slice %415 {offsets = [0, 0], sizes = [64, 64], strides = [1, 1]} : vector<128x64xf32> to vector<64x64xf32>
    %420 = arith.truncf %17 : vector<2x64xf32> to vector<2x64xbf16>
    %421 = arith.truncf %419 : vector<64x64xf32> to vector<64x64xbf16>
    %cst_163 = arith.constant dense<0.000000e+00> : vector<2x64xf32>
    %422 = tpu.matmul %420, %421, %cst_163 {dimension_numbers = #tpu.dot_dimension_numbers<[1], [0], [0], [1], [0, 0, 1, 1], [], []>} : vector<2x64xbf16>, vector<64x64xbf16>, vector<2x64xf32> -> vector<2x64xf32>
    %423 = vector.extract_strided_slice %415 {offsets = [64, 0], sizes = [64, 64], strides = [1, 1]} : vector<128x64xf32> to vector<64x64xf32>
    %424 = arith.truncf %272 : vector<2x64xf32> to vector<2x64xbf16>
    %425 = arith.truncf %423 : vector<64x64xf32> to vector<64x64xbf16>
    %cst_164 = arith.constant dense<0.000000e+00> : vector<2x64xf32>
    %426 = tpu.matmul %424, %425, %cst_164 {dimension_numbers = #tpu.dot_dimension_numbers<[1], [0], [0], [1], [0, 0, 1, 1], [], []>} : vector<2x64xbf16>, vector<64x64xbf16>, vector<2x64xf32> -> vector<2x64xf32>
    %427 = arith.addf %422, %426 : vector<2x64xf32>
    %428 = vector.broadcast %416 : vector<1x64xf32> to vector<2x64xf32>
    %429 = arith.addf %427, %428 : vector<2x64xf32>
    %cst_165 = arith.constant 0.000000e+00 : f32
    %430 = vector.broadcast %cst_165 : f32 to vector<2x64xf32>
    %431 = arith.maximumf %429, %430 : vector<2x64xf32>
    %432 = vector.broadcast %417 : vector<1x64xf32> to vector<2x64xf32>
    %433 = arith.mulf %431, %432 : vector<2x64xf32>
    %cst_166 = arith.constant dense<0.000000e+00> : vector<2xf32>
    %434 = vector.multi_reduction <add>, %433, %cst_166 [1] : vector<2x64xf32> to vector<2xf32>
    %435 = vector.shape_cast %434 : vector<2xf32> to vector<2x1xf32>
    %436 = vector.broadcast %418 : vector<1x1xf32> to vector<2x1xf32>
    %437 = arith.addf %435, %436 : vector<2x1xf32>
    %438 = arith.truncf %306 : vector<2x64xf32> to vector<2x64xbf16>
    %439 = arith.truncf %423 : vector<64x64xf32> to vector<64x64xbf16>
    %cst_167 = arith.constant dense<0.000000e+00> : vector<2x64xf32>
    %440 = tpu.matmul %438, %439, %cst_167 {dimension_numbers = #tpu.dot_dimension_numbers<[1], [0], [0], [1], [0, 0, 1, 1], [], []>} : vector<2x64xbf16>, vector<64x64xbf16>, vector<2x64xf32> -> vector<2x64xf32>
    %441 = arith.addf %422, %440 : vector<2x64xf32>
    %442 = vector.broadcast %416 : vector<1x64xf32> to vector<2x64xf32>
    %443 = arith.addf %441, %442 : vector<2x64xf32>
    %cst_168 = arith.constant 0.000000e+00 : f32
    %444 = vector.broadcast %cst_168 : f32 to vector<2x64xf32>
    %445 = arith.maximumf %443, %444 : vector<2x64xf32>
    %446 = vector.broadcast %417 : vector<1x64xf32> to vector<2x64xf32>
    %447 = arith.mulf %445, %446 : vector<2x64xf32>
    %cst_169 = arith.constant dense<0.000000e+00> : vector<2xf32>
    %448 = vector.multi_reduction <add>, %447, %cst_169 [1] : vector<2x64xf32> to vector<2xf32>
    %449 = vector.shape_cast %448 : vector<2xf32> to vector<2x1xf32>
    %450 = vector.broadcast %418 : vector<1x1xf32> to vector<2x1xf32>
    %451 = arith.addf %449, %450 : vector<2x1xf32>
    %cst_170 = arith.constant dense<0.000000e+00> : vector<1xf32>
    %452 = vector.multi_reduction <add>, %437, %cst_170 [0] : vector<2x1xf32> to vector<1xf32>
    %453 = vector.shape_cast %452 : vector<1xf32> to vector<1x1xf32>
    %cst_171 = arith.constant 2.000000e+00 : f32
    %454 = vector.broadcast %cst_171 : f32 to vector<1x1xf32>
    %455 = arith.divf %453, %454 : vector<1x1xf32>
    %456 = math.exp %451 : vector<2x1xf32>
    %cst_172 = arith.constant dense<0.000000e+00> : vector<1xf32>
    %457 = vector.multi_reduction <add>, %456, %cst_172 [0] : vector<2x1xf32> to vector<1xf32>
    %458 = vector.shape_cast %457 : vector<1xf32> to vector<1x1xf32>
    %cst_173 = arith.constant 2.000000e+00 : f32
    %459 = vector.broadcast %cst_173 : f32 to vector<1x1xf32>
    %460 = arith.divf %458, %459 : vector<1x1xf32>
    %cst_174 = arith.constant 9.99999993E-9 : f32
    %461 = vector.broadcast %cst_174 : f32 to vector<1x1xf32>
    %462 = arith.addf %460, %461 : vector<1x1xf32>
    %463 = math.log %462 : vector<1x1xf32>
    %464 = arith.subf %455, %463 : vector<1x1xf32>
    %465 = arith.mulf %413, %464 : vector<1x1xf32>
    %466 = arith.subf %412, %465 : vector<1x1xf32>
    %467 = tpu.concatenate %17, %24, %272 in 1 : vector<2x64xf32>, vector<2x64xf32>, vector<2x64xf32> -> vector<2x192xf32>
    %c0_175 = arith.constant 0 : index
    %c0_176 = arith.constant 0 : index
    %468 = vector.load %arg27[%c0_175, %c0_176] : memref<2x192xf32, #tpu.memory_space<vmem>>, vector<2x192xf32>
    tpu.vector_store %arg27[%c0_175, %c0_176], %467 {strides = array<i32>} : memref<2x192xf32, #tpu.memory_space<vmem>>, vector<2x192xf32>,
    %469 = tpu.iota {dimensions = array<i32: 1>} : vector<1x128xi32>
    %c0_i32 = arith.constant 0 : i32
    %470 = vector.broadcast %c0_i32 : i32 to vector<1x128xi32>
    %471 = arith.cmpi eq, %469, %470 : vector<1x128xi32>
    %cst_177 = arith.constant 0.000000e+00 : f32
    %472 = vector.shape_cast %298 : vector<1x1xf32> to vector<1x1xf32>
    %473 = vector.broadcast %472 : vector<1x1xf32> to vector<1x128xf32>
    %474 = vector.broadcast %cst_177 : f32 to vector<1x128xf32>
    %475 = arith.select %471, %473, %474 : vector<1x128xi1>, vector<1x128xf32>
    %c1_i32 = arith.constant 1 : i32
    %476 = vector.broadcast %c1_i32 : i32 to vector<1x128xi32>
    %477 = arith.cmpi eq, %469, %476 : vector<1x128xi32>
    %cst_178 = arith.constant 0.000000e+00 : f32
    %478 = vector.shape_cast %466 : vector<1x1xf32> to vector<1x1xf32>
    %479 = vector.broadcast %478 : vector<1x1xf32> to vector<1x128xf32>
    %480 = vector.broadcast %cst_178 : f32 to vector<1x128xf32>
    %481 = arith.select %477, %479, %480 : vector<1x128xi1>, vector<1x128xf32>
    %482 = arith.addf %475, %481 : vector<1x128xf32>
    %c0_179 = arith.constant 0 : index
    %c0_180 = arith.constant 0 : index
    %483 = vector.load %arg28[%c0_179, %c0_180] : memref<1x128xf32, #tpu.memory_space<vmem>>, vector<1x128xf32>
    tpu.vector_store %arg28[%c0_179, %c0_180], %482 {strides = array<i32>} : memref<1x128xf32, #tpu.memory_space<vmem>>, vector<1x128xf32>,
    return
  }
}

</mosaic_0001>

<llo_original>
// kernel: mma_forward.1
$region0: #{mma_forward.1}
  #allocation0 [shape = 'u32[]', space=smem, size = 0x4, offset = 0x4, fixed_abs, tag = 'smem constant byte address 0x4 - core index']
  #allocation1 [shape = 'u32[144,128]{1,0:T(1,128)}', space=vmem, size = 0x12000, scoped, tag = 'internal scratch']
  #allocation2 [shape = 'f32[14,64]{1,0:T(8,128)}', space=vmem, size = 0x2000, scoped, tag = 'scratch operand']
  %s0 = inlined_call_operand.vmem [shape: f32[2,1152], index: 0, kind: input, shape index: {}]
  %s1 = inlined_call_operand.vmem [shape: f32[1152,448], index: 1, kind: input, shape index: {}]
  %s2 = inlined_call_operand.vmem [shape: f32[1,448], index: 2, kind: input, shape index: {}]
  %s3 = inlined_call_operand.vmem [shape: f32[7,64], index: 3, kind: input, shape index: {}]
  %s4 = inlined_call_operand.vmem [shape: f32[14,14], index: 4, kind: input, shape index: {}]
  %s5 = inlined_call_operand.vmem [shape: f32[4,14], index: 5, kind: input, shape index: {}]
  %s6 = inlined_call_operand.vmem [shape: f32[2,2], index: 6, kind: input, shape index: {}]
  %s7 = inlined_call_operand.vmem [shape: f32[4,64], index: 7, kind: input, shape index: {}]
  %s8 = inlined_call_operand.vmem [shape: f32[64,192], index: 8, kind: input, shape index: {}]
  %s9 = inlined_call_operand.vmem [shape: f32[1,192], index: 9, kind: input, shape index: {}]
  %s10 = inlined_call_operand.vmem [shape: f32[64,64], index: 10, kind: input, shape index: {}]
  %s11 = inlined_call_operand.vmem [shape: f32[1,64], index: 11, kind: input, shape index: {}]
  %s12 = inlined_call_operand.vmem [shape: f32[64,32], index: 12, kind: input, shape index: {}]
  %s13 = inlined_call_operand.vmem [shape: f32[1,32], index: 13, kind: input, shape index: {}]
  %s14 = inlined_call_operand.vmem [shape: f32[32,64], index: 14, kind: input, shape index: {}]
  %s15 = inlined_call_operand.vmem [shape: f32[1,64], index: 15, kind: input, shape index: {}]
  %s16 = inlined_call_operand.vmem [shape: f32[256,128], index: 16, kind: input, shape index: {}]
  %s17 = inlined_call_operand.vmem [shape: f32[1,128], index: 17, kind: input, shape index: {}]
  %s18 = inlined_call_operand.vmem [shape: f32[64,1152], index: 18, kind: input, shape index: {}]
  %s19 = inlined_call_operand.vmem [shape: f32[1,1152], index: 19, kind: input, shape index: {}]
  %s20 = inlined_call_operand.vmem [shape: f32[1,1152], index: 20, kind: input, shape index: {}]
  %s21 = inlined_call_operand.vmem [shape: f32[3,128,64], index: 21, kind: input, shape index: {}]
  %s22 = inlined_call_operand.vmem [shape: f32[3,64], index: 22, kind: input, shape index: {}]
  %s23 = inlined_call_operand.vmem [shape: f32[3,64], index: 23, kind: input, shape index: {}]
  %s24 = inlined_call_operand.vmem [shape: f32[3,1], index: 24, kind: input, shape index: {}]
  %s25 = inlined_call_operand.vmem [shape: f32[1,2], index: 25, kind: input, shape index: {}]
  %s26 = inlined_call_operand.vmem [shape: f32[2,128], index: 26, kind: output, shape index: {0}]
  %s27 = inlined_call_operand.vmem [shape: f32[2,192], index: 27, kind: output, shape index: {1}]
  %s28 = inlined_call_operand.vmem [shape: f32[1,128], index: 28, kind: output, shape index: {2}]
  %29 = xla_tuple %s26, %s27, %s28
  %s30 = sld [smem:[#allocation0]]
  $region130: #{mma_forward.1} parent=0
    _
  %s32 = ssub.s32 1, %s30
  %s33 = scalar_select 0, %s32, %s30
  // Predicated region
  $region2: #{mma_forward.1} parent=0 // pred_check
    _
  $region3: #{mma_forward.1} parent=0 // pred_check_branch
    %35 = sbr.rel (0) target = $region5
  $region4: #{mma_forward.1} parent=0 // pred_region
    _
  $region5: #{mma_forward.1} parent=0 // pred_fallthru
    _
  // Predicated region
  $region6: #{mma_forward.1} parent=0 // pred_check
    _
  $region7: #{mma_forward.1} parent=0 // pred_check_branch
    %37 = sbr.rel (0) target = $region9
  $region8: #{mma_forward.1} parent=0 // pred_region
    _
  $region9: #{mma_forward.1} parent=0 // pred_fallthru
    _
  // Predicated region
  $region10: #{mma_forward.1} parent=0 // pred_check
    _
  $region11: #{mma_forward.1} parent=0 // pred_check_branch
    %39 = sbr.rel (0) target = $region13
  $region12: #{mma_forward.1} parent=0 // pred_region
    _
  $region13: #{mma_forward.1} parent=0 // pred_fallthru
    _
  // Predicated region
  $region14: #{mma_forward.1} parent=0 // pred_check
    _
  $region15: #{mma_forward.1} parent=0 // pred_check_branch
    %41 = sbr.rel (0) target = $region17
  $region16: #{mma_forward.1} parent=0 // pred_region
    _
  $region17: #{mma_forward.1} parent=0 // pred_fallthru
    _
  // Predicated region
  $region18: #{mma_forward.1} parent=0 // pred_check
    _
  $region19: #{mma_forward.1} parent=0 // pred_check_branch
    %43 = sbr.rel (0) target = $region21
  $region20: #{mma_forward.1} parent=0 // pred_region
    _
  $region21: #{mma_forward.1} parent=0 // pred_fallthru
    _
  // Predicated region
  $region22: #{mma_forward.1} parent=0 // pred_check
    _
  $region23: #{mma_forward.1} parent=0 // pred_check_branch
    %45 = sbr.rel (0) target = $region25
  $region24: #{mma_forward.1} parent=0 // pred_region
    _
  $region25: #{mma_forward.1} parent=0 // pred_fallthru
    _
  // Predicated region
  $region26: #{mma_forward.1} parent=0 // pred_check
    _
  $region27: #{mma_forward.1} parent=0 // pred_check_branch
    %47 = sbr.rel (0) target = $region29
  $region28: #{mma_forward.1} parent=0 // pred_region
    _
  $region29: #{mma_forward.1} parent=0 // pred_fallthru
    _
  // Predicated region
  $region30: #{mma_forward.1} parent=0 // pred_check
    _
  $region31: #{mma_forward.1} parent=0 // pred_check_branch
    %49 = sbr.rel (0) target = $region33
  $region32: #{mma_forward.1} parent=0 // pred_region
    _
  $region33: #{mma_forward.1} parent=0 // pred_fallthru
    _
  // Predicated region
  $region34: #{mma_forward.1} parent=0 // pred_check
    _
  $region35: #{mma_forward.1} parent=0 // pred_check_branch
    %51 = sbr.rel (0) target = $region37
  $region36: #{mma_forward.1} parent=0 // pred_region
    _
  $region37: #{mma_forward.1} parent=0 // pred_fallthru
    _
  // Predicated region
  $region38: #{mma_forward.1} parent=0 // pred_check
    _
  $region39: #{mma_forward.1} parent=0 // pred_check_branch
    %53 = sbr.rel (0) target = $region41
  $region40: #{mma_forward.1} parent=0 // pred_region
    _
  $region41: #{mma_forward.1} parent=0 // pred_fallthru
    _
  // Predicated region
  $region42: #{mma_forward.1} parent=0 // pred_check
    _
  $region43: #{mma_forward.1} parent=0 // pred_check_branch
    %55 = sbr.rel (0) target = $region45
  $region44: #{mma_forward.1} parent=0 // pred_region
    _
  $region45: #{mma_forward.1} parent=0 // pred_fallthru
    _
  // Predicated region
  $region46: #{mma_forward.1} parent=0 // pred_check
    _
  $region47: #{mma_forward.1} parent=0 // pred_check_branch
    %57 = sbr.rel (0) target = $region49
  $region48: #{mma_forward.1} parent=0 // pred_region
    _
  $region49: #{mma_forward.1} parent=0 // pred_fallthru
    _
  // Predicated region
  $region50: #{mma_forward.1} parent=0 // pred_check
    _
  $region51: #{mma_forward.1} parent=0 // pred_check_branch
    %59 = sbr.rel (0) target = $region53
  $region52: #{mma_forward.1} parent=0 // pred_region
    _
  $region53: #{mma_forward.1} parent=0 // pred_fallthru
    _
  // Predicated region
  $region54: #{mma_forward.1} parent=0 // pred_check
    _
  $region55: #{mma_forward.1} parent=0 // pred_check_branch
    %61 = sbr.rel (0) target = $region57
  $region56: #{mma_forward.1} parent=0 // pred_region
    _
  $region57: #{mma_forward.1} parent=0 // pred_fallthru
    _
  // Predicated region
  $region58: #{mma_forward.1} parent=0 // pred_check
    _
  $region59: #{mma_forward.1} parent=0 // pred_check_branch
    %63 = sbr.rel (0) target = $region61
  $region60: #{mma_forward.1} parent=0 // pred_region
    _
  $region61: #{mma_forward.1} parent=0 // pred_fallthru
    _
  // Predicated region
  $region62: #{mma_forward.1} parent=0 // pred_check
    _
  $region63: #{mma_forward.1} parent=0 // pred_check_branch
    %65 = sbr.rel (0) target = $region65
  $region64: #{mma_forward.1} parent=0 // pred_region
    _
  $region65: #{mma_forward.1} parent=0 // pred_fallthru
    _
  // Predicated region
  $region66: #{mma_forward.1} parent=0 // pred_check
    _
  $region67: #{mma_forward.1} parent=0 // pred_check_branch
    %67 = sbr.rel (0) target = $region69
  $region68: #{mma_forward.1} parent=0 // pred_region
    _
  $region69: #{mma_forward.1} parent=0 // pred_fallthru
    _
  // Predicated region
  $region70: #{mma_forward.1} parent=0 // pred_check
    _
  $region71: #{mma_forward.1} parent=0 // pred_check_branch
    %69 = sbr.rel (0) target = $region73
  $region72: #{mma_forward.1} parent=0 // pred_region
    _
  $region73: #{mma_forward.1} parent=0 // pred_fallthru
    _
  // Predicated region
  $region74: #{mma_forward.1} parent=0 // pred_check
    _
  $region75: #{mma_forward.1} parent=0 // pred_check_branch
    %71 = sbr.rel (0) target = $region77
  $region76: #{mma_forward.1} parent=0 // pred_region
    _
  $region77: #{mma_forward.1} parent=0 // pred_fallthru
    _
  // Predicated region
  $region78: #{mma_forward.1} parent=0 // pred_check
    _
  $region79: #{mma_forward.1} parent=0 // pred_check_branch
    %73 = sbr.rel (0) target = $region81
  $region80: #{mma_forward.1} parent=0 // pred_region
    _
  $region81: #{mma_forward.1} parent=0 // pred_fallthru
    _
  // Predicated region
  $region82: #{mma_forward.1} parent=0 // pred_check
    _
  $region83: #{mma_forward.1} parent=0 // pred_check_branch
    %75 = sbr.rel (0) target = $region85
  $region84: #{mma_forward.1} parent=0 // pred_region
    _
  $region85: #{mma_forward.1} parent=0 // pred_fallthru
    _
  // Predicated region
  $region86: #{mma_forward.1} parent=0 // pred_check
    _
  $region87: #{mma_forward.1} parent=0 // pred_check_branch
    %77 = sbr.rel (0) target = $region89
  $region88: #{mma_forward.1} parent=0 // pred_region
    _
  $region89: #{mma_forward.1} parent=0 // pred_fallthru
    _
  // Predicated region
  $region90: #{mma_forward.1} parent=0 // pred_check
    _
  $region91: #{mma_forward.1} parent=0 // pred_check_branch
    %79 = sbr.rel (0) target = $region93
  $region92: #{mma_forward.1} parent=0 // pred_region
    _
  $region93: #{mma_forward.1} parent=0 // pred_fallthru
    _
  // Predicated region
  $region94: #{mma_forward.1} parent=0 // pred_check
    _
  $region95: #{mma_forward.1} parent=0 // pred_check_branch
    %81 = sbr.rel (0) target = $region97
  $region96: #{mma_forward.1} parent=0 // pred_region
    _
  $region97: #{mma_forward.1} parent=0 // pred_fallthru
    _
  // Predicated region
  $region98: #{mma_forward.1} parent=0 // pred_check
    _
  $region99: #{mma_forward.1} parent=0 // pred_check_branch
    %83 = sbr.rel (0) target = $region101
  $region100: #{mma_forward.1} parent=0 // pred_region
    _
  $region101: #{mma_forward.1} parent=0 // pred_fallthru
    _
  // Predicated region
  $region102: #{mma_forward.1} parent=0 // pred_check
    _
  $region103: #{mma_forward.1} parent=0 // pred_check_branch
    %85 = sbr.rel (0) target = $region105
  $region104: #{mma_forward.1} parent=0 // pred_region
    _
  $region105: #{mma_forward.1} parent=0 // pred_fallthru
    _
  %v87 = vld [vmem:[%s0] sm:$0xff]
  %v88 = vld [vmem:[%s0 + $0x8] sm:$0xff]
  %v89 = vld [vmem:[%s0 + $0x10] sm:$0x3]
  %v90 = vld [vmem:[%s1] sm:$0xff]
  %v91 = vld [vmem:[%s1 + $0x8] sm:$0xff]
  %v92 = vld [vmem:[%s1 + $0x10] sm:$0xff]
  %v93 = vld [vmem:[%s1 + $0x18] sm:$0xff]
  %v94 = vld [vmem:[%s1 + $0x20] sm:$0xff]
  %v95 = vld [vmem:[%s1 + $0x28] sm:$0xff]
  %v96 = vld [vmem:[%s1 + $0x30] sm:$0xff]
  %v97 = vld [vmem:[%s1 + $0x38] sm:$0xff]
  %v98 = vld [vmem:[%s1 + $0x40] sm:$0xff]
  %v99 = vld [vmem:[%s1 + $0x48] sm:$0xff]
  %v100 = vld [vmem:[%s1 + $0x50] sm:$0xff]
  %v101 = vld [vmem:[%s1 + $0x58] sm:$0xff]
  %v102 = vld [vmem:[%s1 + $0x60] sm:$0xff]
  %v103 = vld [vmem:[%s1 + $0x68] sm:$0xff]
  %v104 = vld [vmem:[%s1 + $0x70] sm:$0xff]
  %v105 = vld [vmem:[%s1 + $0x78] sm:$0xff]
  %v106 = vld [vmem:[%s1 + $0x80] sm:$0xff]
  %v107 = vld [vmem:[%s1 + $0x88] sm:$0xff]
  %v108 = vld [vmem:[%s1 + $0x90] sm:$0xff]
  %v109 = vld [vmem:[%s1 + $0x98] sm:$0xff]
  %v110 = vld [vmem:[%s1 + $0xa0] sm:$0xff]
  %v111 = vld [vmem:[%s1 + $0xa8] sm:$0xff]
  %v112 = vld [vmem:[%s1 + $0xb0] sm:$0xff]
  %v113 = vld [vmem:[%s1 + $0xb8] sm:$0xff]
  %v114 = vld [vmem:[%s1 + $0xc0] sm:$0xff]
  %v115 = vld [vmem:[%s1 + $0xc8] sm:$0xff]
  %v116 = vld [vmem:[%s1 + $0xd0] sm:$0xff]
  %v117 = vld [vmem:[%s1 + $0xd8] sm:$0xff]
  %v118 = vld [vmem:[%s1 + $0xe0] sm:$0xff]
  %v119 = vld [vmem:[%s1 + $0xe8] sm:$0xff]
  %v120 = vld [vmem:[%s1 + $0xf0] sm:$0xff]
  %v121 = vld [vmem:[%s1 + $0xf8] sm:$0xff]
  %v122 = vld [vmem:[%s1 + $0x100] sm:$0xff]
  %v123 = vld [vmem:[%s1 + $0x108] sm:$0xff]
  %v124 = vld [vmem:[%s1 + $0x110] sm:$0xff]
  %v125 = vld [vmem:[%s1 + $0x118] sm:$0xff]
  %v126 = vld [vmem:[%s1 + $0x120] sm:$0xff]
  %v127 = vld [vmem:[%s1 + $0x128] sm:$0xff]
  %v128 = vld [vmem:[%s1 + $0x130] sm:$0xff]
  %v129 = vld [vmem:[%s1 + $0x138] sm:$0xff]
  %v130 = vld [vmem:[%s1 + $0x140] sm:$0xff]
  %v131 = vld [vmem:[%s1 + $0x148] sm:$0xff]
  %v132 = vld [vmem:[%s1 + $0x150] sm:$0xff]
  %v133 = vld [vmem:[%s1 + $0x158] sm:$0xff]
  %v134 = vld [vmem:[%s1 + $0x160] sm:$0xff]
  %v135 = vld [vmem:[%s1 + $0x168] sm:$0xff]
  %v136 = vld [vmem:[%s1 + $0x170] sm:$0xff]
  %v137 = vld [vmem:[%s1 + $0x178] sm:$0xff]
  %v138 = vld [vmem:[%s1 + $0x180] sm:$0xff]
  %v139 = vld [vmem:[%s1 + $0x188] sm:$0xff]
  %v140 = vld [vmem:[%s1 + $0x190] sm:$0xff]
  %v141 = vld [vmem:[%s1 + $0x198] sm:$0xff]
  %v142 = vld [vmem:[%s1 + $0x1a0] sm:$0xff]
  %v143 = vld [vmem:[%s1 + $0x1a8] sm:$0xff]
  %v144 = vld [vmem:[%s1 + $0x1b0] sm:$0xff]
  %v145 = vld [vmem:[%s1 + $0x1b8] sm:$0xff]
  %v146 = vld [vmem:[%s1 + $0x1c0] sm:$0xff]
  %v147 = vld [vmem:[%s1 + $0x1c8] sm:$0xff]
  %v148 = vld [vmem:[%s1 + $0x1d0] sm:$0xff]
  %v149 = vld [vmem:[%s1 + $0x1d8] sm:$0xff]
  %v150 = vld [vmem:[%s1 + $0x1e0] sm:$0xff]
  %v151 = vld [vmem:[%s1 + $0x1e8] sm:$0xff]
  %v152 = vld [vmem:[%s1 + $0x1f0] sm:$0xff]
  %v153 = vld [vmem:[%s1 + $0x1f8] sm:$0xff]
  %v154 = vld [vmem:[%s1 + $0x200] sm:$0xff]
  %v155 = vld [vmem:[%s1 + $0x208] sm:$0xff]
  %v156 = vld [vmem:[%s1 + $0x210] sm:$0xff]
  %v157 = vld [vmem:[%s1 + $0x218] sm:$0xff]
  %v158 = vld [vmem:[%s1 + $0x220] sm:$0xff]
  %v159 = vld [vmem:[%s1 + $0x228] sm:$0xff]
  %v160 = vld [vmem:[%s1 + $0x230] sm:$0xff]
  %v161 = vld [vmem:[%s1 + $0x238] sm:$0xff]
  %v162 = vld [vmem:[%s1 + $0x240] sm:$0xff]
  %v163 = vld [vmem:[%s1 + $0x248] sm:$0xff]
  %v164 = vld [vmem:[%s1 + $0x250] sm:$0xff]
  %v165 = vld [vmem:[%s1 + $0x258] sm:$0xff]
  %v166 = vld [vmem:[%s1 + $0x260] sm:$0xff]
  %v167 = vld [vmem:[%s1 + $0x268] sm:$0xff]
  %v168 = vld [vmem:[%s1 + $0x270] sm:$0xff]
  %v169 = vld [vmem:[%s1 + $0x278] sm:$0xff]
  %v170 = vld [vmem:[%s1 + $0x280] sm:$0xff]
  %v171 = vld [vmem:[%s1 + $0x288] sm:$0xff]
  %v172 = vld [vmem:[%s1 + $0x290] sm:$0xff]
  %v173 = vld [vmem:[%s1 + $0x298] sm:$0xff]
  %v174 = vld [vmem:[%s1 + $0x2a0] sm:$0xff]
  %v175 = vld [vmem:[%s1 + $0x2a8] sm:$0xff]
  %v176 = vld [vmem:[%s1 + $0x2b0] sm:$0xff]
  %v177 = vld [vmem:[%s1 + $0x2b8] sm:$0xff]
  %v178 = vld [vmem:[%s1 + $0x2c0] sm:$0xff]
  %v179 = vld [vmem:[%s1 + $0x2c8] sm:$0xff]
  %v180 = vld [vmem:[%s1 + $0x2d0] sm:$0xff]
  %v181 = vld [vmem:[%s1 + $0x2d8] sm:$0xff]
  %v182 = vld [vmem:[%s1 + $0x2e0] sm:$0xff]
  %v183 = vld [vmem:[%s1 + $0x2e8] sm:$0xff]
  %v184 = vld [vmem:[%s1 + $0x2f0] sm:$0xff]
  %v185 = vld [vmem:[%s1 + $0x2f8] sm:$0xff]
  %v186 = vld [vmem:[%s1 + $0x300] sm:$0xff]
  %v187 = vld [vmem:[%s1 + $0x308] sm:$0xff]
  %v188 = vld [vmem:[%s1 + $0x310] sm:$0xff]
  %v189 = vld [vmem:[%s1 + $0x318] sm:$0xff]
  %v190 = vld [vmem:[%s1 + $0x320] sm:$0xff]
  %v191 = vld [vmem:[%s1 + $0x328] sm:$0xff]
  %v192 = vld [vmem:[%s1 + $0x330] sm:$0xff]
  %v193 = vld [vmem:[%s1 + $0x338] sm:$0xff]
  %v194 = vld [vmem:[%s1 + $0x340] sm:$0xff]
  %v195 = vld [vmem:[%s1 + $0x348] sm:$0xff]
  %v196 = vld [vmem:[%s1 + $0x350] sm:$0xff]
  %v197 = vld [vmem:[%s1 + $0x358] sm:$0xff]
  %v198 = vld [vmem:[%s1 + $0x360] sm:$0xff]
  %v199 = vld [vmem:[%s1 + $0x368] sm:$0xff]
  %v200 = vld [vmem:[%s1 + $0x370] sm:$0xff]
  %v201 = vld [vmem:[%s1 + $0x378] sm:$0xff]
  %v202 = vld [vmem:[%s1 + $0x380] sm:$0xff]
  %v203 = vld [vmem:[%s1 + $0x388] sm:$0xff]
  %v204 = vld [vmem:[%s1 + $0x390] sm:$0xff]
  %v205 = vld [vmem:[%s1 + $0x398] sm:$0xff]
  %v206 = vld [vmem:[%s1 + $0x3a0] sm:$0xff]
  %v207 = vld [vmem:[%s1 + $0x3a8] sm:$0xff]
  %v208 = vld [vmem:[%s1 + $0x3b0] sm:$0xff]
  %v209 = vld [vmem:[%s1 + $0x3b8] sm:$0xff]
  %v210 = vld [vmem:[%s1 + $0x3c0] sm:$0xff]
  %v211 = vld [vmem:[%s1 + $0x3c8] sm:$0xff]
  %v212 = vld [vmem:[%s1 + $0x3d0] sm:$0xff]
  %v213 = vld [vmem:[%s1 + $0x3d8] sm:$0xff]
  %v214 = vld [vmem:[%s1 + $0x3e0] sm:$0xff]
  %v215 = vld [vmem:[%s1 + $0x3e8] sm:$0xff]
  %v216 = vld [vmem:[%s1 + $0x3f0] sm:$0xff]
  %v217 = vld [vmem:[%s1 + $0x3f8] sm:$0xff]
  %v218 = vld [vmem:[%s1 + $0x400] sm:$0xff]
  %v219 = vld [vmem:[%s1 + $0x408] sm:$0xff]
  %v220 = vld [vmem:[%s1 + $0x410] sm:$0xff]
  %v221 = vld [vmem:[%s1 + $0x418] sm:$0xff]
  %v222 = vld [vmem:[%s1 + $0x420] sm:$0xff]
  %v223 = vld [vmem:[%s1 + $0x428] sm:$0xff]
  %v224 = vld [vmem:[%s1 + $0x430] sm:$0xff]
  %v225 = vld [vmem:[%s1 + $0x438] sm:$0xff]
  %v226 = vld [vmem:[%s1 + $0x440] sm:$0xff]
  %v227 = vld [vmem:[%s1 + $0x448] sm:$0xff]
  %v228 = vld [vmem:[%s1 + $0x450] sm:$0xff]
  %v229 = vld [vmem:[%s1 + $0x458] sm:$0xff]
  %v230 = vld [vmem:[%s1 + $0x460] sm:$0xff]
  %v231 = vld [vmem:[%s1 + $0x468] sm:$0xff]
  %v232 = vld [vmem:[%s1 + $0x470] sm:$0xff]
  %v233 = vld [vmem:[%s1 + $0x478] sm:$0xff]
  %v234 = vld [vmem:[%s1 + $0x480] sm:$0xff]
  %v235 = vld [vmem:[%s1 + $0x488] sm:$0xff]
  %v236 = vld [vmem:[%s1 + $0x490] sm:$0xff]
  %v237 = vld [vmem:[%s1 + $0x498] sm:$0xff]
  %v238 = vld [vmem:[%s1 + $0x4a0] sm:$0xff]
  %v239 = vld [vmem:[%s1 + $0x4a8] sm:$0xff]
  %v240 = vld [vmem:[%s1 + $0x4b0] sm:$0xff]
  %v241 = vld [vmem:[%s1 + $0x4b8] sm:$0xff]
  %v242 = vld [vmem:[%s1 + $0x4c0] sm:$0xff]
  %v243 = vld [vmem:[%s1 + $0x4c8] sm:$0xff]
  %v244 = vld [vmem:[%s1 + $0x4d0] sm:$0xff]
  %v245 = vld [vmem:[%s1 + $0x4d8] sm:$0xff]
  %v246 = vld [vmem:[%s1 + $0x4e0] sm:$0xff]
  %v247 = vld [vmem:[%s1 + $0x4e8] sm:$0xff]
  %v248 = vld [vmem:[%s1 + $0x4f0] sm:$0xff]
  %v249 = vld [vmem:[%s1 + $0x4f8] sm:$0xff]
  %v250 = vld [vmem:[%s1 + $0x500] sm:$0xff]
  %v251 = vld [vmem:[%s1 + $0x508] sm:$0xff]
  %v252 = vld [vmem:[%s1 + $0x510] sm:$0xff]
  %v253 = vld [vmem:[%s1 + $0x518] sm:$0xff]
  %v254 = vld [vmem:[%s1 + $0x520] sm:$0xff]
  %v255 = vld [vmem:[%s1 + $0x528] sm:$0xff]
  %v256 = vld [vmem:[%s1 + $0x530] sm:$0xff]
  %v257 = vld [vmem:[%s1 + $0x538] sm:$0xff]
  %v258 = vld [vmem:[%s1 + $0x540] sm:$0xff]
  %v259 = vld [vmem:[%s1 + $0x548] sm:$0xff]
  %v260 = vld [vmem:[%s1 + $0x550] sm:$0xff]
  %v261 = vld [vmem:[%s1 + $0x558] sm:$0xff]
  %v262 = vld [vmem:[%s1 + $0x560] sm:$0xff]
  %v263 = vld [vmem:[%s1 + $0x568] sm:$0xff]
  %v264 = vld [vmem:[%s1 + $0x570] sm:$0xff]
  %v265 = vld [vmem:[%s1 + $0x578] sm:$0xff]
  %v266 = vld [vmem:[%s1 + $0x580] sm:$0xff]
  %v267 = vld [vmem:[%s1 + $0x588] sm:$0xff]
  %v268 = vld [vmem:[%s1 + $0x590] sm:$0xff]
  %v269 = vld [vmem:[%s1 + $0x598] sm:$0xff]
  %v270 = vld [vmem:[%s1 + $0x5a0] sm:$0xff]
  %v271 = vld [vmem:[%s1 + $0x5a8] sm:$0xff]
  %v272 = vld [vmem:[%s1 + $0x5b0] sm:$0xff]
  %v273 = vld [vmem:[%s1 + $0x5b8] sm:$0xff]
  %v274 = vld [vmem:[%s1 + $0x5c0] sm:$0xff]
  %v275 = vld [vmem:[%s1 + $0x5c8] sm:$0xff]
  %v276 = vld [vmem:[%s1 + $0x5d0] sm:$0xff]
  %v277 = vld [vmem:[%s1 + $0x5d8] sm:$0xff]
  %v278 = vld [vmem:[%s1 + $0x5e0] sm:$0xff]
  %v279 = vld [vmem:[%s1 + $0x5e8] sm:$0xff]
  %v280 = vld [vmem:[%s1 + $0x5f0] sm:$0xff]
  %v281 = vld [vmem:[%s1 + $0x5f8] sm:$0xff]
  %v282 = vld [vmem:[%s1 + $0x600] sm:$0xff]
  %v283 = vld [vmem:[%s1 + $0x608] sm:$0xff]
  %v284 = vld [vmem:[%s1 + $0x610] sm:$0xff]
  %v285 = vld [vmem:[%s1 + $0x618] sm:$0xff]
  %v286 = vld [vmem:[%s1 + $0x620] sm:$0xff]
  %v287 = vld [vmem:[%s1 + $0x628] sm:$0xff]
  %v288 = vld [vmem:[%s1 + $0x630] sm:$0xff]
  %v289 = vld [vmem:[%s1 + $0x638] sm:$0xff]
  %v290 = vld [vmem:[%s1 + $0x640] sm:$0xff]
  %v291 = vld [vmem:[%s1 + $0x648] sm:$0xff]
  %v292 = vld [vmem:[%s1 + $0x650] sm:$0xff]
  %v293 = vld [vmem:[%s1 + $0x658] sm:$0xff]
  %v294 = vld [vmem:[%s1 + $0x660] sm:$0xff]
  %v295 = vld [vmem:[%s1 + $0x668] sm:$0xff]
  %v296 = vld [vmem:[%s1 + $0x670] sm:$0xff]
  %v297 = vld [vmem:[%s1 + $0x678] sm:$0xff]
  %v298 = vld [vmem:[%s1 + $0x680] sm:$0xff]
  %v299 = vld [vmem:[%s1 + $0x688] sm:$0xff]
  %v300 = vld [vmem:[%s1 + $0x690] sm:$0xff]
  %v301 = vld [vmem:[%s1 + $0x698] sm:$0xff]
  %v302 = vld [vmem:[%s1 + $0x6a0] sm:$0xff]
  %v303 = vld [vmem:[%s1 + $0x6a8] sm:$0xff]
  %v304 = vld [vmem:[%s1 + $0x6b0] sm:$0xff]
  %v305 = vld [vmem:[%s1 + $0x6b8] sm:$0xff]
  %v306 = vld [vmem:[%s1 + $0x6c0] sm:$0xff]
  %v307 = vld [vmem:[%s1 + $0x6c8] sm:$0xff]
  %v308 = vld [vmem:[%s1 + $0x6d0] sm:$0xff]
  %v309 = vld [vmem:[%s1 + $0x6d8] sm:$0xff]
  %v310 = vld [vmem:[%s1 + $0x6e0] sm:$0xff]
  %v311 = vld [vmem:[%s1 + $0x6e8] sm:$0xff]
  %v312 = vld [vmem:[%s1 + $0x6f0] sm:$0xff]
  %v313 = vld [vmem:[%s1 + $0x6f8] sm:$0xff]
  %v314 = vld [vmem:[%s1 + $0x700] sm:$0xff]
  %v315 = vld [vmem:[%s1 + $0x708] sm:$0xff]
  %v316 = vld [vmem:[%s1 + $0x710] sm:$0xff]
  %v317 = vld [vmem:[%s1 + $0x718] sm:$0xff]
  %v318 = vld [vmem:[%s1 + $0x720] sm:$0xff]
  %v319 = vld [vmem:[%s1 + $0x728] sm:$0xff]
  %v320 = vld [vmem:[%s1 + $0x730] sm:$0xff]
  %v321 = vld [vmem:[%s1 + $0x738] sm:$0xff]
  %v322 = vld [vmem:[%s1 + $0x740] sm:$0xff]
  %v323 = vld [vmem:[%s1 + $0x748] sm:$0xff]
  %v324 = vld [vmem:[%s1 + $0x750] sm:$0xff]
  %v325 = vld [vmem:[%s1 + $0x758] sm:$0xff]
  %v326 = vld [vmem:[%s1 + $0x760] sm:$0xff]
  %v327 = vld [vmem:[%s1 + $0x768] sm:$0xff]
  %v328 = vld [vmem:[%s1 + $0x770] sm:$0xff]
  %v329 = vld [vmem:[%s1 + $0x778] sm:$0xff]
  %v330 = vld [vmem:[%s1 + $0x780] sm:$0xff]
  %v331 = vld [vmem:[%s1 + $0x788] sm:$0xff]
  %v332 = vld [vmem:[%s1 + $0x790] sm:$0xff]
  %v333 = vld [vmem:[%s1 + $0x798] sm:$0xff]
  %v334 = vld [vmem:[%s1 + $0x7a0] sm:$0xff]
  %v335 = vld [vmem:[%s1 + $0x7a8] sm:$0xff]
  %v336 = vld [vmem:[%s1 + $0x7b0] sm:$0xff]
  %v337 = vld [vmem:[%s1 + $0x7b8] sm:$0xff]
  %v338 = vld [vmem:[%s1 + $0x7c0] sm:$0xff]
  %v339 = vld [vmem:[%s1 + $0x7c8] sm:$0xff]
  %v340 = vld [vmem:[%s1 + $0x7d0] sm:$0xff]
  %v341 = vld [vmem:[%s1 + $0x7d8] sm:$0xff]
  %v342 = vld [vmem:[%s1 + $0x7e0] sm:$0xff]
  %v343 = vld [vmem:[%s1 + $0x7e8] sm:$0xff]
  %v344 = vld [vmem:[%s1 + $0x7f0] sm:$0xff]
  %v345 = vld [vmem:[%s1 + $0x7f8] sm:$0xff]
  %v346 = vld [vmem:[%s1 + $0x800] sm:$0xff]
  %v347 = vld [vmem:[%s1 + $0x808] sm:$0xff]
  %v348 = vld [vmem:[%s1 + $0x810] sm:$0xff]
  %v349 = vld [vmem:[%s1 + $0x818] sm:$0xff]
  %v350 = vld [vmem:[%s1 + $0x820] sm:$0xff]
  %v351 = vld [vmem:[%s1 + $0x828] sm:$0xff]
  %v352 = vld [vmem:[%s1 + $0x830] sm:$0xff]
  %v353 = vld [vmem:[%s1 + $0x838] sm:$0xff]
  %v354 = vld [vmem:[%s1 + $0x840] sm:$0xff]
  %v355 = vld [vmem:[%s1 + $0x848] sm:$0xff]
  %v356 = vld [vmem:[%s1 + $0x850] sm:$0xff]
  %v357 = vld [vmem:[%s1 + $0x858] sm:$0xff]
  %v358 = vld [vmem:[%s1 + $0x860] sm:$0xff]
  %v359 = vld [vmem:[%s1 + $0x868] sm:$0xff]
  %v360 = vld [vmem:[%s1 + $0x870] sm:$0xff]
  %v361 = vld [vmem:[%s1 + $0x878] sm:$0xff]
  %v362 = vld [vmem:[%s1 + $0x880] sm:$0xff]
  %v363 = vld [vmem:[%s1 + $0x888] sm:$0xff]
  %v364 = vld [vmem:[%s1 + $0x890] sm:$0xff]
  %v365 = vld [vmem:[%s1 + $0x898] sm:$0xff]
  %v366 = vld [vmem:[%s1 + $0x8a0] sm:$0xff]
  %v367 = vld [vmem:[%s1 + $0x8a8] sm:$0xff]
  %v368 = vld [vmem:[%s1 + $0x8b0] sm:$0xff]
  %v369 = vld [vmem:[%s1 + $0x8b8] sm:$0xff]
  %v370 = vld [vmem:[%s1 + $0x8c0] sm:$0xff]
  %v371 = vld [vmem:[%s1 + $0x8c8] sm:$0xff]
  %v372 = vld [vmem:[%s1 + $0x8d0] sm:$0xff]
  %v373 = vld [vmem:[%s1 + $0x8d8] sm:$0xff]
  %v374 = vld [vmem:[%s1 + $0x8e0] sm:$0xff]
  %v375 = vld [vmem:[%s1 + $0x8e8] sm:$0xff]
  %v376 = vld [vmem:[%s1 + $0x8f0] sm:$0xff]
  %v377 = vld [vmem:[%s1 + $0x8f8] sm:$0xff]
  %v378 = vld [vmem:[%s1 + $0x900] sm:$0xff]
  %v379 = vld [vmem:[%s1 + $0x908] sm:$0xff]
  %v380 = vld [vmem:[%s1 + $0x910] sm:$0xff]
  %v381 = vld [vmem:[%s1 + $0x918] sm:$0xff]
  %v382 = vld [vmem:[%s1 + $0x920] sm:$0xff]
  %v383 = vld [vmem:[%s1 + $0x928] sm:$0xff]
  %v384 = vld [vmem:[%s1 + $0x930] sm:$0xff]
  %v385 = vld [vmem:[%s1 + $0x938] sm:$0xff]
  %v386 = vld [vmem:[%s1 + $0x940] sm:$0xff]
  %v387 = vld [vmem:[%s1 + $0x948] sm:$0xff]
  %v388 = vld [vmem:[%s1 + $0x950] sm:$0xff]
  %v389 = vld [vmem:[%s1 + $0x958] sm:$0xff]
  %v390 = vld [vmem:[%s1 + $0x960] sm:$0xff]
  %v391 = vld [vmem:[%s1 + $0x968] sm:$0xff]
  %v392 = vld [vmem:[%s1 + $0x970] sm:$0xff]
  %v393 = vld [vmem:[%s1 + $0x978] sm:$0xff]
  %v394 = vld [vmem:[%s1 + $0x980] sm:$0xff]
  %v395 = vld [vmem:[%s1 + $0x988] sm:$0xff]
  %v396 = vld [vmem:[%s1 + $0x990] sm:$0xff]
  %v397 = vld [vmem:[%s1 + $0x998] sm:$0xff]
  %v398 = vld [vmem:[%s1 + $0x9a0] sm:$0xff]
  %v399 = vld [vmem:[%s1 + $0x9a8] sm:$0xff]
  %v400 = vld [vmem:[%s1 + $0x9b0] sm:$0xff]
  %v401 = vld [vmem:[%s1 + $0x9b8] sm:$0xff]
  %v402 = vld [vmem:[%s1 + $0x9c0] sm:$0xff]
  %v403 = vld [vmem:[%s1 + $0x9c8] sm:$0xff]
  %v404 = vld [vmem:[%s1 + $0x9d0] sm:$0xff]
  %v405 = vld [vmem:[%s1 + $0x9d8] sm:$0xff]
  %v406 = vld [vmem:[%s1 + $0x9e0] sm:$0xff]
  %v407 = vld [vmem:[%s1 + $0x9e8] sm:$0xff]
  %v408 = vld [vmem:[%s1 + $0x9f0] sm:$0xff]
  %v409 = vld [vmem:[%s1 + $0x9f8] sm:$0xff]
  %v410 = vld [vmem:[%s1 + $0xa00] sm:$0xff]
  %v411 = vld [vmem:[%s1 + $0xa08] sm:$0xff]
  %v412 = vld [vmem:[%s1 + $0xa10] sm:$0xff]
  %v413 = vld [vmem:[%s1 + $0xa18] sm:$0xff]
  %v414 = vld [vmem:[%s1 + $0xa20] sm:$0xff]
  %v415 = vld [vmem:[%s1 + $0xa28] sm:$0xff]
  %v416 = vld [vmem:[%s1 + $0xa30] sm:$0xff]
  %v417 = vld [vmem:[%s1 + $0xa38] sm:$0xff]
  %v418 = vld [vmem:[%s1 + $0xa40] sm:$0xff]
  %v419 = vld [vmem:[%s1 + $0xa48] sm:$0xff]
  %v420 = vld [vmem:[%s1 + $0xa50] sm:$0xff]
  %v421 = vld [vmem:[%s1 + $0xa58] sm:$0xff]
  %v422 = vld [vmem:[%s1 + $0xa60] sm:$0xff]
  %v423 = vld [vmem:[%s1 + $0xa68] sm:$0xff]
  %v424 = vld [vmem:[%s1 + $0xa70] sm:$0xff]
  %v425 = vld [vmem:[%s1 + $0xa78] sm:$0xff]
  %v426 = vld [vmem:[%s1 + $0xa80] sm:$0xff]
  %v427 = vld [vmem:[%s1 + $0xa88] sm:$0xff]
  %v428 = vld [vmem:[%s1 + $0xa90] sm:$0xff]
  %v429 = vld [vmem:[%s1 + $0xa98] sm:$0xff]
  %v430 = vld [vmem:[%s1 + $0xaa0] sm:$0xff]
  %v431 = vld [vmem:[%s1 + $0xaa8] sm:$0xff]
  %v432 = vld [vmem:[%s1 + $0xab0] sm:$0xff]
  %v433 = vld [vmem:[%s1 + $0xab8] sm:$0xff]
  %v434 = vld [vmem:[%s1 + $0xac0] sm:$0xff]
  %v435 = vld [vmem:[%s1 + $0xac8] sm:$0xff]
  %v436 = vld [vmem:[%s1 + $0xad0] sm:$0xff]
  %v437 = vld [vmem:[%s1 + $0xad8] sm:$0xff]
  %v438 = vld [vmem:[%s1 + $0xae0] sm:$0xff]
  %v439 = vld [vmem:[%s1 + $0xae8] sm:$0xff]
  %v440 = vld [vmem:[%s1 + $0xaf0] sm:$0xff]
  %v441 = vld [vmem:[%s1 + $0xaf8] sm:$0xff]
  %v442 = vld [vmem:[%s1 + $0xb00] sm:$0xff]
  %v443 = vld [vmem:[%s1 + $0xb08] sm:$0xff]
  %v444 = vld [vmem:[%s1 + $0xb10] sm:$0xff]
  %v445 = vld [vmem:[%s1 + $0xb18] sm:$0xff]
  %v446 = vld [vmem:[%s1 + $0xb20] sm:$0xff]
  %v447 = vld [vmem:[%s1 + $0xb28] sm:$0xff]
  %v448 = vld [vmem:[%s1 + $0xb30] sm:$0xff]
  %v449 = vld [vmem:[%s1 + $0xb38] sm:$0xff]
  %v450 = vld [vmem:[%s1 + $0xb40] sm:$0xff]
  %v451 = vld [vmem:[%s1 + $0xb48] sm:$0xff]
  %v452 = vld [vmem:[%s1 + $0xb50] sm:$0xff]
  %v453 = vld [vmem:[%s1 + $0xb58] sm:$0xff]
  %v454 = vld [vmem:[%s1 + $0xb60] sm:$0xff]
  %v455 = vld [vmem:[%s1 + $0xb68] sm:$0xff]
  %v456 = vld [vmem:[%s1 + $0xb70] sm:$0xff]
  %v457 = vld [vmem:[%s1 + $0xb78] sm:$0xff]
  %v458 = vld [vmem:[%s1 + $0xb80] sm:$0xff]
  %v459 = vld [vmem:[%s1 + $0xb88] sm:$0xff]
  %v460 = vld [vmem:[%s1 + $0xb90] sm:$0xff]
  %v461 = vld [vmem:[%s1 + $0xb98] sm:$0xff]
  %v462 = vld [vmem:[%s1 + $0xba0] sm:$0xff]
  %v463 = vld [vmem:[%s1 + $0xba8] sm:$0xff]
  %v464 = vld [vmem:[%s1 + $0xbb0] sm:$0xff]
  %v465 = vld [vmem:[%s1 + $0xbb8] sm:$0xff]
  %v466 = vld [vmem:[%s1 + $0xbc0] sm:$0xff]
  %v467 = vld [vmem:[%s1 + $0xbc8] sm:$0xff]
  %v468 = vld [vmem:[%s1 + $0xbd0] sm:$0xff]
  %v469 = vld [vmem:[%s1 + $0xbd8] sm:$0xff]
  %v470 = vld [vmem:[%s1 + $0xbe0] sm:$0xff]
  %v471 = vld [vmem:[%s1 + $0xbe8] sm:$0xff]
  %v472 = vld [vmem:[%s1 + $0xbf0] sm:$0xff]
  %v473 = vld [vmem:[%s1 + $0xbf8] sm:$0xff]
  %v474 = vld [vmem:[%s1 + $0xc00] sm:$0xff]
  %v475 = vld [vmem:[%s1 + $0xc08] sm:$0xff]
  %v476 = vld [vmem:[%s1 + $0xc10] sm:$0xff]
  %v477 = vld [vmem:[%s1 + $0xc18] sm:$0xff]
  %v478 = vld [vmem:[%s1 + $0xc20] sm:$0xff]
  %v479 = vld [vmem:[%s1 + $0xc28] sm:$0xff]
  %v480 = vld [vmem:[%s1 + $0xc30] sm:$0xff]
  %v481 = vld [vmem:[%s1 + $0xc38] sm:$0xff]
  %v482 = vld [vmem:[%s1 + $0xc40] sm:$0xff]
  %v483 = vld [vmem:[%s1 + $0xc48] sm:$0xff]
  %v484 = vld [vmem:[%s1 + $0xc50] sm:$0xff]
  %v485 = vld [vmem:[%s1 + $0xc58] sm:$0xff]
  %v486 = vld [vmem:[%s1 + $0xc60] sm:$0xff]
  %v487 = vld [vmem:[%s1 + $0xc68] sm:$0xff]
  %v488 = vld [vmem:[%s1 + $0xc70] sm:$0xff]
  %v489 = vld [vmem:[%s1 + $0xc78] sm:$0xff]
  %v490 = vld [vmem:[%s1 + $0xc80] sm:$0xff]
  %v491 = vld [vmem:[%s1 + $0xc88] sm:$0xff]
  %v492 = vld [vmem:[%s1 + $0xc90] sm:$0xff]
  %v493 = vld [vmem:[%s1 + $0xc98] sm:$0xff]
  %v494 = vld [vmem:[%s1 + $0xca0] sm:$0xff]
  %v495 = vld [vmem:[%s1 + $0xca8] sm:$0xff]
  %v496 = vld [vmem:[%s1 + $0xcb0] sm:$0xff]
  %v497 = vld [vmem:[%s1 + $0xcb8] sm:$0xff]
  %v498 = vld [vmem:[%s1 + $0xcc0] sm:$0xff]
  %v499 = vld [vmem:[%s1 + $0xcc8] sm:$0xff]
  %v500 = vld [vmem:[%s1 + $0xcd0] sm:$0xff]
  %v501 = vld [vmem:[%s1 + $0xcd8] sm:$0xff]
  %v502 = vld [vmem:[%s1 + $0xce0] sm:$0xff]
  %v503 = vld [vmem:[%s1 + $0xce8] sm:$0xff]
  %v504 = vld [vmem:[%s1 + $0xcf0] sm:$0xff]
  %v505 = vld [vmem:[%s1 + $0xcf8] sm:$0xff]
  %v506 = vld [vmem:[%s1 + $0xd00] sm:$0xff]
  %v507 = vld [vmem:[%s1 + $0xd08] sm:$0xff]
  %v508 = vld [vmem:[%s1 + $0xd10] sm:$0xff]
  %v509 = vld [vmem:[%s1 + $0xd18] sm:$0xff]
  %v510 = vld [vmem:[%s1 + $0xd20] sm:$0xff]
  %v511 = vld [vmem:[%s1 + $0xd28] sm:$0xff]
  %v512 = vld [vmem:[%s1 + $0xd30] sm:$0xff]
  %v513 = vld [vmem:[%s1 + $0xd38] sm:$0xff]
  %v514 = vld [vmem:[%s1 + $0xd40] sm:$0xff]
  %v515 = vld [vmem:[%s1 + $0xd48] sm:$0xff]
  %v516 = vld [vmem:[%s1 + $0xd50] sm:$0xff]
  %v517 = vld [vmem:[%s1 + $0xd58] sm:$0xff]
  %v518 = vld [vmem:[%s1 + $0xd60] sm:$0xff]
  %v519 = vld [vmem:[%s1 + $0xd68] sm:$0xff]
  %v520 = vld [vmem:[%s1 + $0xd70] sm:$0xff]
  %v521 = vld [vmem:[%s1 + $0xd78] sm:$0xff]
  %v522 = vld [vmem:[%s1 + $0xd80] sm:$0xff]
  %v523 = vld [vmem:[%s1 + $0xd88] sm:$0xff]
  %v524 = vld [vmem:[%s1 + $0xd90] sm:$0xff]
  %v525 = vld [vmem:[%s1 + $0xd98] sm:$0xff]
  %v526 = vld [vmem:[%s1 + $0xda0] sm:$0xff]
  %v527 = vld [vmem:[%s1 + $0xda8] sm:$0xff]
  %v528 = vld [vmem:[%s1 + $0xdb0] sm:$0xff]
  %v529 = vld [vmem:[%s1 + $0xdb8] sm:$0xff]
  %v530 = vld [vmem:[%s1 + $0xdc0] sm:$0xff]
  %v531 = vld [vmem:[%s1 + $0xdc8] sm:$0xff]
  %v532 = vld [vmem:[%s1 + $0xdd0] sm:$0xff]
  %v533 = vld [vmem:[%s1 + $0xdd8] sm:$0xff]
  %v534 = vld [vmem:[%s1 + $0xde0] sm:$0xff]
  %v535 = vld [vmem:[%s1 + $0xde8] sm:$0xff]
  %v536 = vld [vmem:[%s1 + $0xdf0] sm:$0xff]
  %v537 = vld [vmem:[%s1 + $0xdf8] sm:$0xff]
  %v538 = vld [vmem:[%s1 + $0xe00] sm:$0xff]
  %v539 = vld [vmem:[%s1 + $0xe08] sm:$0xff]
  %v540 = vld [vmem:[%s1 + $0xe10] sm:$0xff]
  %v541 = vld [vmem:[%s1 + $0xe18] sm:$0xff]
  %v542 = vld [vmem:[%s1 + $0xe20] sm:$0xff]
  %v543 = vld [vmem:[%s1 + $0xe28] sm:$0xff]
  %v544 = vld [vmem:[%s1 + $0xe30] sm:$0xff]
  %v545 = vld [vmem:[%s1 + $0xe38] sm:$0xff]
  %v546 = vld [vmem:[%s1 + $0xe40] sm:$0xff]
  %v547 = vld [vmem:[%s1 + $0xe48] sm:$0xff]
  %v548 = vld [vmem:[%s1 + $0xe50] sm:$0xff]
  %v549 = vld [vmem:[%s1 + $0xe58] sm:$0xff]
  %v550 = vld [vmem:[%s1 + $0xe60] sm:$0xff]
  %v551 = vld [vmem:[%s1 + $0xe68] sm:$0xff]
  %v552 = vld [vmem:[%s1 + $0xe70] sm:$0xff]
  %v553 = vld [vmem:[%s1 + $0xe78] sm:$0xff]
  %v554 = vld [vmem:[%s1 + $0xe80] sm:$0xff]
  %v555 = vld [vmem:[%s1 + $0xe88] sm:$0xff]
  %v556 = vld [vmem:[%s1 + $0xe90] sm:$0xff]
  %v557 = vld [vmem:[%s1 + $0xe98] sm:$0xff]
  %v558 = vld [vmem:[%s1 + $0xea0] sm:$0xff]
  %v559 = vld [vmem:[%s1 + $0xea8] sm:$0xff]
  %v560 = vld [vmem:[%s1 + $0xeb0] sm:$0xff]
  %v561 = vld [vmem:[%s1 + $0xeb8] sm:$0xff]
  %v562 = vld [vmem:[%s1 + $0xec0] sm:$0xff]
  %v563 = vld [vmem:[%s1 + $0xec8] sm:$0xff]
  %v564 = vld [vmem:[%s1 + $0xed0] sm:$0xff]
  %v565 = vld [vmem:[%s1 + $0xed8] sm:$0xff]
  %v566 = vld [vmem:[%s1 + $0xee0] sm:$0xff]
  %v567 = vld [vmem:[%s1 + $0xee8] sm:$0xff]
  %v568 = vld [vmem:[%s1 + $0xef0] sm:$0xff]
  %v569 = vld [vmem:[%s1 + $0xef8] sm:$0xff]
  %v570 = vld [vmem:[%s1 + $0xf00] sm:$0xff]
  %v571 = vld [vmem:[%s1 + $0xf08] sm:$0xff]
  %v572 = vld [vmem:[%s1 + $0xf10] sm:$0xff]
  %v573 = vld [vmem:[%s1 + $0xf18] sm:$0xff]
  %v574 = vld [vmem:[%s1 + $0xf20] sm:$0xff]
  %v575 = vld [vmem:[%s1 + $0xf28] sm:$0xff]
  %v576 = vld [vmem:[%s1 + $0xf30] sm:$0xff]
  %v577 = vld [vmem:[%s1 + $0xf38] sm:$0xff]
  %v578 = vld [vmem:[%s1 + $0xf40] sm:$0xff]
  %v579 = vld [vmem:[%s1 + $0xf48] sm:$0xff]
  %v580 = vld [vmem:[%s1 + $0xf50] sm:$0xff]
  %v581 = vld [vmem:[%s1 + $0xf58] sm:$0xff]
  %v582 = vld [vmem:[%s1 + $0xf60] sm:$0xff]
  %v583 = vld [vmem:[%s1 + $0xf68] sm:$0xff]
  %v584 = vld [vmem:[%s1 + $0xf70] sm:$0xff]
  %v585 = vld [vmem:[%s1 + $0xf78] sm:$0xff]
  %v586 = vld [vmem:[%s1 + $0xf80] sm:$0xff]
  %v587 = vld [vmem:[%s1 + $0xf88] sm:$0xff]
  %v588 = vld [vmem:[%s1 + $0xf90] sm:$0xff]
  %v589 = vld [vmem:[%s1 + $0xf98] sm:$0xff]
  %v590 = vld [vmem:[%s1 + $0xfa0] sm:$0xff]
  %v591 = vld [vmem:[%s1 + $0xfa8] sm:$0xff]
  %v592 = vld [vmem:[%s1 + $0xfb0] sm:$0xff]
  %v593 = vld [vmem:[%s1 + $0xfb8] sm:$0xff]
  %v594 = vld [vmem:[%s1 + $0xfc0] sm:$0xff]
  %v595 = vld [vmem:[%s1 + $0xfc8] sm:$0xff]
  %v596 = vld [vmem:[%s1 + $0xfd0] sm:$0xff]
  %v597 = vld [vmem:[%s1 + $0xfd8] sm:$0xff]
  %v598 = vld [vmem:[%s1 + $0xfe0] sm:$0xff]
  %v599 = vld [vmem:[%s1 + $0xfe8] sm:$0xff]
  %v600 = vld [vmem:[%s1 + $0xff0] sm:$0xff]
  %v601 = vld [vmem:[%s1 + $0xff8] sm:$0xff]
  %v602 = vld [vmem:[%s1 + $0x1000] sm:$0xff]
  %v603 = vld [vmem:[%s1 + $0x1008] sm:$0xff]
  %v604 = vld [vmem:[%s1 + $0x1010] sm:$0xff]
  %v605 = vld [vmem:[%s1 + $0x1018] sm:$0xff]
  %v606 = vld [vmem:[%s1 + $0x1020] sm:$0xff]
  %v607 = vld [vmem:[%s1 + $0x1028] sm:$0xff]
  %v608 = vld [vmem:[%s1 + $0x1030] sm:$0xff]
  %v609 = vld [vmem:[%s1 + $0x1038] sm:$0xff]
  %v610 = vld [vmem:[%s1 + $0x1040] sm:$0xff]
  %v611 = vld [vmem:[%s1 + $0x1048] sm:$0xff]
  %v612 = vld [vmem:[%s1 + $0x1050] sm:$0xff]
  %v613 = vld [vmem:[%s1 + $0x1058] sm:$0xff]
  %v614 = vld [vmem:[%s1 + $0x1060] sm:$0xff]
  %v615 = vld [vmem:[%s1 + $0x1068] sm:$0xff]
  %v616 = vld [vmem:[%s1 + $0x1070] sm:$0xff]
  %v617 = vld [vmem:[%s1 + $0x1078] sm:$0xff]
  %v618 = vld [vmem:[%s1 + $0x1080] sm:$0xff]
  %v619 = vld [vmem:[%s1 + $0x1088] sm:$0xff]
  %v620 = vld [vmem:[%s1 + $0x1090] sm:$0xff]
  %v621 = vld [vmem:[%s1 + $0x1098] sm:$0xff]
  %v622 = vld [vmem:[%s1 + $0x10a0] sm:$0xff]
  %v623 = vld [vmem:[%s1 + $0x10a8] sm:$0xff]
  %v624 = vld [vmem:[%s1 + $0x10b0] sm:$0xff]
  %v625 = vld [vmem:[%s1 + $0x10b8] sm:$0xff]
  %v626 = vld [vmem:[%s1 + $0x10c0] sm:$0xff]
  %v627 = vld [vmem:[%s1 + $0x10c8] sm:$0xff]
  %v628 = vld [vmem:[%s1 + $0x10d0] sm:$0xff]
  %v629 = vld [vmem:[%s1 + $0x10d8] sm:$0xff]
  %v630 = vld [vmem:[%s1 + $0x10e0] sm:$0xff]
  %v631 = vld [vmem:[%s1 + $0x10e8] sm:$0xff]
  %v632 = vld [vmem:[%s1 + $0x10f0] sm:$0xff]
  %v633 = vld [vmem:[%s1 + $0x10f8] sm:$0xff]
  %v634 = vld [vmem:[%s1 + $0x1100] sm:$0xff]
  %v635 = vld [vmem:[%s1 + $0x1108] sm:$0xff]
  %v636 = vld [vmem:[%s1 + $0x1110] sm:$0xff]
  %v637 = vld [vmem:[%s1 + $0x1118] sm:$0xff]
  %v638 = vld [vmem:[%s1 + $0x1120] sm:$0xff]
  %v639 = vld [vmem:[%s1 + $0x1128] sm:$0xff]
  %v640 = vld [vmem:[%s1 + $0x1130] sm:$0xff]
  %v641 = vld [vmem:[%s1 + $0x1138] sm:$0xff]
  %v642 = vld [vmem:[%s1 + $0x1140] sm:$0xff]
  %v643 = vld [vmem:[%s1 + $0x1148] sm:$0xff]
  %v644 = vld [vmem:[%s1 + $0x1150] sm:$0xff]
  %v645 = vld [vmem:[%s1 + $0x1158] sm:$0xff]
  %v646 = vld [vmem:[%s1 + $0x1160] sm:$0xff]
  %v647 = vld [vmem:[%s1 + $0x1168] sm:$0xff]
  %v648 = vld [vmem:[%s1 + $0x1170] sm:$0xff]
  %v649 = vld [vmem:[%s1 + $0x1178] sm:$0xff]
  %v650 = vld [vmem:[%s1 + $0x1180] sm:$0xff]
  %v651 = vld [vmem:[%s1 + $0x1188] sm:$0xff]
  %v652 = vld [vmem:[%s1 + $0x1190] sm:$0xff]
  %v653 = vld [vmem:[%s1 + $0x1198] sm:$0xff]
  %v654 = vld [vmem:[%s1 + $0x11a0] sm:$0xff]
  %v655 = vld [vmem:[%s1 + $0x11a8] sm:$0xff]
  %v656 = vld [vmem:[%s1 + $0x11b0] sm:$0xff]
  %v657 = vld [vmem:[%s1 + $0x11b8] sm:$0xff]
  %v658 = vld [vmem:[%s1 + $0x11c0] sm:$0xff]
  %v659 = vld [vmem:[%s1 + $0x11c8] sm:$0xff]
  %v660 = vld [vmem:[%s1 + $0x11d0] sm:$0xff]
  %v661 = vld [vmem:[%s1 + $0x11d8] sm:$0xff]
  %v662 = vld [vmem:[%s1 + $0x11e0] sm:$0xff]
  %v663 = vld [vmem:[%s1 + $0x11e8] sm:$0xff]
  %v664 = vld [vmem:[%s1 + $0x11f0] sm:$0xff]
  %v665 = vld [vmem:[%s1 + $0x11f8] sm:$0xff]
  %v669 = vcombine.high %v87, %v87
  %v671 = vunpack.c.l.s4 1983009808
  %v672 = vunpack.c.0.s8 %v671
  %v673 = vlaneseq
  %v674 = vshrl.u32 %v673, 7
  %v675 = vsub.s32 %v672, %v674
  %v676 = vrot.slane %v87, %v675
  %v678 = vunpack.c.l.s4 1983009808
  %v679 = vunpack.c.0.s8 %v678
  %v680 = vlaneseq
  %v681 = vshrl.u32 %v680, 7
  %v682 = vsub.s32 %v679, %v681
  %v683 = vrot.slane %v669, %v682
  %v684 = vcombine.high %v676, %v676
  %v685 = vcombine.high %v683, %v683
  %v686 = vcombine.high %v88, %v88
  %v688 = vunpack.c.l.s4 1983009808
  %v689 = vunpack.c.0.s8 %v688
  %v690 = vlaneseq
  %v691 = vshrl.u32 %v690, 7
  %v692 = vsub.s32 %v689, %v691
  %v693 = vrot.slane %v88, %v692
  %v695 = vunpack.c.l.s4 1983009808
  %v696 = vunpack.c.0.s8 %v695
  %v697 = vlaneseq
  %v698 = vshrl.u32 %v697, 7
  %v699 = vsub.s32 %v696, %v698
  %v700 = vrot.slane %v686, %v699
  %v701 = vcombine.high %v693, %v693
  %v702 = vcombine.high %v700, %v700
  %v704 = vunpack.c.l.s4 1983009808
  %v705 = vunpack.c.0.s8 %v704
  %v706 = vlaneseq
  %v707 = vshrl.u32 %v706, 7
  %v708 = vsub.s32 %v705, %v707
  %v709 = vrot.slane %v89, %v708
  %v719 = vpack.c.bf16 %v676, %v676
  %v720 = vpack.c.bf16 %v684, %v684
  %v721 = vpack.c.bf16 %v683, %v683
  %v722 = vpack.c.bf16 %v685, %v685
  %v723 = vpack.c.bf16 %v693, %v693
  %v724 = vpack.c.bf16 %v701, %v701
  %v725 = vpack.c.bf16 %v700, %v700
  %v726 = vpack.c.bf16 %v702, %v702
  %v727 = vpack.c.bf16 %v709, %v709
  %v728 = vpack.c.bf16 %v94, %v90
  %v729 = vpack.c.bf16 %v95, %v91
  %v730 = vpack.c.bf16 %v96, %v92
  %v731 = vpack.c.bf16 %v97, %v93
  %v732 = vpack.c.bf16 %v102, %v98
  %v733 = vpack.c.bf16 %v103, %v99
  %v734 = vpack.c.bf16 %v104, %v100
  %v735 = vpack.c.bf16 %v105, %v101
  %v736 = vpack.c.bf16 %v110, %v106
  %v737 = vpack.c.bf16 %v111, %v107
  %v738 = vpack.c.bf16 %v112, %v108
  %v739 = vpack.c.bf16 %v113, %v109
  %v740 = vpack.c.bf16 %v118, %v114
  %v741 = vpack.c.bf16 %v119, %v115
  %v742 = vpack.c.bf16 %v120, %v116
  %v743 = vpack.c.bf16 %v121, %v117
  %v744 = vpack.c.bf16 %v126, %v122
  %v745 = vpack.c.bf16 %v127, %v123
  %v746 = vpack.c.bf16 %v128, %v124
  %v747 = vpack.c.bf16 %v129, %v125
  %v748 = vpack.c.bf16 %v134, %v130
  %v749 = vpack.c.bf16 %v135, %v131
  %v750 = vpack.c.bf16 %v136, %v132
  %v751 = vpack.c.bf16 %v137, %v133
  %v752 = vpack.c.bf16 %v142, %v138
  %v753 = vpack.c.bf16 %v143, %v139
  %v754 = vpack.c.bf16 %v144, %v140
  %v755 = vpack.c.bf16 %v145, %v141
  %v756 = vpack.c.bf16 %v150, %v146
  %v757 = vpack.c.bf16 %v151, %v147
  %v758 = vpack.c.bf16 %v152, %v148
  %v759 = vpack.c.bf16 %v153, %v149
  %v760 = vpack.c.bf16 %v158, %v154
  %v761 = vpack.c.bf16 %v159, %v155
  %v762 = vpack.c.bf16 %v160, %v156
  %v763 = vpack.c.bf16 %v161, %v157
  %v764 = vpack.c.bf16 %v166, %v162
  %v765 = vpack.c.bf16 %v167, %v163
  %v766 = vpack.c.bf16 %v168, %v164
  %v767 = vpack.c.bf16 %v169, %v165
  %v768 = vpack.c.bf16 %v174, %v170
  %v769 = vpack.c.bf16 %v175, %v171
  %v770 = vpack.c.bf16 %v176, %v172
  %v771 = vpack.c.bf16 %v177, %v173
  %v772 = vpack.c.bf16 %v182, %v178
  %v773 = vpack.c.bf16 %v183, %v179
  %v774 = vpack.c.bf16 %v184, %v180
  %v775 = vpack.c.bf16 %v185, %v181
  %v776 = vpack.c.bf16 %v190, %v186
  %v777 = vpack.c.bf16 %v191, %v187
  %v778 = vpack.c.bf16 %v192, %v188
  %v779 = vpack.c.bf16 %v193, %v189
  %v780 = vpack.c.bf16 %v198, %v194
  %v781 = vpack.c.bf16 %v199, %v195
  %v782 = vpack.c.bf16 %v200, %v196
  %v783 = vpack.c.bf16 %v201, %v197
  %v784 = vpack.c.bf16 %v206, %v202
  %v785 = vpack.c.bf16 %v207, %v203
  %v786 = vpack.c.bf16 %v208, %v204
  %v787 = vpack.c.bf16 %v209, %v205
  %v788 = vpack.c.bf16 %v214, %v210
  %v789 = vpack.c.bf16 %v215, %v211
  %v790 = vpack.c.bf16 %v216, %v212
  %v791 = vpack.c.bf16 %v217, %v213
  %v792 = vpack.c.bf16 %v222, %v218
  %v793 = vpack.c.bf16 %v223, %v219
  %v794 = vpack.c.bf16 %v224, %v220
  %v795 = vpack.c.bf16 %v225, %v221
  %v796 = vpack.c.bf16 %v230, %v226
  %v797 = vpack.c.bf16 %v231, %v227
  %v798 = vpack.c.bf16 %v232, %v228
  %v799 = vpack.c.bf16 %v233, %v229
  %v800 = vpack.c.bf16 %v238, %v234
  %v801 = vpack.c.bf16 %v239, %v235
  %v802 = vpack.c.bf16 %v240, %v236
  %v803 = vpack.c.bf16 %v241, %v237
  %v804 = vpack.c.bf16 %v246, %v242
  %v805 = vpack.c.bf16 %v247, %v243
  %v806 = vpack.c.bf16 %v248, %v244
  %v807 = vpack.c.bf16 %v249, %v245
  %v808 = vpack.c.bf16 %v254, %v250
  %v809 = vpack.c.bf16 %v255, %v251
  %v810 = vpack.c.bf16 %v256, %v252
  %v811 = vpack.c.bf16 %v257, %v253
  %v812 = vpack.c.bf16 %v262, %v258
  %v813 = vpack.c.bf16 %v263, %v259
  %v814 = vpack.c.bf16 %v264, %v260
  %v815 = vpack.c.bf16 %v265, %v261
  %v816 = vpack.c.bf16 %v270, %v266
  %v817 = vpack.c.bf16 %v271, %v267
  %v818 = vpack.c.bf16 %v272, %v268
  %v819 = vpack.c.bf16 %v273, %v269
  %v820 = vpack.c.bf16 %v278, %v274
  %v821 = vpack.c.bf16 %v279, %v275
  %v822 = vpack.c.bf16 %v280, %v276
  %v823 = vpack.c.bf16 %v281, %v277
  %v824 = vpack.c.bf16 %v286, %v282
  %v825 = vpack.c.bf16 %v287, %v283
  %v826 = vpack.c.bf16 %v288, %v284
  %v827 = vpack.c.bf16 %v289, %v285
  %v828 = vpack.c.bf16 %v294, %v290
  %v829 = vpack.c.bf16 %v295, %v291
  %v830 = vpack.c.bf16 %v296, %v292
  %v831 = vpack.c.bf16 %v297, %v293
  %v832 = vpack.c.bf16 %v302, %v298
  %v833 = vpack.c.bf16 %v303, %v299
  %v834 = vpack.c.bf16 %v304, %v300
  %v835 = vpack.c.bf16 %v305, %v301
  %v836 = vpack.c.bf16 %v310, %v306
  %v837 = vpack.c.bf16 %v311, %v307
  %v838 = vpack.c.bf16 %v312, %v308
  %v839 = vpack.c.bf16 %v313, %v309
  %v840 = vpack.c.bf16 %v318, %v314
  %v841 = vpack.c.bf16 %v319, %v315
  %v842 = vpack.c.bf16 %v320, %v316
  %v843 = vpack.c.bf16 %v321, %v317
  %v844 = vpack.c.bf16 %v326, %v322
  %v845 = vpack.c.bf16 %v327, %v323
  %v846 = vpack.c.bf16 %v328, %v324
  %v847 = vpack.c.bf16 %v329, %v325
  %v848 = vpack.c.bf16 %v334, %v330
  %v849 = vpack.c.bf16 %v335, %v331
  %v850 = vpack.c.bf16 %v336, %v332
  %v851 = vpack.c.bf16 %v337, %v333
  %v852 = vpack.c.bf16 %v342, %v338
  %v853 = vpack.c.bf16 %v343, %v339
  %v854 = vpack.c.bf16 %v344, %v340
  %v855 = vpack.c.bf16 %v345, %v341
  %v856 = vpack.c.bf16 %v350, %v346
  %v857 = vpack.c.bf16 %v351, %v347
  %v858 = vpack.c.bf16 %v352, %v348
  %v859 = vpack.c.bf16 %v353, %v349
  %v860 = vpack.c.bf16 %v358, %v354
  %v861 = vpack.c.bf16 %v359, %v355
  %v862 = vpack.c.bf16 %v360, %v356
  %v863 = vpack.c.bf16 %v361, %v357
  %v864 = vpack.c.bf16 %v366, %v362
  %v865 = vpack.c.bf16 %v367, %v363
  %v866 = vpack.c.bf16 %v368, %v364
  %v867 = vpack.c.bf16 %v369, %v365
  %v868 = vpack.c.bf16 %v374, %v370
  %v869 = vpack.c.bf16 %v375, %v371
  %v870 = vpack.c.bf16 %v376, %v372
  %v871 = vpack.c.bf16 %v377, %v373
  %v872 = vpack.c.bf16 %v382, %v378
  %v873 = vpack.c.bf16 %v383, %v379
  %v874 = vpack.c.bf16 %v384, %v380
  %v875 = vpack.c.bf16 %v385, %v381
  %v876 = vpack.c.bf16 %v390, %v386
  %v877 = vpack.c.bf16 %v391, %v387
  %v878 = vpack.c.bf16 %v392, %v388
  %v879 = vpack.c.bf16 %v393, %v389
  %v880 = vpack.c.bf16 %v398, %v394
  %v881 = vpack.c.bf16 %v399, %v395
  %v882 = vpack.c.bf16 %v400, %v396
  %v883 = vpack.c.bf16 %v401, %v397
  %v884 = vpack.c.bf16 %v406, %v402
  %v885 = vpack.c.bf16 %v407, %v403
  %v886 = vpack.c.bf16 %v408, %v404
  %v887 = vpack.c.bf16 %v409, %v405
  %v888 = vpack.c.bf16 %v414, %v410
  %v889 = vpack.c.bf16 %v415, %v411
  %v890 = vpack.c.bf16 %v416, %v412
  %v891 = vpack.c.bf16 %v417, %v413
  %v892 = vpack.c.bf16 %v422, %v418
  %v893 = vpack.c.bf16 %v423, %v419
  %v894 = vpack.c.bf16 %v424, %v420
  %v895 = vpack.c.bf16 %v425, %v421
  %v896 = vpack.c.bf16 %v430, %v426
  %v897 = vpack.c.bf16 %v431, %v427
  %v898 = vpack.c.bf16 %v432, %v428
  %v899 = vpack.c.bf16 %v433, %v429
  %v900 = vpack.c.bf16 %v438, %v434
  %v901 = vpack.c.bf16 %v439, %v435
  %v902 = vpack.c.bf16 %v440, %v436
  %v903 = vpack.c.bf16 %v441, %v437
  %v904 = vpack.c.bf16 %v446, %v442
  %v905 = vpack.c.bf16 %v447, %v443
  %v906 = vpack.c.bf16 %v448, %v444
  %v907 = vpack.c.bf16 %v449, %v445
  %v908 = vpack.c.bf16 %v454, %v450
  %v909 = vpack.c.bf16 %v455, %v451
  %v910 = vpack.c.bf16 %v456, %v452
  %v911 = vpack.c.bf16 %v457, %v453
  %v912 = vpack.c.bf16 %v462, %v458
  %v913 = vpack.c.bf16 %v463, %v459
  %v914 = vpack.c.bf16 %v464, %v460
  %v915 = vpack.c.bf16 %v465, %v461
  %v916 = vpack.c.bf16 %v470, %v466
  %v917 = vpack.c.bf16 %v471, %v467
  %v918 = vpack.c.bf16 %v472, %v468
  %v919 = vpack.c.bf16 %v473, %v469
  %v920 = vpack.c.bf16 %v478, %v474
  %v921 = vpack.c.bf16 %v479, %v475
  %v922 = vpack.c.bf16 %v480, %v476
  %v923 = vpack.c.bf16 %v481, %v477
  %v924 = vpack.c.bf16 %v486, %v482
  %v925 = vpack.c.bf16 %v487, %v483
  %v926 = vpack.c.bf16 %v488, %v484
  %v927 = vpack.c.bf16 %v489, %v485
  %v928 = vpack.c.bf16 %v494, %v490
  %v929 = vpack.c.bf16 %v495, %v491
  %v930 = vpack.c.bf16 %v496, %v492
  %v931 = vpack.c.bf16 %v497, %v493
  %v932 = vpack.c.bf16 %v502, %v498
  %v933 = vpack.c.bf16 %v503, %v499
  %v934 = vpack.c.bf16 %v504, %v500
  %v935 = vpack.c.bf16 %v505, %v501
  %v936 = vpack.c.bf16 %v510, %v506
  %v937 = vpack.c.bf16 %v511, %v507
  %v938 = vpack.c.bf16 %v512, %v508
  %v939 = vpack.c.bf16 %v513, %v509
  %v940 = vpack.c.bf16 %v518, %v514
  %v941 = vpack.c.bf16 %v519, %v515
  %v942 = vpack.c.bf16 %v520, %v516
  %v943 = vpack.c.bf16 %v521, %v517
  %v944 = vpack.c.bf16 %v526, %v522
  %v945 = vpack.c.bf16 %v527, %v523
  %v946 = vpack.c.bf16 %v528, %v524
  %v947 = vpack.c.bf16 %v529, %v525
  %v948 = vpack.c.bf16 %v534, %v530
  %v949 = vpack.c.bf16 %v535, %v531
  %v950 = vpack.c.bf16 %v536, %v532
  %v951 = vpack.c.bf16 %v537, %v533
  %v952 = vpack.c.bf16 %v542, %v538
  %v953 = vpack.c.bf16 %v543, %v539
  %v954 = vpack.c.bf16 %v544, %v540
  %v955 = vpack.c.bf16 %v545, %v541
  %v956 = vpack.c.bf16 %v550, %v546
  %v957 = vpack.c.bf16 %v551, %v547
  %v958 = vpack.c.bf16 %v552, %v548
  %v959 = vpack.c.bf16 %v553, %v549
  %v960 = vpack.c.bf16 %v558, %v554
  %v961 = vpack.c.bf16 %v559, %v555
  %v962 = vpack.c.bf16 %v560, %v556
  %v963 = vpack.c.bf16 %v561, %v557
  %v964 = vpack.c.bf16 %v566, %v562
  %v965 = vpack.c.bf16 %v567, %v563
  %v966 = vpack.c.bf16 %v568, %v564
  %v967 = vpack.c.bf16 %v569, %v565
  %v968 = vpack.c.bf16 %v574, %v570
  %v969 = vpack.c.bf16 %v575, %v571
  %v970 = vpack.c.bf16 %v576, %v572
  %v971 = vpack.c.bf16 %v577, %v573
  %v972 = vpack.c.bf16 %v582, %v578
  %v973 = vpack.c.bf16 %v583, %v579
  %v974 = vpack.c.bf16 %v584, %v580
  %v975 = vpack.c.bf16 %v585, %v581
  %v976 = vpack.c.bf16 %v590, %v586
  %v977 = vpack.c.bf16 %v591, %v587
  %v978 = vpack.c.bf16 %v592, %v588
  %v979 = vpack.c.bf16 %v593, %v589
  %v980 = vpack.c.bf16 %v598, %v594
  %v981 = vpack.c.bf16 %v599, %v595
  %v982 = vpack.c.bf16 %v600, %v596
  %v983 = vpack.c.bf16 %v601, %v597
  %v984 = vpack.c.bf16 %v606, %v602
  %v985 = vpack.c.bf16 %v607, %v603
  %v986 = vpack.c.bf16 %v608, %v604
  %v987 = vpack.c.bf16 %v609, %v605
  %v988 = vpack.c.bf16 %v614, %v610
  %v989 = vpack.c.bf16 %v615, %v611
  %v990 = vpack.c.bf16 %v616, %v612
  %v991 = vpack.c.bf16 %v617, %v613
  %v992 = vpack.c.bf16 %v622, %v618
  %v993 = vpack.c.bf16 %v623, %v619
  %v994 = vpack.c.bf16 %v624, %v620
  %v995 = vpack.c.bf16 %v625, %v621
  %v996 = vpack.c.bf16 %v630, %v626
  %v997 = vpack.c.bf16 %v631, %v627
  %v998 = vpack.c.bf16 %v632, %v628
  %v999 = vpack.c.bf16 %v633, %v629
  %v1000 = vpack.c.bf16 %v638, %v634
  %v1001 = vpack.c.bf16 %v639, %v635
  %v1002 = vpack.c.bf16 %v640, %v636
  %v1003 = vpack.c.bf16 %v641, %v637
  %v1004 = vpack.c.bf16 %v646, %v642
  %v1005 = vpack.c.bf16 %v647, %v643
  %v1006 = vpack.c.bf16 %v648, %v644
  %v1007 = vpack.c.bf16 %v649, %v645
  %v1008 = vpack.c.bf16 %v654, %v650
  %v1009 = vpack.c.bf16 %v655, %v651
  %v1010 = vpack.c.bf16 %v656, %v652
  %v1011 = vpack.c.bf16 %v657, %v653
  %v1012 = vpack.c.bf16 %v662, %v658
  %v1013 = vpack.c.bf16 %v663, %v659
  %v1014 = vpack.c.bf16 %v664, %v660
  %v1015 = vpack.c.bf16 %v665, %v661
  %v1016 = vld [vmem:[%s2] sm:$0xf]
  %v1018 = vlaneseq
  %v1019 = vshrl.u32 %v1018, 7
  %v1020 = vsub.s32 0, %v1019
  %v1021 = vrot.slane %v1016, %v1020
  %v1022 = vlaneseq
  %v1023 = vshrl.u32 %v1022, 7
  %v1024 = vsub.s32 1, %v1023
  %v1025 = vrot.slane %v1016, %v1024
  %v1026 = vlaneseq
  %v1027 = vshrl.u32 %v1026, 7
  %v1028 = vsub.s32 2, %v1027
  %v1029 = vrot.slane %v1016, %v1028
  %v1030 = vlaneseq
  %v1031 = vshrl.u32 %v1030, 7
  %v1032 = vsub.s32 3, %v1031
  %v1033 = vrot.slane %v1016, %v1032
  %1038 = vmatprep.subr.bf16.mxu0 %v729
  %1039 = vmatpush1.bf16.msra.mxu0 %v728
  %1040 = vmatprep.subr.bf16.mxu0 %v733
  %1041 = vmatpush1.bf16.msra.mxu0 %v732
  %1042 = vmatprep.subr.bf16.mxu0 %v737
  %1043 = vmatpush1.bf16.msra.mxu0 %v736
  %1044 = vmatprep.subr.bf16.mxu0 %v741
  %1045 = vmatpush1.bf16.msra.mxu0 %v740
  %1046 = vmatprep.subr.bf16.mxu0 %v745
  %1047 = vmatpush1.bf16.msra.mxu0 %v744
  %1048 = vmatprep.subr.bf16.mxu0 %v749
  %1049 = vmatpush1.bf16.msra.mxu0 %v748
  %1050 = vmatprep.subr.bf16.mxu0 %v753
  %1051 = vmatpush1.bf16.msra.mxu0 %v752
  %1052 = vmatprep.subr.bf16.mxu0 %v757
  %1053 = vmatpush1.bf16.msra.mxu0 %v756
  %1054 = vmatprep.subr.bf16.mxu0 %v761
  %1055 = vmatpush1.bf16.msra.mxu0 %v760
  %1056 = vmatprep.subr.bf16.mxu0 %v765
  %1057 = vmatpush1.bf16.msra.mxu0 %v764
  %1058 = vmatprep.subr.bf16.mxu0 %v769
  %1059 = vmatpush1.bf16.msra.mxu0 %v768
  %1060 = vmatprep.subr.bf16.mxu0 %v773
  %1061 = vmatpush1.bf16.msra.mxu0 %v772
  %1062 = vmatprep.subr.bf16.mxu0 %v777
  %1063 = vmatpush1.bf16.msra.mxu0 %v776
  %1064 = vmatprep.subr.bf16.mxu0 %v781
  %1065 = vmatpush1.bf16.msra.mxu0 %v780
  %1066 = vmatprep.subr.bf16.mxu0 %v785
  %1067 = vmatpush1.bf16.msra.mxu0 %v784
  %1068 = vmatprep.subr.bf16.mxu0 %v789
  %1069 = vmatpush1.bf16.msra.mxu0 %v788
  %1070 = vmatprep.mubr.bf16.mxu0 %v720
  %1071 = vmatmul.mubr.bf16.gmra.mrb[0].mxu0 %v719
  %v1072 = vpop.f32.mrb[0].mxu0
  %v1073 = vadd.f32 %v1021, %v1072
  %v1074 = vpop.f32.mrb[0].mxu0
  %v1075 = vadd.f32 %v1025, %v1074
  %v1076 = vpop.f32.mrb[0].mxu0
  %v1077 = vpop.f32.mrb[0].mxu0
  %1078 = vdwg.mxu0
  %1079 = vmatprep.subr.bf16.mxu0 %v793
  %1080 = vmatpush1.bf16.msra.mxu0 %v792
  %1081 = vmatprep.subr.bf16.mxu0 %v797
  %1082 = vmatpush1.bf16.msra.mxu0 %v796
  %1083 = vmatprep.subr.bf16.mxu0 %v801
  %1084 = vmatpush1.bf16.msra.mxu0 %v800
  %1085 = vmatprep.subr.bf16.mxu0 %v805
  %1086 = vmatpush1.bf16.msra.mxu0 %v804
  %1087 = vmatprep.subr.bf16.mxu0 %v809
  %1088 = vmatpush1.bf16.msra.mxu0 %v808
  %1089 = vmatprep.subr.bf16.mxu0 %v813
  %1090 = vmatpush1.bf16.msra.mxu0 %v812
  %1091 = vmatprep.subr.bf16.mxu0 %v817
  %1092 = vmatpush1.bf16.msra.mxu0 %v816
  %1093 = vmatprep.subr.bf16.mxu0 %v821
  %1094 = vmatpush1.bf16.msra.mxu0 %v820
  %1095 = vmatprep.subr.bf16.mxu0 %v825
  %1096 = vmatpush1.bf16.msra.mxu0 %v824
  %1097 = vmatprep.subr.bf16.mxu0 %v829
  %1098 = vmatpush1.bf16.msra.mxu0 %v828
  %1099 = vmatprep.subr.bf16.mxu0 %v833
  %1100 = vmatpush1.bf16.msra.mxu0 %v832
  %1101 = vmatprep.subr.bf16.mxu0 %v837
  %1102 = vmatpush1.bf16.msra.mxu0 %v836
  %1103 = vmatprep.subr.bf16.mxu0 %v841
  %1104 = vmatpush1.bf16.msra.mxu0 %v840
  %1105 = vmatprep.subr.bf16.mxu0 %v845
  %1106 = vmatpush1.bf16.msra.mxu0 %v844
  %1107 = vmatprep.subr.bf16.mxu0 %v849
  %1108 = vmatpush1.bf16.msra.mxu0 %v848
  %1109 = vmatprep.subr.bf16.mxu0 %v853
  %1110 = vmatpush1.bf16.msra.mxu0 %v852
  %1111 = vmatprep.mubr.bf16.mxu0 %v722
  %1112 = vmatmul.mubr.bf16.gmra.mrb[0].mxu0 %v721
  %v1113 = vpop.f32.mrb[0].mxu0
  %v1114 = vadd.f32 %v1073, %v1113
  %v1115 = vpop.f32.mrb[0].mxu0
  %v1116 = vadd.f32 %v1075, %v1115
  %v1117 = vpop.f32.mrb[0].mxu0
  %v1118 = vpop.f32.mrb[0].mxu0
  %1119 = vdwg.mxu0
  %1120 = vmatprep.subr.bf16.mxu0 %v857
  %1121 = vmatpush1.bf16.msra.mxu0 %v856
  %1122 = vmatprep.subr.bf16.mxu0 %v861
  %1123 = vmatpush1.bf16.msra.mxu0 %v860
  %1124 = vmatprep.subr.bf16.mxu0 %v865
  %1125 = vmatpush1.bf16.msra.mxu0 %v864
  %1126 = vmatprep.subr.bf16.mxu0 %v869
  %1127 = vmatpush1.bf16.msra.mxu0 %v868
  %1128 = vmatprep.subr.bf16.mxu0 %v873
  %1129 = vmatpush1.bf16.msra.mxu0 %v872
  %1130 = vmatprep.subr.bf16.mxu0 %v877
  %1131 = vmatpush1.bf16.msra.mxu0 %v876
  %1132 = vmatprep.subr.bf16.mxu0 %v881
  %1133 = vmatpush1.bf16.msra.mxu0 %v880
  %1134 = vmatprep.subr.bf16.mxu0 %v885
  %1135 = vmatpush1.bf16.msra.mxu0 %v884
  %1136 = vmatprep.subr.bf16.mxu0 %v889
  %1137 = vmatpush1.bf16.msra.mxu0 %v888
  %1138 = vmatprep.subr.bf16.mxu0 %v893
  %1139 = vmatpush1.bf16.msra.mxu0 %v892
  %1140 = vmatprep.subr.bf16.mxu0 %v897
  %1141 = vmatpush1.bf16.msra.mxu0 %v896
  %1142 = vmatprep.subr.bf16.mxu0 %v901
  %1143 = vmatpush1.bf16.msra.mxu0 %v900
  %1144 = vmatprep.subr.bf16.mxu0 %v905
  %1145 = vmatpush1.bf16.msra.mxu0 %v904
  %1146 = vmatprep.subr.bf16.mxu0 %v909
  %1147 = vmatpush1.bf16.msra.mxu0 %v908
  %1148 = vmatprep.subr.bf16.mxu0 %v913
  %1149 = vmatpush1.bf16.msra.mxu0 %v912
  %1150 = vmatprep.subr.bf16.mxu0 %v917
  %1151 = vmatpush1.bf16.msra.mxu0 %v916
  %1152 = vmatprep.mubr.bf16.mxu0 %v724
  %1153 = vmatmul.mubr.bf16.gmra.mrb[0].mxu0 %v723
  %v1154 = vpop.f32.mrb[0].mxu0
  %v1155 = vadd.f32 %v1114, %v1154
  %v1156 = vpop.f32.mrb[0].mxu0
  %v1157 = vadd.f32 %v1116, %v1156
  %v1158 = vpop.f32.mrb[0].mxu0
  %v1159 = vpop.f32.mrb[0].mxu0
  %1160 = vdwg.mxu0
  %1161 = vmatprep.subr.bf16.mxu0 %v921
  %1162 = vmatpush1.bf16.msra.mxu0 %v920
  %1163 = vmatprep.subr.bf16.mxu0 %v925
  %1164 = vmatpush1.bf16.msra.mxu0 %v924
  %1165 = vmatprep.subr.bf16.mxu0 %v929
  %1166 = vmatpush1.bf16.msra.mxu0 %v928
  %1167 = vmatprep.subr.bf16.mxu0 %v933
  %1168 = vmatpush1.bf16.msra.mxu0 %v932
  %1169 = vmatprep.subr.bf16.mxu0 %v937
  %1170 = vmatpush1.bf16.msra.mxu0 %v936
  %1171 = vmatprep.subr.bf16.mxu0 %v941
  %1172 = vmatpush1.bf16.msra.mxu0 %v940
  %1173 = vmatprep.subr.bf16.mxu0 %v945
  %1174 = vmatpush1.bf16.msra.mxu0 %v944
  %1175 = vmatprep.subr.bf16.mxu0 %v949
  %1176 = vmatpush1.bf16.msra.mxu0 %v948
  %1177 = vmatprep.subr.bf16.mxu0 %v953
  %1178 = vmatpush1.bf16.msra.mxu0 %v952
  %1179 = vmatprep.subr.bf16.mxu0 %v957
  %1180 = vmatpush1.bf16.msra.mxu0 %v956
  %1181 = vmatprep.subr.bf16.mxu0 %v961
  %1182 = vmatpush1.bf16.msra.mxu0 %v960
  %1183 = vmatprep.subr.bf16.mxu0 %v965
  %1184 = vmatpush1.bf16.msra.mxu0 %v964
  %1185 = vmatprep.subr.bf16.mxu0 %v969
  %1186 = vmatpush1.bf16.msra.mxu0 %v968
  %1187 = vmatprep.subr.bf16.mxu0 %v973
  %1188 = vmatpush1.bf16.msra.mxu0 %v972
  %1189 = vmatprep.subr.bf16.mxu0 %v977
  %1190 = vmatpush1.bf16.msra.mxu0 %v976
  %1191 = vmatprep.subr.bf16.mxu0 %v981
  %1192 = vmatpush1.bf16.msra.mxu0 %v980
  %1193 = vmatprep.mubr.bf16.mxu0 %v726
  %1194 = vmatmul.mubr.bf16.gmra.mrb[0].mxu0 %v725
  %v1195 = vpop.f32.mrb[0].mxu0
  %v1196 = vadd.f32 %v1155, %v1195
  %v1197 = vpop.f32.mrb[0].mxu0
  %v1198 = vadd.f32 %v1157, %v1197
  %v1199 = vpop.f32.mrb[0].mxu0
  %v1200 = vpop.f32.mrb[0].mxu0
  %1201 = vdwg.mxu0
  %1202 = vmatprep.subr.bf16.mxu0 %v985
  %1203 = vmatpush1.bf16.msra.mxu0 %v984
  %1204 = vmatprep.subr.bf16.mxu0 %v989
  %1205 = vmatpush1.bf16.msra.mxu0 %v988
  %1206 = vmatprep.subr.bf16.mxu0 %v993
  %1207 = vmatpush1.bf16.msra.mxu0 %v992
  %1208 = vmatprep.subr.bf16.mxu0 %v997
  %1209 = vmatpush1.bf16.msra.mxu0 %v996
  %1210 = vmatprep.subr.bf16.mxu0 %v1001
  %1211 = vmatpush1.bf16.msra.mxu0 %v1000
  %1212 = vmatprep.subr.bf16.mxu0 %v1005
  %1213 = vmatpush1.bf16.msra.mxu0 %v1004
  %1214 = vmatprep.subr.bf16.mxu0 %v1009
  %1215 = vmatpush1.bf16.msra.mxu0 %v1008
  %1216 = vmatprep.subr.bf16.mxu0 %v1013
  %1217 = vmatpush1.bf16.msra.mxu0 %v1012
  %1218 = vmatprep.subr.bf16.mxu0 0
  %1219 = vmatpush1.bf16.msra.mxu0 0
  %1220 = vmatprep.subr.bf16.mxu0 0
  %1221 = vmatpush1.bf16.msra.mxu0 0
  %1222 = vmatprep.subr.bf16.mxu0 0
  %1223 = vmatpush1.bf16.msra.mxu0 0
  %1224 = vmatprep.subr.bf16.mxu0 0
  %1225 = vmatpush1.bf16.msra.mxu0 0
  %1226 = vmatprep.subr.bf16.mxu0 0
  %1227 = vmatpush1.bf16.msra.mxu0 0
  %1228 = vmatprep.subr.bf16.mxu0 0
  %1229 = vmatpush1.bf16.msra.mxu0 0
  %1230 = vmatprep.subr.bf16.mxu0 0
  %1231 = vmatpush1.bf16.msra.mxu0 0
  %1232 = vmatprep.subr.bf16.mxu0 0
  %1233 = vmatpush1.bf16.msra.mxu0 0
  %1234 = vmatprep.mubr.bf16.mxu0 0
  %1235 = vmatmul.mubr.bf16.gmra.mrb[0].mxu0 %v727
  %v1236 = vpop.f32.mrb[0].mxu0
  %v1237 = vadd.f32 %v1196, %v1236
  %v1238 = vpop.f32.mrb[0].mxu0
  %v1239 = vadd.f32 %v1198, %v1238
  %v1240 = vpop.f32.mrb[0].mxu0
  %v1241 = vpop.f32.mrb[0].mxu0
  %1242 = vdwg.mxu0
  %1243 = vmatprep.subr.bf16.mxu0 %v731
  %1244 = vmatpush1.bf16.msra.mxu0 %v730
  %1245 = vmatprep.subr.bf16.mxu0 %v735
  %1246 = vmatpush1.bf16.msra.mxu0 %v734
  %1247 = vmatprep.subr.bf16.mxu0 %v739
  %1248 = vmatpush1.bf16.msra.mxu0 %v738
  %1249 = vmatprep.subr.bf16.mxu0 %v743
  %1250 = vmatpush1.bf16.msra.mxu0 %v742
  %1251 = vmatprep.subr.bf16.mxu0 %v747
  %1252 = vmatpush1.bf16.msra.mxu0 %v746
  %1253 = vmatprep.subr.bf16.mxu0 %v751
  %1254 = vmatpush1.bf16.msra.mxu0 %v750
  %1255 = vmatprep.subr.bf16.mxu0 %v755
  %1256 = vmatpush1.bf16.msra.mxu0 %v754
  %1257 = vmatprep.subr.bf16.mxu0 %v759
  %1258 = vmatpush1.bf16.msra.mxu0 %v758
  %1259 = vmatprep.subr.bf16.mxu0 %v763
  %1260 = vmatpush1.bf16.msra.mxu0 %v762
  %1261 = vmatprep.subr.bf16.mxu0 %v767
  %1262 = vmatpush1.bf16.msra.mxu0 %v766
  %1263 = vmatprep.subr.bf16.mxu0 %v771
  %1264 = vmatpush1.bf16.msra.mxu0 %v770
  %1265 = vmatprep.subr.bf16.mxu0 %v775
  %1266 = vmatpush1.bf16.msra.mxu0 %v774
  %1267 = vmatprep.subr.bf16.mxu0 %v779
  %1268 = vmatpush1.bf16.msra.mxu0 %v778
  %1269 = vmatprep.subr.bf16.mxu0 %v783
  %1270 = vmatpush1.bf16.msra.mxu0 %v782
  %1271 = vmatprep.subr.bf16.mxu0 %v787
  %1272 = vmatpush1.bf16.msra.mxu0 %v786
  %1273 = vmatprep.subr.bf16.mxu0 %v791
  %1274 = vmatpush1.bf16.msra.mxu0 %v790
  %1275 = vmatprep.mubr.bf16.mxu0 %v720
  %1276 = vmatmul.mubr.bf16.gmra.mrb[0].mxu0 %v719
  %v1277 = vpop.f32.mrb[0].mxu0
  %v1278 = vadd.f32 %v1029, %v1277
  %v1279 = vpop.f32.mrb[0].mxu0
  %v1280 = vadd.f32 %v1033, %v1279
  %v1281 = vpop.f32.mrb[0].mxu0
  %v1282 = vpop.f32.mrb[0].mxu0
  %1283 = vdwg.mxu0
  %1284 = vmatprep.subr.bf16.mxu0 %v795
  %1285 = vmatpush1.bf16.msra.mxu0 %v794
  %1286 = vmatprep.subr.bf16.mxu0 %v799
  %1287 = vmatpush1.bf16.msra.mxu0 %v798
  %1288 = vmatprep.subr.bf16.mxu0 %v803
  %1289 = vmatpush1.bf16.msra.mxu0 %v802
  %1290 = vmatprep.subr.bf16.mxu0 %v807
  %1291 = vmatpush1.bf16.msra.mxu0 %v806
  %1292 = vmatprep.subr.bf16.mxu0 %v811
  %1293 = vmatpush1.bf16.msra.mxu0 %v810
  %1294 = vmatprep.subr.bf16.mxu0 %v815
  %1295 = vmatpush1.bf16.msra.mxu0 %v814
  %1296 = vmatprep.subr.bf16.mxu0 %v819
  %1297 = vmatpush1.bf16.msra.mxu0 %v818
  %1298 = vmatprep.subr.bf16.mxu0 %v823
  %1299 = vmatpush1.bf16.msra.mxu0 %v822
  %1300 = vmatprep.subr.bf16.mxu0 %v827
  %1301 = vmatpush1.bf16.msra.mxu0 %v826
  %1302 = vmatprep.subr.bf16.mxu0 %v831
  %1303 = vmatpush1.bf16.msra.mxu0 %v830
  %1304 = vmatprep.subr.bf16.mxu0 %v835
  %1305 = vmatpush1.bf16.msra.mxu0 %v834
  %1306 = vmatprep.subr.bf16.mxu0 %v839
  %1307 = vmatpush1.bf16.msra.mxu0 %v838
  %1308 = vmatprep.subr.bf16.mxu0 %v843
  %1309 = vmatpush1.bf16.msra.mxu0 %v842
  %1310 = vmatprep.subr.bf16.mxu0 %v847
  %1311 = vmatpush1.bf16.msra.mxu0 %v846
  %1312 = vmatprep.subr.bf16.mxu0 %v851
  %1313 = vmatpush1.bf16.msra.mxu0 %v850
  %1314 = vmatprep.subr.bf16.mxu0 %v855
  %1315 = vmatpush1.bf16.msra.mxu0 %v854
  %1316 = vmatprep.mubr.bf16.mxu0 %v722
  %1317 = vmatmul.mubr.bf16.gmra.mrb[0].mxu0 %v721
  %v1318 = vpop.f32.mrb[0].mxu0
  %v1319 = vadd.f32 %v1278, %v1318
  %v1320 = vpop.f32.mrb[0].mxu0
  %v1321 = vadd.f32 %v1280, %v1320
  %v1322 = vpop.f32.mrb[0].mxu0
  %v1323 = vpop.f32.mrb[0].mxu0
  %1324 = vdwg.mxu0
  %1325 = vmatprep.subr.bf16.mxu0 %v859
  %1326 = vmatpush1.bf16.msra.mxu0 %v858
  %1327 = vmatprep.subr.bf16.mxu0 %v863
  %1328 = vmatpush1.bf16.msra.mxu0 %v862
  %1329 = vmatprep.subr.bf16.mxu0 %v867
  %1330 = vmatpush1.bf16.msra.mxu0 %v866
  %1331 = vmatprep.subr.bf16.mxu0 %v871
  %1332 = vmatpush1.bf16.msra.mxu0 %v870
  %1333 = vmatprep.subr.bf16.mxu0 %v875
  %1334 = vmatpush1.bf16.msra.mxu0 %v874
  %1335 = vmatprep.subr.bf16.mxu0 %v879
  %1336 = vmatpush1.bf16.msra.mxu0 %v878
  %1337 = vmatprep.subr.bf16.mxu0 %v883
  %1338 = vmatpush1.bf16.msra.mxu0 %v882
  %1339 = vmatprep.subr.bf16.mxu0 %v887
  %1340 = vmatpush1.bf16.msra.mxu0 %v886
  %1341 = vmatprep.subr.bf16.mxu0 %v891
  %1342 = vmatpush1.bf16.msra.mxu0 %v890
  %1343 = vmatprep.subr.bf16.mxu0 %v895
  %1344 = vmatpush1.bf16.msra.mxu0 %v894
  %1345 = vmatprep.subr.bf16.mxu0 %v899
  %1346 = vmatpush1.bf16.msra.mxu0 %v898
  %1347 = vmatprep.subr.bf16.mxu0 %v903
  %1348 = vmatpush1.bf16.msra.mxu0 %v902
  %1349 = vmatprep.subr.bf16.mxu0 %v907
  %1350 = vmatpush1.bf16.msra.mxu0 %v906
  %1351 = vmatprep.subr.bf16.mxu0 %v911
  %1352 = vmatpush1.bf16.msra.mxu0 %v910
  %1353 = vmatprep.subr.bf16.mxu0 %v915
  %1354 = vmatpush1.bf16.msra.mxu0 %v914
  %1355 = vmatprep.subr.bf16.mxu0 %v919
  %1356 = vmatpush1.bf16.msra.mxu0 %v918
  %1357 = vmatprep.mubr.bf16.mxu0 %v724
  %1358 = vmatmul.mubr.bf16.gmra.mrb[0].mxu0 %v723
  %v1359 = vpop.f32.mrb[0].mxu0
  %v1360 = vadd.f32 %v1319, %v1359
  %v1361 = vpop.f32.mrb[0].mxu0
  %v1362 = vadd.f32 %v1321, %v1361
  %v1363 = vpop.f32.mrb[0].mxu0
  %v1364 = vpop.f32.mrb[0].mxu0
  %1365 = vdwg.mxu0
  %1366 = vmatprep.subr.bf16.mxu0 %v923
  %1367 = vmatpush1.bf16.msra.mxu0 %v922
  %1368 = vmatprep.subr.bf16.mxu0 %v927
  %1369 = vmatpush1.bf16.msra.mxu0 %v926
  %1370 = vmatprep.subr.bf16.mxu0 %v931
  %1371 = vmatpush1.bf16.msra.mxu0 %v930
  %1372 = vmatprep.subr.bf16.mxu0 %v935
  %1373 = vmatpush1.bf16.msra.mxu0 %v934
  %1374 = vmatprep.subr.bf16.mxu0 %v939
  %1375 = vmatpush1.bf16.msra.mxu0 %v938
  %1376 = vmatprep.subr.bf16.mxu0 %v943
  %1377 = vmatpush1.bf16.msra.mxu0 %v942
  %1378 = vmatprep.subr.bf16.mxu0 %v947
  %1379 = vmatpush1.bf16.msra.mxu0 %v946
  %1380 = vmatprep.subr.bf16.mxu0 %v951
  %1381 = vmatpush1.bf16.msra.mxu0 %v950
  %1382 = vmatprep.subr.bf16.mxu0 %v955
  %1383 = vmatpush1.bf16.msra.mxu0 %v954
  %1384 = vmatprep.subr.bf16.mxu0 %v959
  %1385 = vmatpush1.bf16.msra.mxu0 %v958
  %1386 = vmatprep.subr.bf16.mxu0 %v963
  %1387 = vmatpush1.bf16.msra.mxu0 %v962
  %1388 = vmatprep.subr.bf16.mxu0 %v967
  %1389 = vmatpush1.bf16.msra.mxu0 %v966
  %1390 = vmatprep.subr.bf16.mxu0 %v971
  %1391 = vmatpush1.bf16.msra.mxu0 %v970
  %1392 = vmatprep.subr.bf16.mxu0 %v975
  %1393 = vmatpush1.bf16.msra.mxu0 %v974
  %1394 = vmatprep.subr.bf16.mxu0 %v979
  %1395 = vmatpush1.bf16.msra.mxu0 %v978
  %1396 = vmatprep.subr.bf16.mxu0 %v983
  %1397 = vmatpush1.bf16.msra.mxu0 %v982
  %1398 = vmatprep.mubr.bf16.mxu0 %v726
  %1399 = vmatmul.mubr.bf16.gmra.mrb[0].mxu0 %v725
  %v1400 = vpop.f32.mrb[0].mxu0
  %v1401 = vadd.f32 %v1360, %v1400
  %v1402 = vpop.f32.mrb[0].mxu0
  %v1403 = vadd.f32 %v1362, %v1402
  %v1404 = vpop.f32.mrb[0].mxu0
  %v1405 = vpop.f32.mrb[0].mxu0
  %1406 = vdwg.mxu0
  %1407 = vmatprep.subr.bf16.mxu0 %v987
  %1408 = vmatpush1.bf16.msra.mxu0 %v986
  %1409 = vmatprep.subr.bf16.mxu0 %v991
  %1410 = vmatpush1.bf16.msra.mxu0 %v990
  %1411 = vmatprep.subr.bf16.mxu0 %v995
  %1412 = vmatpush1.bf16.msra.mxu0 %v994
  %1413 = vmatprep.subr.bf16.mxu0 %v999
  %1414 = vmatpush1.bf16.msra.mxu0 %v998
  %1415 = vmatprep.subr.bf16.mxu0 %v1003
  %1416 = vmatpush1.bf16.msra.mxu0 %v1002
  %1417 = vmatprep.subr.bf16.mxu0 %v1007
  %1418 = vmatpush1.bf16.msra.mxu0 %v1006
  %1419 = vmatprep.subr.bf16.mxu0 %v1011
  %1420 = vmatpush1.bf16.msra.mxu0 %v1010
  %1421 = vmatprep.subr.bf16.mxu0 %v1015
  %1422 = vmatpush1.bf16.msra.mxu0 %v1014
  %1423 = vmatprep.subr.bf16.mxu0 0
  %1424 = vmatpush1.bf16.msra.mxu0 0
  %1425 = vmatprep.subr.bf16.mxu0 0
  %1426 = vmatpush1.bf16.msra.mxu0 0
  %1427 = vmatprep.subr.bf16.mxu0 0
  %1428 = vmatpush1.bf16.msra.mxu0 0
  %1429 = vmatprep.subr.bf16.mxu0 0
  %1430 = vmatpush1.bf16.msra.mxu0 0
  %1431 = vmatprep.subr.bf16.mxu0 0
  %1432 = vmatpush1.bf16.msra.mxu0 0
  %1433 = vmatprep.subr.bf16.mxu0 0
  %1434 = vmatpush1.bf16.msra.mxu0 0
  %1435 = vmatprep.subr.bf16.mxu0 0
  %1436 = vmatpush1.bf16.msra.mxu0 0
  %1437 = vmatprep.subr.bf16.mxu0 0
  %1438 = vmatpush1.bf16.msra.mxu0 0
  %1439 = vmatprep.mubr.bf16.mxu0 0
  %1440 = vmatmul.mubr.bf16.gmra.mrb[0].mxu0 %v727
  %v1441 = vpop.f32.mrb[0].mxu0
  %v1442 = vadd.f32 %v1401, %v1441
  %v1443 = vpop.f32.mrb[0].mxu0
  %v1444 = vadd.f32 %v1403, %v1443
  %v1445 = vpop.f32.mrb[0].mxu0
  %v1446 = vpop.f32.mrb[0].mxu0
  %1447 = vdwg.mxu0
  %v1448 = vmax.f32 %v1444, 0.0
  %1450 = vrot.lane.b32.xlu0 %v1237, 64
  %v1451 = vpop.permute.xlu0 %1450
  %v1453 = vadd.f32 %v1237, %v1451
  %v1454 = vadd.f32 %v1453, %v1239
  %v1455 = vmul.f32 %v1454, 0.33333334
  %1457 = vrot.lane.b32.xlu0 %v1442, 64
  %v1458 = vpop.permute.xlu0 %1457
  %v1460 = vadd.f32 %v1239, %v1458
  %v1461 = vadd.f32 %v1460, %v1442
  %v1462 = vmul.f32 %v1461, 0.33333334
  %v1463 = vld [vmem:[%s3] sm:$0x7f]
  %vm1464 = vcmask 516096
  %1465 = vst.msk [vmem:[#allocation2] sm:$0x1] %vm1464, %v1463
  %v1467 = vrot.slane %v1463, 1
  %v1469 = vadd.f32 %v1237, %v1467
  %1470 = vst.msk [vmem:[#allocation2 + $0x1] sm:$0x1] %vm1464, %v1469
  %v1471 = vrot.slane %v1463, 2
  %1472 = vrot.lane.b32.xlu0 %v1471, 64
  %v1473 = vpop.permute.xlu0 %1472
  %v1475 = vadd.f32 %v1237, %v1473
  %1477 = vrot.lane.b32.xlu0 %v1475, 64
  %v1478 = vpop.permute.xlu0 %1477
  %1480 = vst.msk [vmem:[#allocation2 + $0x2] sm:$0x1] %vm1464, %v1478
  %v1481 = vrot.slane %v1463, 3
  %v1483 = vadd.f32 %v1239, %v1481
  %1484 = vst.msk [vmem:[#allocation2 + $0x3] sm:$0x1] %vm1464, %v1483
  %v1485 = vrot.slane %v1463, 4
  %1486 = vrot.lane.b32.xlu0 %v1485, 64
  %v1487 = vpop.permute.xlu0 %1486
  %v1489 = vadd.f32 %v1239, %v1487
  %1491 = vrot.lane.b32.xlu0 %v1489, 64
  %v1492 = vpop.permute.xlu0 %1491
  %1494 = vst.msk [vmem:[#allocation2 + $0x4] sm:$0x1] %vm1464, %v1492
  %v1495 = vrot.slane %v1463, 5
  %v1497 = vadd.f32 %v1442, %v1495
  %1498 = vst.msk [vmem:[#allocation2 + $0x5] sm:$0x1] %vm1464, %v1497
  %v1499 = vrot.slane %v1463, 6
  %1500 = vrot.lane.b32.xlu0 %v1499, 64
  %v1501 = vpop.permute.xlu0 %1500
  %v1503 = vadd.f32 %v1442, %v1501
  %1505 = vrot.lane.b32.xlu0 %v1503, 64
  %v1506 = vpop.permute.xlu0 %1505
  %1508 = vst.msk [vmem:[#allocation2 + $0x6] sm:$0x1] %vm1464, %v1506
  %1509 = vst.msk [vmem:[#allocation2 + $0x7] sm:$0x1] %vm1464, %v1463
  %v1510 = vadd.f32 %v1237, %v1463
  %vm1511 = vcmask 517121
  %1512 = vst.msk [vmem:[#allocation2 + $0x7] sm:$0x2] %vm1511, %v1510
  %1513 = vrot.lane.b32.xlu0 %v1467, 64
  %v1514 = vpop.permute.xlu0 %1513
  %v1516 = vadd.f32 %v1237, %v1514
  %1518 = vrot.lane.b32.xlu0 %v1516, 64
  %v1519 = vpop.permute.xlu0 %1518
  %1521 = vst.msk [vmem:[#allocation2 + $0x8] sm:$0x2] %vm1511, %v1519
  %v1523 = vadd.f32 %v1239, %v1471
  %1524 = vst.msk [vmem:[#allocation2 + $0x9] sm:$0x2] %vm1511, %v1523
  %1525 = vrot.lane.b32.xlu0 %v1481, 64
  %v1526 = vpop.permute.xlu0 %1525
  %v1528 = vadd.f32 %v1239, %v1526
  %1530 = vrot.lane.b32.xlu0 %v1528, 64
  %v1531 = vpop.permute.xlu0 %1530
  %1533 = vst.msk [vmem:[#allocation2 + $0xa] sm:$0x2] %vm1511, %v1531
  %v1535 = vadd.f32 %v1442, %v1485
  %1536 = vst.msk [vmem:[#allocation2 + $0xb] sm:$0x2] %vm1511, %v1535
  %1537 = vrot.lane.b32.xlu0 %v1495, 64
  %v1538 = vpop.permute.xlu0 %1537
  %v1540 = vadd.f32 %v1442, %v1538
  %1542 = vrot.lane.b32.xlu0 %v1540, 64
  %v1543 = vpop.permute.xlu0 %1542
  %1545 = vst.msk [vmem:[#allocation2 + $0xc] sm:$0x2] %vm1511, %v1543
  %v1546 = vld [vmem:[#allocation2] sm:$0xff]
  %v1547 = vld [vmem:[#allocation2 + $0x8] sm:$0x3f]
  %v1548 = vld [vmem:[%s7] sm:$0xf]
  %vm1549 = vcmask 523264
  %v1550 = vsel %vm1549, %v1546, 0.0
  %1551 = vadd.xlane.f32.xlu0 %v1550
  %v1552 = vpop.xlane.xlu0 %1551
  %vm1553 = vcmask 521216
  %v1554 = vsel %vm1553, %v1547, 0.0
  %1555 = vadd.xlane.f32.xlu0 %v1554
  %v1556 = vpop.xlane.xlu0 %1555
  %v1557 = vrcp.pop 64.0
  %v1558 = vmul.f32 %v1552, %v1557
  %v1559 = vmul.f32 %v1556, %v1557
  %v1560 = vsub.f32 %v1546, %v1558
  %v1561 = vsub.f32 %v1547, %v1559
  %v1562 = vmul.f32 %v1560, %v1560
  %v1563 = vmul.f32 %v1561, %v1561
  %v1564 = vsel %vm1549, %v1562, 0.0
  %1565 = vadd.xlane.f32.xlu0 %v1564
  %v1566 = vpop.xlane.xlu0 %1565
  %v1567 = vsel %vm1553, %v1563, 0.0
  %1568 = vadd.xlane.f32.xlu0 %v1567
  %v1569 = vpop.xlane.xlu0 %1568
  %v1570 = vmul.f32 %v1566, %v1557
  %v1571 = vmul.f32 %v1569, %v1557
  %v1572 = vadd.f32 %v1570, 1e-05
  %v1573 = vadd.f32 %v1571, 1e-05
  %v1574 = vrsqrt.pop %v1572
  %v1575 = vrsqrt.pop %v1573
  %v1576 = vmul.f32 %v1560, %v1574
  %v1577 = vmul.f32 %v1561, %v1575
  %v1578 = vlaneseq
  %v1579 = vshrl.u32 %v1578, 7
  %v1580 = vsub.s32 0, %v1579
  %v1581 = vrot.slane %v1548, %v1580
  %v1582 = vmul.f32 %v1576, %v1581
  %v1583 = vmul.f32 %v1577, %v1581
  %v1584 = vlaneseq
  %v1585 = vshrl.u32 %v1584, 7
  %v1586 = vsub.s32 1, %v1585
  %v1587 = vrot.slane %v1548, %v1586
  %v1588 = vadd.f32 %v1582, %v1587
  %v1589 = vadd.f32 %v1583, %v1587
  %v1590 = vld [vmem:[%s8] sm:$0xff]
  %v1591 = vld [vmem:[%s8 + $0x8] sm:$0xff]
  %v1592 = vld [vmem:[%s8 + $0x10] sm:$0xff]
  %v1593 = vld [vmem:[%s8 + $0x18] sm:$0xff]
  %v1594 = vld [vmem:[%s8 + $0x20] sm:$0xff]
  %v1595 = vld [vmem:[%s8 + $0x28] sm:$0xff]
  %v1596 = vld [vmem:[%s8 + $0x30] sm:$0xff]
  %v1597 = vld [vmem:[%s8 + $0x38] sm:$0xff]
  %v1598 = vld [vmem:[%s8 + $0x40] sm:$0xff]
  %v1599 = vld [vmem:[%s8 + $0x48] sm:$0xff]
  %v1600 = vld [vmem:[%s8 + $0x50] sm:$0xff]
  %v1601 = vld [vmem:[%s8 + $0x58] sm:$0xff]
  %v1602 = vld [vmem:[%s8 + $0x60] sm:$0xff]
  %v1603 = vld [vmem:[%s8 + $0x68] sm:$0xff]
  %v1604 = vld [vmem:[%s8 + $0x70] sm:$0xff]
  %v1605 = vld [vmem:[%s8 + $0x78] sm:$0xff]
  %v1606 = vpack.c.bf16 %v1589, %v1588
  %v1607 = vpack.c.bf16 %v1592, %v1590
  %v1608 = vpack.c.bf16 %v1593, %v1591
  %v1609 = vpack.c.bf16 %v1596, %v1594
  %v1610 = vpack.c.bf16 %v1597, %v1595
  %v1611 = vpack.c.bf16 %v1600, %v1598
  %v1612 = vpack.c.bf16 %v1601, %v1599
  %v1613 = vpack.c.bf16 %v1604, %v1602
  %v1614 = vpack.c.bf16 %v1605, %v1603
  %v1615 = vld [vmem:[%s9] sm:$0x3]
  %v1617 = vlaneseq
  %v1618 = vshrl.u32 %v1617, 7
  %v1619 = vsub.s32 0, %v1618
  %v1620 = vrot.slane %v1615, %v1619
  %v1621 = vlaneseq
  %v1622 = vshrl.u32 %v1621, 7
  %v1623 = vsub.s32 1, %v1622
  %v1624 = vrot.slane %v1615, %v1623
  %v1628 = vsel %vm1549, %v1606, 0
  %1630 = vmatprep.subr.bf16.mxu0 %v1608
  %1631 = vmatpush1.bf16.msra.mxu0 %v1607
  %1632 = vmatprep.subr.bf16.mxu0 %v1610
  %1633 = vmatpush1.bf16.msra.mxu0 %v1609
  %1634 = vmatprep.subr.bf16.mxu0 %v1612
  %1635 = vmatpush1.bf16.msra.mxu0 %v1611
  %1636 = vmatprep.subr.bf16.mxu0 %v1614
  %1637 = vmatpush1.bf16.msra.mxu0 %v1613
  %1638 = vmatprep.subr.bf16.mxu0 0
  %1639 = vmatpush1.bf16.msra.mxu0 0
  %1640 = vmatprep.subr.bf16.mxu0 0
  %1641 = vmatpush1.bf16.msra.mxu0 0
  %1642 = vmatprep.subr.bf16.mxu0 0
  %1643 = vmatpush1.bf16.msra.mxu0 0
  %1644 = vmatprep.subr.bf16.mxu0 0
  %1645 = vmatpush1.bf16.msra.mxu0 0
  %1646 = vmatprep.subr.bf16.mxu0 0
  %1647 = vmatpush1.bf16.msra.mxu0 0
  %1648 = vmatprep.subr.bf16.mxu0 0
  %1649 = vmatpush1.bf16.msra.mxu0 0
  %1650 = vmatprep.subr.bf16.mxu0 0
  %1651 = vmatpush1.bf16.msra.mxu0 0
  %1652 = vmatprep.subr.bf16.mxu0 0
  %1653 = vmatpush1.bf16.msra.mxu0 0
  %1654 = vmatprep.subr.bf16.mxu0 0
  %1655 = vmatpush1.bf16.msra.mxu0 0
  %1656 = vmatprep.subr.bf16.mxu0 0
  %1657 = vmatpush1.bf16.msra.mxu0 0
  %1658 = vmatprep.subr.bf16.mxu0 0
  %1659 = vmatpush1.bf16.msra.mxu0 0
  %1660 = vmatprep.subr.bf16.mxu0 0
  %1661 = vmatpush1.bf16.msra.mxu0 0
  %1662 = vmatprep.mubr.bf16.mxu0 0
  %1663 = vmatmul.mubr.bf16.gmra.mrb[0].mxu0 %v1628
  %v1664 = vpop.f32.mrb[0].mxu0
  %v1665 = vadd.f32 %v1620, %v1664
  %v1666 = vpop.f32.mrb[0].mxu0
  %v1667 = vadd.f32 %v1624, %v1666
  %v1668 = vpop.f32.mrb[0].mxu0
  %v1669 = vadd.f32 %v1620, %v1668
  %v1670 = vpop.f32.mrb[0].mxu0
  %v1671 = vadd.f32 %v1624, %v1670
  %1672 = vdwg.mxu0
  %v1673 = vld [vmem:[%s4] sm:$0xff]
  %v1674 = vld [vmem:[%s4 + $0x8] sm:$0x3f]
  %v1675 = vpack.c.bf16 %v1669, %v1665
  %1677 = vrot.lane.b32.xlu0 %v1675, 64
  %v1678 = vpop.permute.xlu0 %1677
  %vm1679 = vcmask 130048
  %v1681 = vsel %vm1679, %v1675, 0
  %v1684 = vsel %vm1679, %v1678, 0
  %1686 = vmatprep.subr.bf16.mxu0 0
  %1687 = vmatpush1.bf16.xpose.msra.mxu0 %v1684
  %1688 = vmatprep.subr.bf16.mxu0 0
  %1689 = vmatpush1.bf16.xpose.msra.mxu0 0
  %1690 = vmatprep.subr.bf16.mxu0 0
  %1691 = vmatpush1.bf16.xpose.msra.mxu0 0
  %1692 = vmatprep.subr.bf16.mxu0 0
  %1693 = vmatpush1.bf16.xpose.msra.mxu0 0
  %1694 = vmatprep.subr.bf16.mxu0 0
  %1695 = vmatpush1.bf16.xpose.msra.mxu0 0
  %1696 = vmatprep.subr.bf16.mxu0 0
  %1697 = vmatpush1.bf16.xpose.msra.mxu0 0
  %1698 = vmatprep.subr.bf16.mxu0 0
  %1699 = vmatpush1.bf16.xpose.msra.mxu0 0
  %1700 = vmatprep.subr.bf16.mxu0 0
  %1701 = vmatpush1.bf16.xpose.msra.mxu0 0
  %1702 = vmatprep.subr.bf16.mxu0 0
  %1703 = vmatpush1.bf16.xpose.msra.mxu0 0
  %1704 = vmatprep.subr.bf16.mxu0 0
  %1705 = vmatpush1.bf16.xpose.msra.mxu0 0
  %1706 = vmatprep.subr.bf16.mxu0 0
  %1707 = vmatpush1.bf16.xpose.msra.mxu0 0
  %1708 = vmatprep.subr.bf16.mxu0 0
  %1709 = vmatpush1.bf16.xpose.msra.mxu0 0
  %1710 = vmatprep.subr.bf16.mxu0 0
  %1711 = vmatpush1.bf16.xpose.msra.mxu0 0
  %1712 = vmatprep.subr.bf16.mxu0 0
  %1713 = vmatpush1.bf16.xpose.msra.mxu0 0
  %1714 = vmatprep.subr.bf16.mxu0 0
  %1715 = vmatpush1.bf16.xpose.msra.mxu0 0
  %1716 = vmatprep.subr.bf16.mxu0 0
  %1717 = vmatpush1.bf16.xpose.msra.mxu0 0
  %1718 = vmatprep.mubr.bf16.mxu0 0
  %1719 = vmatmul.mubr.bf16.gmra.mrb[0].mxu0 %v1681
  %v1720 = vpop.f32.mrb[0].mxu0
  %v1721 = vadd.f32 0.0, %v1720
  %v1722 = vpop.f32.mrb[0].mxu0
  %v1723 = vpop.f32.mrb[0].mxu0
  %v1724 = vadd.f32 0.0, %v1723
  %v1725 = vpop.f32.mrb[0].mxu0
  %1726 = vdwg.mxu0
  %v1727 = vmul.f32 %v1721, 0.25
  %v1728 = vmul.f32 %v1724, 0.25
  %v1729 = vadd.f32 %v1727, %v1673
  %v1730 = vadd.f32 %v1728, %v1674
  %vm1731 = vcmask 113664
  %v1732 = vsel %vm1731, %v1729, -inf
  %1733 = vmax.xlane.f32.xlu0 %v1732
  %v1734 = vpop.xlane.xlu0 %1733
  %vm1735 = vcmask 111616
  %v1736 = vsel %vm1735, %v1730, -inf
  %1737 = vmax.xlane.f32.xlu0 %v1736
  %v1738 = vpop.xlane.xlu0 %1737
  %v1739 = vsub.f32 %v1729, %v1734
  %v1740 = vsub.f32 %v1730, %v1738
  %v1741 = vmul.f32 %v1739, 1.442695
  %v1742 = vpow.pop %v1741
  %v1743 = vmul.f32 %v1740, 1.442695
  %v1744 = vpow.pop %v1743
  %v1745 = vsel %vm1731, %v1742, 0.0
  %1746 = vadd.xlane.f32.xlu0 %v1745
  %v1747 = vpop.xlane.xlu0 %1746
  %v1748 = vsel %vm1735, %v1744, 0.0
  %1749 = vadd.xlane.f32.xlu0 %v1748
  %v1750 = vpop.xlane.xlu0 %1749
  %v1751 = vrcp.pop %v1747
  %v1752 = vrcp.pop %v1750
  %v1753 = vmul.f32 %v1742, %v1751
  %v1754 = vmul.f32 %v1744, %v1752
  %v1755 = vpack.c.bf16 %v1754, %v1753
  %v1756 = vpack.c.bf16 %v1671, %v1667
  %v1758 = vsel %vm1731, %v1755, 0
  %vm1760 = vcmask 1046528
  %v1762 = vsel %vm1760, %v1756, 0
  %1764 = vmatprep.subr.bf16.mxu0 0
  %1765 = vmatpush1.bf16.msra.mxu0 %v1762
  %1766 = vmatprep.subr.bf16.mxu0 0
  %1767 = vmatpush1.bf16.msra.mxu0 0
  %1768 = vmatprep.subr.bf16.mxu0 0
  %1769 = vmatpush1.bf16.msra.mxu0 0
  %1770 = vmatprep.subr.bf16.mxu0 0
  %1771 = vmatpush1.bf16.msra.mxu0 0
  %1772 = vmatprep.subr.bf16.mxu0 0
  %1773 = vmatpush1.bf16.msra.mxu0 0
  %1774 = vmatprep.subr.bf16.mxu0 0
  %1775 = vmatpush1.bf16.msra.mxu0 0
  %1776 = vmatprep.subr.bf16.mxu0 0
  %1777 = vmatpush1.bf16.msra.mxu0 0
  %1778 = vmatprep.subr.bf16.mxu0 0
  %1779 = vmatpush1.bf16.msra.mxu0 0
  %1780 = vmatprep.subr.bf16.mxu0 0
  %1781 = vmatpush1.bf16.msra.mxu0 0
  %1782 = vmatprep.subr.bf16.mxu0 0
  %1783 = vmatpush1.bf16.msra.mxu0 0
  %1784 = vmatprep.subr.bf16.mxu0 0
  %1785 = vmatpush1.bf16.msra.mxu0 0
  %1786 = vmatprep.subr.bf16.mxu0 0
  %1787 = vmatpush1.bf16.msra.mxu0 0
  %1788 = vmatprep.subr.bf16.mxu0 0
  %1789 = vmatpush1.bf16.msra.mxu0 0
  %1790 = vmatprep.subr.bf16.mxu0 0
  %1791 = vmatpush1.bf16.msra.mxu0 0
  %1792 = vmatprep.subr.bf16.mxu0 0
  %1793 = vmatpush1.bf16.msra.mxu0 0
  %1794 = vmatprep.subr.bf16.mxu0 0
  %1795 = vmatpush1.bf16.msra.mxu0 0
  %1796 = vmatprep.mubr.bf16.mxu0 0
  %1797 = vmatmul.mubr.bf16.gmra.mrb[0].mxu0 %v1758
  %v1798 = vpop.f32.mrb[0].mxu0
  %v1799 = vadd.f32 0.0, %v1798
  %v1800 = vpop.f32.mrb[0].mxu0
  %v1801 = vpop.f32.mrb[0].mxu0
  %v1802 = vadd.f32 0.0, %v1801
  %v1803 = vpop.f32.mrb[0].mxu0
  %1804 = vdwg.mxu0
  %1805 = vrot.lane.b32.xlu0 %v1675, 112
  %v1806 = vpop.permute.xlu0 %1805
  %1807 = vrot.lane.b32.xlu0 %v1675, 48
  %v1808 = vpop.permute.xlu0 %1807
  %v1810 = vsel %vm1679, %v1806, 0
  %v1813 = vsel %vm1679, %v1808, 0
  %1815 = vmatprep.subr.bf16.mxu0 0
  %1816 = vmatpush1.bf16.xpose.msra.mxu0 %v1813
  %1817 = vmatprep.subr.bf16.mxu0 0
  %1818 = vmatpush1.bf16.xpose.msra.mxu0 0
  %1819 = vmatprep.subr.bf16.mxu0 0
  %1820 = vmatpush1.bf16.xpose.msra.mxu0 0
  %1821 = vmatprep.subr.bf16.mxu0 0
  %1822 = vmatpush1.bf16.xpose.msra.mxu0 0
  %1823 = vmatprep.subr.bf16.mxu0 0
  %1824 = vmatpush1.bf16.xpose.msra.mxu0 0
  %1825 = vmatprep.subr.bf16.mxu0 0
  %1826 = vmatpush1.bf16.xpose.msra.mxu0 0
  %1827 = vmatprep.subr.bf16.mxu0 0
  %1828 = vmatpush1.bf16.xpose.msra.mxu0 0
  %1829 = vmatprep.subr.bf16.mxu0 0
  %1830 = vmatpush1.bf16.xpose.msra.mxu0 0
  %1831 = vmatprep.subr.bf16.mxu0 0
  %1832 = vmatpush1.bf16.xpose.msra.mxu0 0
  %1833 = vmatprep.subr.bf16.mxu0 0
  %1834 = vmatpush1.bf16.xpose.msra.mxu0 0
  %1835 = vmatprep.subr.bf16.mxu0 0
  %1836 = vmatpush1.bf16.xpose.msra.mxu0 0
  %1837 = vmatprep.subr.bf16.mxu0 0
  %1838 = vmatpush1.bf16.xpose.msra.mxu0 0
  %1839 = vmatprep.subr.bf16.mxu0 0
  %1840 = vmatpush1.bf16.xpose.msra.mxu0 0
  %1841 = vmatprep.subr.bf16.mxu0 0
  %1842 = vmatpush1.bf16.xpose.msra.mxu0 0
  %1843 = vmatprep.subr.bf16.mxu0 0
  %1844 = vmatpush1.bf16.xpose.msra.mxu0 0
  %1845 = vmatprep.subr.bf16.mxu0 0
  %1846 = vmatpush1.bf16.xpose.msra.mxu0 0
  %1847 = vmatprep.mubr.bf16.mxu0 0
  %1848 = vmatmul.mubr.bf16.gmra.mrb[0].mxu0 %v1810
  %v1849 = vpop.f32.mrb[0].mxu0
  %v1850 = vadd.f32 0.0, %v1849
  %v1851 = vpop.f32.mrb[0].mxu0
  %v1852 = vpop.f32.mrb[0].mxu0
  %v1853 = vadd.f32 0.0, %v1852
  %v1854 = vpop.f32.mrb[0].mxu0
  %1855 = vdwg.mxu0
  %v1856 = vmul.f32 %v1850, 0.25
  %v1857 = vmul.f32 %v1853, 0.25
  %v1858 = vadd.f32 %v1856, %v1673
  %v1859 = vadd.f32 %v1857, %v1674
  %v1860 = vsel %vm1731, %v1858, -inf
  %1861 = vmax.xlane.f32.xlu0 %v1860
  %v1862 = vpop.xlane.xlu0 %1861
  %v1863 = vsel %vm1735, %v1859, -inf
  %1864 = vmax.xlane.f32.xlu0 %v1863
  %v1865 = vpop.xlane.xlu0 %1864
  %v1866 = vsub.f32 %v1858, %v1862
  %v1867 = vsub.f32 %v1859, %v1865
  %v1868 = vmul.f32 %v1866, 1.442695
  %v1869 = vpow.pop %v1868
  %v1870 = vmul.f32 %v1867, 1.442695
  %v1871 = vpow.pop %v1870
  %v1872 = vsel %vm1731, %v1869, 0.0
  %1873 = vadd.xlane.f32.xlu0 %v1872
  %v1874 = vpop.xlane.xlu0 %1873
  %v1875 = vsel %vm1735, %v1871, 0.0
  %1876 = vadd.xlane.f32.xlu0 %v1875
  %v1877 = vpop.xlane.xlu0 %1876
  %v1878 = vrcp.pop %v1874
  %v1879 = vrcp.pop %v1877
  %v1880 = vmul.f32 %v1869, %v1878
  %v1881 = vmul.f32 %v1871, %v1879
  %v1882 = vpack.c.bf16 %v1881, %v1880
  %1884 = vrot.lane.b32.xlu0 %v1756, 112
  %v1885 = vpop.permute.xlu0 %1884
  %v1887 = vsel %vm1731, %v1882, 0
  %v1890 = vsel %vm1760, %v1885, 0
  %1892 = vmatprep.subr.bf16.mxu0 0
  %1893 = vmatpush1.bf16.msra.mxu0 %v1890
  %1894 = vmatprep.subr.bf16.mxu0 0
  %1895 = vmatpush1.bf16.msra.mxu0 0
  %1896 = vmatprep.subr.bf16.mxu0 0
  %1897 = vmatpush1.bf16.msra.mxu0 0
  %1898 = vmatprep.subr.bf16.mxu0 0
  %1899 = vmatpush1.bf16.msra.mxu0 0
  %1900 = vmatprep.subr.bf16.mxu0 0
  %1901 = vmatpush1.bf16.msra.mxu0 0
  %1902 = vmatprep.subr.bf16.mxu0 0
  %1903 = vmatpush1.bf16.msra.mxu0 0
  %1904 = vmatprep.subr.bf16.mxu0 0
  %1905 = vmatpush1.bf16.msra.mxu0 0
  %1906 = vmatprep.subr.bf16.mxu0 0
  %1907 = vmatpush1.bf16.msra.mxu0 0
  %1908 = vmatprep.subr.bf16.mxu0 0
  %1909 = vmatpush1.bf16.msra.mxu0 0
  %1910 = vmatprep.subr.bf16.mxu0 0
  %1911 = vmatpush1.bf16.msra.mxu0 0
  %1912 = vmatprep.subr.bf16.mxu0 0
  %1913 = vmatpush1.bf16.msra.mxu0 0
  %1914 = vmatprep.subr.bf16.mxu0 0
  %1915 = vmatpush1.bf16.msra.mxu0 0
  %1916 = vmatprep.subr.bf16.mxu0 0
  %1917 = vmatpush1.bf16.msra.mxu0 0
  %1918 = vmatprep.subr.bf16.mxu0 0
  %1919 = vmatpush1.bf16.msra.mxu0 0
  %1920 = vmatprep.subr.bf16.mxu0 0
  %1921 = vmatpush1.bf16.msra.mxu0 0
  %1922 = vmatprep.subr.bf16.mxu0 0
  %1923 = vmatpush1.bf16.msra.mxu0 0
  %1924 = vmatprep.mubr.bf16.mxu0 0
  %1925 = vmatmul.mubr.bf16.gmra.mrb[0].mxu0 %v1887
  %v1926 = vpop.f32.mrb[0].mxu0
  %v1927 = vadd.f32 0.0, %v1926
  %v1928 = vpop.f32.mrb[0].mxu0
  %v1929 = vpop.f32.mrb[0].mxu0
  %v1930 = vadd.f32 0.0, %v1929
  %v1931 = vpop.f32.mrb[0].mxu0
  %1932 = vdwg.mxu0
  %1933 = vrot.lane.b32.xlu0 %v1675, 96
  %v1934 = vpop.permute.xlu0 %1933
  %1935 = vrot.lane.b32.xlu0 %v1675, 32
  %v1936 = vpop.permute.xlu0 %1935
  %v1938 = vsel %vm1679, %v1934, 0
  %v1941 = vsel %vm1679, %v1936, 0
  %1943 = vmatprep.subr.bf16.mxu0 0
  %1944 = vmatpush1.bf16.xpose.msra.mxu0 %v1941
  %1945 = vmatprep.subr.bf16.mxu0 0
  %1946 = vmatpush1.bf16.xpose.msra.mxu0 0
  %1947 = vmatprep.subr.bf16.mxu0 0
  %1948 = vmatpush1.bf16.xpose.msra.mxu0 0
  %1949 = vmatprep.subr.bf16.mxu0 0
  %1950 = vmatpush1.bf16.xpose.msra.mxu0 0
  %1951 = vmatprep.subr.bf16.mxu0 0
  %1952 = vmatpush1.bf16.xpose.msra.mxu0 0
  %1953 = vmatprep.subr.bf16.mxu0 0
  %1954 = vmatpush1.bf16.xpose.msra.mxu0 0
  %1955 = vmatprep.subr.bf16.mxu0 0
  %1956 = vmatpush1.bf16.xpose.msra.mxu0 0
  %1957 = vmatprep.subr.bf16.mxu0 0
  %1958 = vmatpush1.bf16.xpose.msra.mxu0 0
  %1959 = vmatprep.subr.bf16.mxu0 0
  %1960 = vmatpush1.bf16.xpose.msra.mxu0 0
  %1961 = vmatprep.subr.bf16.mxu0 0
  %1962 = vmatpush1.bf16.xpose.msra.mxu0 0
  %1963 = vmatprep.subr.bf16.mxu0 0
  %1964 = vmatpush1.bf16.xpose.msra.mxu0 0
  %1965 = vmatprep.subr.bf16.mxu0 0
  %1966 = vmatpush1.bf16.xpose.msra.mxu0 0
  %1967 = vmatprep.subr.bf16.mxu0 0
  %1968 = vmatpush1.bf16.xpose.msra.mxu0 0
  %1969 = vmatprep.subr.bf16.mxu0 0
  %1970 = vmatpush1.bf16.xpose.msra.mxu0 0
  %1971 = vmatprep.subr.bf16.mxu0 0
  %1972 = vmatpush1.bf16.xpose.msra.mxu0 0
  %1973 = vmatprep.subr.bf16.mxu0 0
  %1974 = vmatpush1.bf16.xpose.msra.mxu0 0
  %1975 = vmatprep.mubr.bf16.mxu0 0
  %1976 = vmatmul.mubr.bf16.gmra.mrb[0].mxu0 %v1938
  %v1977 = vpop.f32.mrb[0].mxu0
  %v1978 = vadd.f32 0.0, %v1977
  %v1979 = vpop.f32.mrb[0].mxu0
  %v1980 = vpop.f32.mrb[0].mxu0
  %v1981 = vadd.f32 0.0, %v1980
  %v1982 = vpop.f32.mrb[0].mxu0
  %1983 = vdwg.mxu0
  %v1984 = vmul.f32 %v1978, 0.25
  %v1985 = vmul.f32 %v1981, 0.25
  %v1986 = vadd.f32 %v1984, %v1673
  %v1987 = vadd.f32 %v1985, %v1674
  %v1988 = vsel %vm1731, %v1986, -inf
  %1989 = vmax.xlane.f32.xlu0 %v1988
  %v1990 = vpop.xlane.xlu0 %1989
  %v1991 = vsel %vm1735, %v1987, -inf
  %1992 = vmax.xlane.f32.xlu0 %v1991
  %v1993 = vpop.xlane.xlu0 %1992
  %v1994 = vsub.f32 %v1986, %v1990
  %v1995 = vsub.f32 %v1987, %v1993
  %v1996 = vmul.f32 %v1994, 1.442695
  %v1997 = vpow.pop %v1996
  %v1998 = vmul.f32 %v1995, 1.442695
  %v1999 = vpow.pop %v1998
  %v2000 = vsel %vm1731, %v1997, 0.0
  %2001 = vadd.xlane.f32.xlu0 %v2000
  %v2002 = vpop.xlane.xlu0 %2001
  %v2003 = vsel %vm1735, %v1999, 0.0
  %2004 = vadd.xlane.f32.xlu0 %v2003
  %v2005 = vpop.xlane.xlu0 %2004
  %v2006 = vrcp.pop %v2002
  %v2007 = vrcp.pop %v2005
  %v2008 = vmul.f32 %v1997, %v2006
  %v2009 = vmul.f32 %v1999, %v2007
  %v2010 = vpack.c.bf16 %v2009, %v2008
  %2011 = vrot.lane.b32.xlu0 %v1756, 96
  %v2012 = vpop.permute.xlu0 %2011
  %v2014 = vsel %vm1731, %v2010, 0
  %v2017 = vsel %vm1760, %v2012, 0
  %2019 = vmatprep.subr.bf16.mxu0 0
  %2020 = vmatpush1.bf16.msra.mxu0 %v2017
  %2021 = vmatprep.subr.bf16.mxu0 0
  %2022 = vmatpush1.bf16.msra.mxu0 0
  %2023 = vmatprep.subr.bf16.mxu0 0
  %2024 = vmatpush1.bf16.msra.mxu0 0
  %2025 = vmatprep.subr.bf16.mxu0 0
  %2026 = vmatpush1.bf16.msra.mxu0 0
  %2027 = vmatprep.subr.bf16.mxu0 0
  %2028 = vmatpush1.bf16.msra.mxu0 0
  %2029 = vmatprep.subr.bf16.mxu0 0
  %2030 = vmatpush1.bf16.msra.mxu0 0
  %2031 = vmatprep.subr.bf16.mxu0 0
  %2032 = vmatpush1.bf16.msra.mxu0 0
  %2033 = vmatprep.subr.bf16.mxu0 0
  %2034 = vmatpush1.bf16.msra.mxu0 0
  %2035 = vmatprep.subr.bf16.mxu0 0
  %2036 = vmatpush1.bf16.msra.mxu0 0
  %2037 = vmatprep.subr.bf16.mxu0 0
  %2038 = vmatpush1.bf16.msra.mxu0 0
  %2039 = vmatprep.subr.bf16.mxu0 0
  %2040 = vmatpush1.bf16.msra.mxu0 0
  %2041 = vmatprep.subr.bf16.mxu0 0
  %2042 = vmatpush1.bf16.msra.mxu0 0
  %2043 = vmatprep.subr.bf16.mxu0 0
  %2044 = vmatpush1.bf16.msra.mxu0 0
  %2045 = vmatprep.subr.bf16.mxu0 0
  %2046 = vmatpush1.bf16.msra.mxu0 0
  %2047 = vmatprep.subr.bf16.mxu0 0
  %2048 = vmatpush1.bf16.msra.mxu0 0
  %2049 = vmatprep.subr.bf16.mxu0 0
  %2050 = vmatpush1.bf16.msra.mxu0 0
  %2051 = vmatprep.mubr.bf16.mxu0 0
  %2052 = vmatmul.mubr.bf16.gmra.mrb[0].mxu0 %v2014
  %v2053 = vpop.f32.mrb[0].mxu0
  %v2054 = vadd.f32 0.0, %v2053
  %v2055 = vpop.f32.mrb[0].mxu0
  %v2056 = vpop.f32.mrb[0].mxu0
  %v2057 = vadd.f32 0.0, %v2056
  %v2058 = vpop.f32.mrb[0].mxu0
  %2059 = vdwg.mxu0
  %2060 = vrot.lane.b32.xlu0 %v1675, 80
  %v2061 = vpop.permute.xlu0 %2060
  %2062 = vrot.lane.b32.xlu0 %v1675, 16
  %v2063 = vpop.permute.xlu0 %2062
  %v2065 = vsel %vm1679, %v2061, 0
  %v2068 = vsel %vm1679, %v2063, 0
  %2070 = vmatprep.subr.bf16.mxu0 0
  %2071 = vmatpush1.bf16.xpose.msra.mxu0 %v2068
  %2072 = vmatprep.subr.bf16.mxu0 0
  %2073 = vmatpush1.bf16.xpose.msra.mxu0 0
  %2074 = vmatprep.subr.bf16.mxu0 0
  %2075 = vmatpush1.bf16.xpose.msra.mxu0 0
  %2076 = vmatprep.subr.bf16.mxu0 0
  %2077 = vmatpush1.bf16.xpose.msra.mxu0 0
  %2078 = vmatprep.subr.bf16.mxu0 0
  %2079 = vmatpush1.bf16.xpose.msra.mxu0 0
  %2080 = vmatprep.subr.bf16.mxu0 0
  %2081 = vmatpush1.bf16.xpose.msra.mxu0 0
  %2082 = vmatprep.subr.bf16.mxu0 0
  %2083 = vmatpush1.bf16.xpose.msra.mxu0 0
  %2084 = vmatprep.subr.bf16.mxu0 0
  %2085 = vmatpush1.bf16.xpose.msra.mxu0 0
  %2086 = vmatprep.subr.bf16.mxu0 0
  %2087 = vmatpush1.bf16.xpose.msra.mxu0 0
  %2088 = vmatprep.subr.bf16.mxu0 0
  %2089 = vmatpush1.bf16.xpose.msra.mxu0 0
  %2090 = vmatprep.subr.bf16.mxu0 0
  %2091 = vmatpush1.bf16.xpose.msra.mxu0 0
  %2092 = vmatprep.subr.bf16.mxu0 0
  %2093 = vmatpush1.bf16.xpose.msra.mxu0 0
  %2094 = vmatprep.subr.bf16.mxu0 0
  %2095 = vmatpush1.bf16.xpose.msra.mxu0 0
  %2096 = vmatprep.subr.bf16.mxu0 0
  %2097 = vmatpush1.bf16.xpose.msra.mxu0 0
  %2098 = vmatprep.subr.bf16.mxu0 0
  %2099 = vmatpush1.bf16.xpose.msra.mxu0 0
  %2100 = vmatprep.subr.bf16.mxu0 0
  %2101 = vmatpush1.bf16.xpose.msra.mxu0 0
  %2102 = vmatprep.mubr.bf16.mxu0 0
  %2103 = vmatmul.mubr.bf16.gmra.mrb[0].mxu0 %v2065
  %v2104 = vpop.f32.mrb[0].mxu0
  %v2105 = vadd.f32 0.0, %v2104
  %v2106 = vpop.f32.mrb[0].mxu0
  %v2107 = vpop.f32.mrb[0].mxu0
  %v2108 = vadd.f32 0.0, %v2107
  %v2109 = vpop.f32.mrb[0].mxu0
  %2110 = vdwg.mxu0
  %v2111 = vmul.f32 %v2105, 0.25
  %v2112 = vmul.f32 %v2108, 0.25
  %v2113 = vadd.f32 %v2111, %v1673
  %v2114 = vadd.f32 %v2112, %v1674
  %v2115 = vsel %vm1731, %v2113, -inf
  %2116 = vmax.xlane.f32.xlu0 %v2115
  %v2117 = vpop.xlane.xlu0 %2116
  %v2118 = vsel %vm1735, %v2114, -inf
  %2119 = vmax.xlane.f32.xlu0 %v2118
  %v2120 = vpop.xlane.xlu0 %2119
  %v2121 = vsub.f32 %v2113, %v2117
  %v2122 = vsub.f32 %v2114, %v2120
  %v2123 = vmul.f32 %v2121, 1.442695
  %v2124 = vpow.pop %v2123
  %v2125 = vmul.f32 %v2122, 1.442695
  %v2126 = vpow.pop %v2125
  %v2127 = vsel %vm1731, %v2124, 0.0
  %2128 = vadd.xlane.f32.xlu0 %v2127
  %v2129 = vpop.xlane.xlu0 %2128
  %v2130 = vsel %vm1735, %v2126, 0.0
  %2131 = vadd.xlane.f32.xlu0 %v2130
  %v2132 = vpop.xlane.xlu0 %2131
  %v2133 = vrcp.pop %v2129
  %v2134 = vrcp.pop %v2132
  %v2135 = vmul.f32 %v2124, %v2133
  %v2136 = vmul.f32 %v2126, %v2134
  %v2137 = vpack.c.bf16 %v2136, %v2135
  %2138 = vrot.lane.b32.xlu0 %v1756, 80
  %v2139 = vpop.permute.xlu0 %2138
  %v2141 = vsel %vm1731, %v2137, 0
  %v2144 = vsel %vm1760, %v2139, 0
  %2146 = vmatprep.subr.bf16.mxu0 0
  %2147 = vmatpush1.bf16.msra.mxu0 %v2144
  %2148 = vmatprep.subr.bf16.mxu0 0
  %2149 = vmatpush1.bf16.msra.mxu0 0
  %2150 = vmatprep.subr.bf16.mxu0 0
  %2151 = vmatpush1.bf16.msra.mxu0 0
  %2152 = vmatprep.subr.bf16.mxu0 0
  %2153 = vmatpush1.bf16.msra.mxu0 0
  %2154 = vmatprep.subr.bf16.mxu0 0
  %2155 = vmatpush1.bf16.msra.mxu0 0
  %2156 = vmatprep.subr.bf16.mxu0 0
  %2157 = vmatpush1.bf16.msra.mxu0 0
  %2158 = vmatprep.subr.bf16.mxu0 0
  %2159 = vmatpush1.bf16.msra.mxu0 0
  %2160 = vmatprep.subr.bf16.mxu0 0
  %2161 = vmatpush1.bf16.msra.mxu0 0
  %2162 = vmatprep.subr.bf16.mxu0 0
  %2163 = vmatpush1.bf16.msra.mxu0 0
  %2164 = vmatprep.subr.bf16.mxu0 0
  %2165 = vmatpush1.bf16.msra.mxu0 0
  %2166 = vmatprep.subr.bf16.mxu0 0
  %2167 = vmatpush1.bf16.msra.mxu0 0
  %2168 = vmatprep.subr.bf16.mxu0 0
  %2169 = vmatpush1.bf16.msra.mxu0 0
  %2170 = vmatprep.subr.bf16.mxu0 0
  %2171 = vmatpush1.bf16.msra.mxu0 0
  %2172 = vmatprep.subr.bf16.mxu0 0
  %2173 = vmatpush1.bf16.msra.mxu0 0
  %2174 = vmatprep.subr.bf16.mxu0 0
  %2175 = vmatpush1.bf16.msra.mxu0 0
  %2176 = vmatprep.subr.bf16.mxu0 0
  %2177 = vmatpush1.bf16.msra.mxu0 0
  %2178 = vmatprep.mubr.bf16.mxu0 0
  %2179 = vmatmul.mubr.bf16.gmra.mrb[0].mxu0 %v2141
  %v2180 = vpop.f32.mrb[0].mxu0
  %v2181 = vadd.f32 0.0, %v2180
  %v2182 = vpop.f32.mrb[0].mxu0
  %v2183 = vpop.f32.mrb[0].mxu0
  %v2184 = vadd.f32 0.0, %v2183
  %v2185 = vpop.f32.mrb[0].mxu0
  %2186 = vdwg.mxu0
  %2189 = vrot.lane.b32.xlu0 %v1927, 16
  %v2190 = vpop.permute.xlu0 %2189
  %2191 = vrot.lane.b32.xlu0 %v1930, 16
  %v2192 = vpop.permute.xlu0 %2191
  %2197 = vrot.lane.b32.xlu0 %v2054, 32
  %v2198 = vpop.permute.xlu0 %2197
  %2199 = vrot.lane.b32.xlu0 %v2057, 32
  %v2200 = vpop.permute.xlu0 %2199
  %2205 = vrot.lane.b32.xlu0 %v2181, 48
  %v2206 = vpop.permute.xlu0 %2205
  %2207 = vrot.lane.b32.xlu0 %v2184, 48
  %v2208 = vpop.permute.xlu0 %2207
  %v2211 = vsel %vm1679, %v1799, %v2190
  %v2212 = vsel %vm1679, %v1802, %v2192
  %vm2213 = vcmask 261120
  %v2214 = vsel %vm2213, %v2211, %v2198
  %v2215 = vsel %vm2213, %v2212, %v2200
  %vm2216 = vcmask 392192
  %v2217 = vsel %vm2216, %v2214, %v2206
  %v2218 = vsel %vm2216, %v2215, %v2208
  %v2219 = vld [vmem:[%s10] sm:$0xff]
  %v2220 = vld [vmem:[%s10 + $0x8] sm:$0xff]
  %v2221 = vld [vmem:[%s10 + $0x10] sm:$0xff]
  %v2222 = vld [vmem:[%s10 + $0x18] sm:$0xff]
  %v2223 = vld [vmem:[%s10 + $0x20] sm:$0xff]
  %v2224 = vld [vmem:[%s10 + $0x28] sm:$0xff]
  %v2225 = vld [vmem:[%s10 + $0x30] sm:$0xff]
  %v2226 = vld [vmem:[%s10 + $0x38] sm:$0xff]
  %v2227 = vpack.c.bf16 %v2218, %v2217
  %v2228 = vpack.c.bf16 %v2220, %v2219
  %v2229 = vpack.c.bf16 %v2222, %v2221
  %v2230 = vpack.c.bf16 %v2224, %v2223
  %v2231 = vpack.c.bf16 %v2226, %v2225
  %v2233 = vsel %vm1549, %v2227, 0
  %2235 = vmatprep.subr.bf16.mxu0 0
  %2236 = vmatpush1.bf16.msra.mxu0 %v2228
  %2237 = vmatprep.subr.bf16.mxu0 0
  %2238 = vmatpush1.bf16.msra.mxu0 %v2229
  %2239 = vmatprep.subr.bf16.mxu0 0
  %2240 = vmatpush1.bf16.msra.mxu0 %v2230
  %2241 = vmatprep.subr.bf16.mxu0 0
  %2242 = vmatpush1.bf16.msra.mxu0 %v2231
  %2243 = vmatprep.subr.bf16.mxu0 0
  %2244 = vmatpush1.bf16.msra.mxu0 0
  %2245 = vmatprep.subr.bf16.mxu0 0
  %2246 = vmatpush1.bf16.msra.mxu0 0
  %2247 = vmatprep.subr.bf16.mxu0 0
  %2248 = vmatpush1.bf16.msra.mxu0 0
  %2249 = vmatprep.subr.bf16.mxu0 0
  %2250 = vmatpush1.bf16.msra.mxu0 0
  %2251 = vmatprep.subr.bf16.mxu0 0
  %2252 = vmatpush1.bf16.msra.mxu0 0
  %2253 = vmatprep.subr.bf16.mxu0 0
  %2254 = vmatpush1.bf16.msra.mxu0 0
  %2255 = vmatprep.subr.bf16.mxu0 0
  %2256 = vmatpush1.bf16.msra.mxu0 0
  %2257 = vmatprep.subr.bf16.mxu0 0
  %2258 = vmatpush1.bf16.msra.mxu0 0
  %2259 = vmatprep.subr.bf16.mxu0 0
  %2260 = vmatpush1.bf16.msra.mxu0 0
  %2261 = vmatprep.subr.bf16.mxu0 0
  %2262 = vmatpush1.bf16.msra.mxu0 0
  %2263 = vmatprep.subr.bf16.mxu0 0
  %2264 = vmatpush1.bf16.msra.mxu0 0
  %2265 = vmatprep.subr.bf16.mxu0 0
  %2266 = vmatpush1.bf16.msra.mxu0 0
  %2267 = vmatprep.mubr.bf16.mxu0 0
  %2268 = vmatmul.mubr.bf16.gmra.mrb[0].mxu0 %v2233
  %v2269 = vpop.f32.mrb[0].mxu0
  %v2270 = vadd.f32 0.0, %v2269
  %v2271 = vpop.f32.mrb[0].mxu0
  %v2272 = vpop.f32.mrb[0].mxu0
  %v2273 = vadd.f32 0.0, %v2272
  %v2274 = vpop.f32.mrb[0].mxu0
  %2275 = vdwg.mxu0
  %v2276 = vadd.f32 %v1546, %v2270
  %v2277 = vadd.f32 %v1547, %v2273
  %v2278 = vld [vmem:[%s11] sm:$0x1]
  %v2280 = vlaneseq
  %v2281 = vshrl.u32 %v2280, 7
  %v2282 = vsub.s32 0, %v2281
  %v2283 = vrot.slane %v2278, %v2282
  %v2285 = vadd.f32 %v2276, %v2283
  %v2286 = vadd.f32 %v2277, %v2283
  %v2287 = vsel %vm1549, %v2285, 0.0
  %2288 = vadd.xlane.f32.xlu0 %v2287
  %v2289 = vpop.xlane.xlu0 %2288
  %v2290 = vsel %vm1553, %v2286, 0.0
  %2291 = vadd.xlane.f32.xlu0 %v2290
  %v2292 = vpop.xlane.xlu0 %2291
  %v2293 = vmul.f32 %v2289, %v1557
  %v2294 = vmul.f32 %v2292, %v1557
  %v2295 = vsub.f32 %v2285, %v2293
  %v2296 = vsub.f32 %v2286, %v2294
  %v2297 = vmul.f32 %v2295, %v2295
  %v2298 = vmul.f32 %v2296, %v2296
  %v2299 = vsel %vm1549, %v2297, 0.0
  %2300 = vadd.xlane.f32.xlu0 %v2299
  %v2301 = vpop.xlane.xlu0 %2300
  %v2302 = vsel %vm1553, %v2298, 0.0
  %2303 = vadd.xlane.f32.xlu0 %v2302
  %v2304 = vpop.xlane.xlu0 %2303
  %v2305 = vmul.f32 %v2301, %v1557
  %v2306 = vmul.f32 %v2304, %v1557
  %v2307 = vadd.f32 %v2305, 1e-05
  %v2308 = vadd.f32 %v2306, 1e-05
  %v2309 = vrsqrt.pop %v2307
  %v2310 = vrsqrt.pop %v2308
  %v2311 = vmul.f32 %v2295, %v2309
  %v2312 = vmul.f32 %v2296, %v2310
  %v2313 = vlaneseq
  %v2314 = vshrl.u32 %v2313, 7
  %v2315 = vsub.s32 2, %v2314
  %v2316 = vrot.slane %v1548, %v2315
  %v2317 = vmul.f32 %v2311, %v2316
  %v2318 = vmul.f32 %v2312, %v2316
  %v2319 = vlaneseq
  %v2320 = vshrl.u32 %v2319, 7
  %v2321 = vsub.s32 3, %v2320
  %v2322 = vrot.slane %v1548, %v2321
  %v2323 = vadd.f32 %v2317, %v2322
  %v2324 = vadd.f32 %v2318, %v2322
  %v2325 = vld [vmem:[%s12] sm:$0xff]
  %v2326 = vld [vmem:[%s12 + $0x8] sm:$0xff]
  %v2327 = vld [vmem:[%s12 + $0x10] sm:$0xff]
  %v2328 = vld [vmem:[%s12 + $0x18] sm:$0xff]
  %v2329 = vld [vmem:[%s12 + $0x20] sm:$0xff]
  %v2330 = vld [vmem:[%s12 + $0x28] sm:$0xff]
  %v2331 = vld [vmem:[%s12 + $0x30] sm:$0xff]
  %v2332 = vld [vmem:[%s12 + $0x38] sm:$0xff]
  %v2333 = vpack.c.bf16 %v2324, %v2323
  %v2334 = vpack.c.bf16 %v2326, %v2325
  %v2335 = vpack.c.bf16 %v2328, %v2327
  %v2336 = vpack.c.bf16 %v2330, %v2329
  %v2337 = vpack.c.bf16 %v2332, %v2331
  %v2338 = vld [vmem:[%s13] sm:$0x1]
  %v2340 = vlaneseq
  %v2341 = vshrl.u32 %v2340, 7
  %v2342 = vsub.s32 0, %v2341
  %v2343 = vrot.slane %v2338, %v2342
  %v2346 = vsel %vm1549, %v2333, 0
  %2348 = vmatprep.subr.bf16.mxu0 0
  %2349 = vmatpush1.bf16.msra.mxu0 %v2334
  %2350 = vmatprep.subr.bf16.mxu0 0
  %2351 = vmatpush1.bf16.msra.mxu0 %v2335
  %2352 = vmatprep.subr.bf16.mxu0 0
  %2353 = vmatpush1.bf16.msra.mxu0 %v2336
  %2354 = vmatprep.subr.bf16.mxu0 0
  %2355 = vmatpush1.bf16.msra.mxu0 %v2337
  %2356 = vmatprep.subr.bf16.mxu0 0
  %2357 = vmatpush1.bf16.msra.mxu0 0
  %2358 = vmatprep.subr.bf16.mxu0 0
  %2359 = vmatpush1.bf16.msra.mxu0 0
  %2360 = vmatprep.subr.bf16.mxu0 0
  %2361 = vmatpush1.bf16.msra.mxu0 0
  %2362 = vmatprep.subr.bf16.mxu0 0
  %2363 = vmatpush1.bf16.msra.mxu0 0
  %2364 = vmatprep.subr.bf16.mxu0 0
  %2365 = vmatpush1.bf16.msra.mxu0 0
  %2366 = vmatprep.subr.bf16.mxu0 0
  %2367 = vmatpush1.bf16.msra.mxu0 0
  %2368 = vmatprep.subr.bf16.mxu0 0
  %2369 = vmatpush1.bf16.msra.mxu0 0
  %2370 = vmatprep.subr.bf16.mxu0 0
  %2371 = vmatpush1.bf16.msra.mxu0 0
  %2372 = vmatprep.subr.bf16.mxu0 0
  %2373 = vmatpush1.bf16.msra.mxu0 0
  %2374 = vmatprep.subr.bf16.mxu0 0
  %2375 = vmatpush1.bf16.msra.mxu0 0
  %2376 = vmatprep.subr.bf16.mxu0 0
  %2377 = vmatpush1.bf16.msra.mxu0 0
  %2378 = vmatprep.subr.bf16.mxu0 0
  %2379 = vmatpush1.bf16.msra.mxu0 0
  %2380 = vmatprep.mubr.bf16.mxu0 0
  %2381 = vmatmul.mubr.bf16.gmra.mrb[0].mxu0 %v2346
  %v2382 = vpop.f32.mrb[0].mxu0
  %v2383 = vadd.f32 %v2343, %v2382
  %v2384 = vpop.f32.mrb[0].mxu0
  %v2385 = vpop.f32.mrb[0].mxu0
  %v2386 = vadd.f32 %v2343, %v2385
  %v2387 = vpop.f32.mrb[0].mxu0
  %2388 = vdwg.mxu0
  %v2389 = vmul.f32 %v2383, %v2383
  %v2390 = vmul.f32 %v2386, %v2386
  %v2391 = vmul.f32 %v2383, %v2389
  %v2392 = vmul.f32 %v2386, %v2390
  %v2393 = vmul.f32 %v2391, 0.044715
  %v2394 = vmul.f32 %v2392, 0.044715
  %v2395 = vadd.f32 %v2383, %v2393
  %v2396 = vadd.f32 %v2386, %v2394
  %v2397 = vmul.f32 %v2395, 0.7978846
  %v2398 = vmul.f32 %v2396, 0.7978846
  %v2399 = vtanh.pop %v2397
  %v2400 = vtanh.pop %v2398
  %v2401 = vadd.f32 %v2399, 1.0
  %v2402 = vadd.f32 %v2400, 1.0
  %v2403 = vmul.f32 %v2401, 0.5
  %v2404 = vmul.f32 %v2402, 0.5
  %v2405 = vmul.f32 %v2383, %v2403
  %v2406 = vmul.f32 %v2386, %v2404
  %v2407 = vld [vmem:[%s14] sm:$0xff]
  %v2408 = vld [vmem:[%s14 + $0x8] sm:$0xff]
  %v2409 = vld [vmem:[%s14 + $0x10] sm:$0xff]
  %v2410 = vld [vmem:[%s14 + $0x18] sm:$0xff]
  %v2411 = vpack.c.bf16 %v2406, %v2405
  %v2412 = vpack.c.bf16 %v2408, %v2407
  %v2413 = vpack.c.bf16 %v2410, %v2409
  %v2415 = vsel %vm2213, %v2411, 0
  %2417 = vmatprep.subr.bf16.mxu0 0
  %2418 = vmatpush1.bf16.msra.mxu0 %v2412
  %2419 = vmatprep.subr.bf16.mxu0 0
  %2420 = vmatpush1.bf16.msra.mxu0 %v2413
  %2421 = vmatprep.subr.bf16.mxu0 0
  %2422 = vmatpush1.bf16.msra.mxu0 0
  %2423 = vmatprep.subr.bf16.mxu0 0
  %2424 = vmatpush1.bf16.msra.mxu0 0
  %2425 = vmatprep.subr.bf16.mxu0 0
  %2426 = vmatpush1.bf16.msra.mxu0 0
  %2427 = vmatprep.subr.bf16.mxu0 0
  %2428 = vmatpush1.bf16.msra.mxu0 0
  %2429 = vmatprep.subr.bf16.mxu0 0
  %2430 = vmatpush1.bf16.msra.mxu0 0
  %2431 = vmatprep.subr.bf16.mxu0 0
  %2432 = vmatpush1.bf16.msra.mxu0 0
  %2433 = vmatprep.subr.bf16.mxu0 0
  %2434 = vmatpush1.bf16.msra.mxu0 0
  %2435 = vmatprep.subr.bf16.mxu0 0
  %2436 = vmatpush1.bf16.msra.mxu0 0
  %2437 = vmatprep.subr.bf16.mxu0 0
  %2438 = vmatpush1.bf16.msra.mxu0 0
  %2439 = vmatprep.subr.bf16.mxu0 0
  %2440 = vmatpush1.bf16.msra.mxu0 0
  %2441 = vmatprep.subr.bf16.mxu0 0
  %2442 = vmatpush1.bf16.msra.mxu0 0
  %2443 = vmatprep.subr.bf16.mxu0 0
  %2444 = vmatpush1.bf16.msra.mxu0 0
  %2445 = vmatprep.subr.bf16.mxu0 0
  %2446 = vmatpush1.bf16.msra.mxu0 0
  %2447 = vmatprep.subr.bf16.mxu0 0
  %2448 = vmatpush1.bf16.msra.mxu0 0
  %2449 = vmatprep.mubr.bf16.mxu0 0
  %2450 = vmatmul.mubr.bf16.gmra.mrb[0].mxu0 %v2415
  %v2451 = vpop.f32.mrb[0].mxu0
  %v2452 = vadd.f32 0.0, %v2451
  %v2453 = vpop.f32.mrb[0].mxu0
  %v2454 = vpop.f32.mrb[0].mxu0
  %v2455 = vadd.f32 0.0, %v2454
  %v2456 = vpop.f32.mrb[0].mxu0
  %2457 = vdwg.mxu0
  %v2458 = vadd.f32 %v2285, %v2452
  %v2459 = vadd.f32 %v2286, %v2455
  %v2460 = vld [vmem:[%s15] sm:$0x1]
  %v2462 = vlaneseq
  %v2463 = vshrl.u32 %v2462, 7
  %v2464 = vsub.s32 0, %v2463
  %v2465 = vrot.slane %v2460, %v2464
  %v2467 = vadd.f32 %v2458, %v2465
  %v2468 = vadd.f32 %v2459, %v2465
  %v2469 = vld [vmem:[%s5] sm:$0xf]
  %v2470 = vpack.c.bf16 %v2469, %v2469
  %v2471 = vpack.c.bf16 %v2468, %v2467
  %v2473 = vsel %vm1731, %v2470, 0
  %v2476 = vsel %vm1760, %v2471, 0
  %2478 = vmatprep.subr.bf16.mxu0 0
  %2479 = vmatpush1.bf16.msra.mxu0 %v2476
  %2480 = vmatprep.subr.bf16.mxu0 0
  %2481 = vmatpush1.bf16.msra.mxu0 0
  %2482 = vmatprep.subr.bf16.mxu0 0
  %2483 = vmatpush1.bf16.msra.mxu0 0
  %2484 = vmatprep.subr.bf16.mxu0 0
  %2485 = vmatpush1.bf16.msra.mxu0 0
  %2486 = vmatprep.subr.bf16.mxu0 0
  %2487 = vmatpush1.bf16.msra.mxu0 0
  %2488 = vmatprep.subr.bf16.mxu0 0
  %2489 = vmatpush1.bf16.msra.mxu0 0
  %2490 = vmatprep.subr.bf16.mxu0 0
  %2491 = vmatpush1.bf16.msra.mxu0 0
  %2492 = vmatprep.subr.bf16.mxu0 0
  %2493 = vmatpush1.bf16.msra.mxu0 0
  %2494 = vmatprep.subr.bf16.mxu0 0
  %2495 = vmatpush1.bf16.msra.mxu0 0
  %2496 = vmatprep.subr.bf16.mxu0 0
  %2497 = vmatpush1.bf16.msra.mxu0 0
  %2498 = vmatprep.subr.bf16.mxu0 0
  %2499 = vmatpush1.bf16.msra.mxu0 0
  %2500 = vmatprep.subr.bf16.mxu0 0
  %2501 = vmatpush1.bf16.msra.mxu0 0
  %2502 = vmatprep.subr.bf16.mxu0 0
  %2503 = vmatpush1.bf16.msra.mxu0 0
  %2504 = vmatprep.subr.bf16.mxu0 0
  %2505 = vmatpush1.bf16.msra.mxu0 0
  %2506 = vmatprep.subr.bf16.mxu0 0
  %2507 = vmatpush1.bf16.msra.mxu0 0
  %2508 = vmatprep.subr.bf16.mxu0 0
  %2509 = vmatpush1.bf16.msra.mxu0 0
  %2510 = vmatprep.mubr.bf16.mxu0 0
  %2511 = vmatmul.mubr.bf16.gmra.mrb[0].mxu0 %v2473
  %v2512 = vpop.f32.mrb[0].mxu0
  %v2513 = vadd.f32 0.0, %v2512
  %v2514 = vpop.f32.mrb[0].mxu0
  %v2515 = vpop.f32.mrb[0].mxu0
  %v2516 = vpop.f32.mrb[0].mxu0
  %2517 = vdwg.mxu0
  %v2518 = vmul.f32 %v2513, 0.16666667
  %2520 = vrot.lane.b32.xlu0 %v2513, 64
  %v2521 = vpop.permute.xlu0 %2520
  %v2523 = vsel %vm1549, %v1455, %v1462
  %v2524 = vsel %vm1549, %v1448, %v2521
  %v2525 = vld [vmem:[%s16] sm:$0xff]
  %v2526 = vld [vmem:[%s16 + $0x8] sm:$0xff]
  %v2527 = vld [vmem:[%s16 + $0x10] sm:$0xff]
  %v2528 = vld [vmem:[%s16 + $0x18] sm:$0xff]
  %v2529 = vld [vmem:[%s16 + $0x20] sm:$0xff]
  %v2530 = vld [vmem:[%s16 + $0x28] sm:$0xff]
  %v2531 = vld [vmem:[%s16 + $0x30] sm:$0xff]
  %v2532 = vld [vmem:[%s16 + $0x38] sm:$0xff]
  %v2533 = vld [vmem:[%s16 + $0x40] sm:$0xff]
  %v2534 = vld [vmem:[%s16 + $0x48] sm:$0xff]
  %v2535 = vld [vmem:[%s16 + $0x50] sm:$0xff]
  %v2536 = vld [vmem:[%s16 + $0x58] sm:$0xff]
  %v2537 = vld [vmem:[%s16 + $0x60] sm:$0xff]
  %v2538 = vld [vmem:[%s16 + $0x68] sm:$0xff]
  %v2539 = vld [vmem:[%s16 + $0x70] sm:$0xff]
  %v2540 = vld [vmem:[%s16 + $0x78] sm:$0xff]
  %v2541 = vld [vmem:[%s16 + $0x80] sm:$0xff]
  %v2542 = vld [vmem:[%s16 + $0x88] sm:$0xff]
  %v2543 = vld [vmem:[%s16 + $0x90] sm:$0xff]
  %v2544 = vld [vmem:[%s16 + $0x98] sm:$0xff]
  %v2545 = vld [vmem:[%s16 + $0xa0] sm:$0xff]
  %v2546 = vld [vmem:[%s16 + $0xa8] sm:$0xff]
  %v2547 = vld [vmem:[%s16 + $0xb0] sm:$0xff]
  %v2548 = vld [vmem:[%s16 + $0xb8] sm:$0xff]
  %v2549 = vld [vmem:[%s16 + $0xc0] sm:$0xff]
  %v2550 = vld [vmem:[%s16 + $0xc8] sm:$0xff]
  %v2551 = vld [vmem:[%s16 + $0xd0] sm:$0xff]
  %v2552 = vld [vmem:[%s16 + $0xd8] sm:$0xff]
  %v2553 = vld [vmem:[%s16 + $0xe0] sm:$0xff]
  %v2554 = vld [vmem:[%s16 + $0xe8] sm:$0xff]
  %v2555 = vld [vmem:[%s16 + $0xf0] sm:$0xff]
  %v2556 = vld [vmem:[%s16 + $0xf8] sm:$0xff]
  %v2557 = vpack.c.bf16 %v2523, %v2523
  %v2558 = vpack.c.bf16 %v2524, %v2524
  %v2559 = vpack.c.bf16 %v2526, %v2525
  %v2560 = vpack.c.bf16 %v2528, %v2527
  %v2561 = vpack.c.bf16 %v2530, %v2529
  %v2562 = vpack.c.bf16 %v2532, %v2531
  %v2563 = vpack.c.bf16 %v2534, %v2533
  %v2564 = vpack.c.bf16 %v2536, %v2535
  %v2565 = vpack.c.bf16 %v2538, %v2537
  %v2566 = vpack.c.bf16 %v2540, %v2539
  %v2567 = vpack.c.bf16 %v2542, %v2541
  %v2568 = vpack.c.bf16 %v2544, %v2543
  %v2569 = vpack.c.bf16 %v2546, %v2545
  %v2570 = vpack.c.bf16 %v2548, %v2547
  %v2571 = vpack.c.bf16 %v2550, %v2549
  %v2572 = vpack.c.bf16 %v2552, %v2551
  %v2573 = vpack.c.bf16 %v2554, %v2553
  %v2574 = vpack.c.bf16 %v2556, %v2555
  %v2575 = vld [vmem:[%s17] sm:$0x1]
  %v2577 = vlaneseq
  %v2578 = vshrl.u32 %v2577, 7
  %v2579 = vsub.s32 0, %v2578
  %v2580 = vrot.slane %v2575, %v2579
  %2582 = vmatprep.subr.bf16.mxu0 0
  %2583 = vmatpush1.bf16.msra.mxu0 %v2559
  %2584 = vmatprep.subr.bf16.mxu0 0
  %2585 = vmatpush1.bf16.msra.mxu0 %v2560
  %2586 = vmatprep.subr.bf16.mxu0 0
  %2587 = vmatpush1.bf16.msra.mxu0 %v2561
  %2588 = vmatprep.subr.bf16.mxu0 0
  %2589 = vmatpush1.bf16.msra.mxu0 %v2562
  %2590 = vmatprep.subr.bf16.mxu0 0
  %2591 = vmatpush1.bf16.msra.mxu0 %v2563
  %2592 = vmatprep.subr.bf16.mxu0 0
  %2593 = vmatpush1.bf16.msra.mxu0 %v2564
  %2594 = vmatprep.subr.bf16.mxu0 0
  %2595 = vmatpush1.bf16.msra.mxu0 %v2565
  %2596 = vmatprep.subr.bf16.mxu0 0
  %2597 = vmatpush1.bf16.msra.mxu0 %v2566
  %2598 = vmatprep.subr.bf16.mxu0 0
  %2599 = vmatpush1.bf16.msra.mxu0 %v2567
  %2600 = vmatprep.subr.bf16.mxu0 0
  %2601 = vmatpush1.bf16.msra.mxu0 %v2568
  %2602 = vmatprep.subr.bf16.mxu0 0
  %2603 = vmatpush1.bf16.msra.mxu0 %v2569
  %2604 = vmatprep.subr.bf16.mxu0 0
  %2605 = vmatpush1.bf16.msra.mxu0 %v2570
  %2606 = vmatprep.subr.bf16.mxu0 0
  %2607 = vmatpush1.bf16.msra.mxu0 %v2571
  %2608 = vmatprep.subr.bf16.mxu0 0
  %2609 = vmatpush1.bf16.msra.mxu0 %v2572
  %2610 = vmatprep.subr.bf16.mxu0 0
  %2611 = vmatpush1.bf16.msra.mxu0 %v2573
  %2612 = vmatprep.subr.bf16.mxu0 0
  %2613 = vmatpush1.bf16.msra.mxu0 %v2574
  %2614 = vmatprep.mubr.bf16.mxu0 %v2558
  %2615 = vmatmul.mubr.bf16.gmra.mrb[0].mxu0 %v2557
  %v2616 = vpop.f32.mrb[0].mxu0
  %v2617 = vadd.f32 %v2580, %v2616
  %v2618 = vpop.f32.mrb[0].mxu0
  %v2619 = vpop.f32.mrb[0].mxu0
  %v2620 = vpop.f32.mrb[0].mxu0
  %2621 = vdwg.mxu0
  %2622 = vst [vmem:[%s26] sm:$0x3] %v2617
  %v2623 = vld [vmem:[%s18] sm:$0xff]
  %v2624 = vld [vmem:[%s18 + $0x8] sm:$0xff]
  %v2625 = vld [vmem:[%s18 + $0x10] sm:$0xff]
  %v2626 = vld [vmem:[%s18 + $0x18] sm:$0xff]
  %v2627 = vld [vmem:[%s18 + $0x20] sm:$0xff]
  %v2628 = vld [vmem:[%s18 + $0x28] sm:$0xff]
  %v2629 = vld [vmem:[%s18 + $0x30] sm:$0xff]
  %v2630 = vld [vmem:[%s18 + $0x38] sm:$0xff]
  %v2631 = vld [vmem:[%s18 + $0x40] sm:$0xff]
  %v2632 = vld [vmem:[%s18 + $0x48] sm:$0xff]
  %v2633 = vld [vmem:[%s18 + $0x50] sm:$0xff]
  %v2634 = vld [vmem:[%s18 + $0x58] sm:$0xff]
  %v2635 = vld [vmem:[%s18 + $0x60] sm:$0xff]
  %v2636 = vld [vmem:[%s18 + $0x68] sm:$0xff]
  %v2637 = vld [vmem:[%s18 + $0x70] sm:$0xff]
  %v2638 = vld [vmem:[%s18 + $0x78] sm:$0xff]
  %v2639 = vld [vmem:[%s18 + $0x80] sm:$0xff]
  %v2640 = vld [vmem:[%s18 + $0x88] sm:$0xff]
  %v2641 = vld [vmem:[%s18 + $0x90] sm:$0xff]
  %v2642 = vld [vmem:[%s18 + $0x98] sm:$0xff]
  %v2643 = vld [vmem:[%s18 + $0xa0] sm:$0xff]
  %v2644 = vld [vmem:[%s18 + $0xa8] sm:$0xff]
  %v2645 = vld [vmem:[%s18 + $0xb0] sm:$0xff]
  %v2646 = vld [vmem:[%s18 + $0xb8] sm:$0xff]
  %v2647 = vld [vmem:[%s18 + $0xc0] sm:$0xff]
  %v2648 = vld [vmem:[%s18 + $0xc8] sm:$0xff]
  %v2649 = vld [vmem:[%s18 + $0xd0] sm:$0xff]
  %v2650 = vld [vmem:[%s18 + $0xd8] sm:$0xff]
  %v2651 = vld [vmem:[%s18 + $0xe0] sm:$0xff]
  %v2652 = vld [vmem:[%s18 + $0xe8] sm:$0xff]
  %v2653 = vld [vmem:[%s18 + $0xf0] sm:$0xff]
  %v2654 = vld [vmem:[%s18 + $0xf8] sm:$0xff]
  %v2655 = vld [vmem:[%s18 + $0x100] sm:$0xff]
  %v2656 = vld [vmem:[%s18 + $0x108] sm:$0xff]
  %v2657 = vld [vmem:[%s18 + $0x110] sm:$0xff]
  %v2658 = vld [vmem:[%s18 + $0x118] sm:$0xff]
  %v2659 = vld [vmem:[%s18 + $0x120] sm:$0xff]
  %v2660 = vld [vmem:[%s18 + $0x128] sm:$0xff]
  %v2661 = vld [vmem:[%s18 + $0x130] sm:$0xff]
  %v2662 = vld [vmem:[%s18 + $0x138] sm:$0xff]
  %v2663 = vld [vmem:[%s18 + $0x140] sm:$0xff]
  %v2664 = vld [vmem:[%s18 + $0x148] sm:$0xff]
  %v2665 = vld [vmem:[%s18 + $0x150] sm:$0xff]
  %v2666 = vld [vmem:[%s18 + $0x158] sm:$0xff]
  %v2667 = vld [vmem:[%s18 + $0x160] sm:$0xff]
  %v2668 = vld [vmem:[%s18 + $0x168] sm:$0xff]
  %v2669 = vld [vmem:[%s18 + $0x170] sm:$0xff]
  %v2670 = vld [vmem:[%s18 + $0x178] sm:$0xff]
  %v2671 = vld [vmem:[%s18 + $0x180] sm:$0xff]
  %v2672 = vld [vmem:[%s18 + $0x188] sm:$0xff]
  %v2673 = vld [vmem:[%s18 + $0x190] sm:$0xff]
  %v2674 = vld [vmem:[%s18 + $0x198] sm:$0xff]
  %v2675 = vld [vmem:[%s18 + $0x1a0] sm:$0xff]
  %v2676 = vld [vmem:[%s18 + $0x1a8] sm:$0xff]
  %v2677 = vld [vmem:[%s18 + $0x1b0] sm:$0xff]
  %v2678 = vld [vmem:[%s18 + $0x1b8] sm:$0xff]
  %v2679 = vld [vmem:[%s18 + $0x1c0] sm:$0xff]
  %v2680 = vld [vmem:[%s18 + $0x1c8] sm:$0xff]
  %v2681 = vld [vmem:[%s18 + $0x1d0] sm:$0xff]
  %v2682 = vld [vmem:[%s18 + $0x1d8] sm:$0xff]
  %v2683 = vld [vmem:[%s18 + $0x1e0] sm:$0xff]
  %v2684 = vld [vmem:[%s18 + $0x1e8] sm:$0xff]
  %v2685 = vld [vmem:[%s18 + $0x1f0] sm:$0xff]
  %v2686 = vld [vmem:[%s18 + $0x1f8] sm:$0xff]
  %v2687 = vld [vmem:[%s18 + $0x200] sm:$0xff]
  %v2688 = vld [vmem:[%s18 + $0x208] sm:$0xff]
  %v2689 = vld [vmem:[%s18 + $0x210] sm:$0xff]
  %v2690 = vld [vmem:[%s18 + $0x218] sm:$0xff]
  %v2691 = vld [vmem:[%s18 + $0x220] sm:$0xff]
  %v2692 = vld [vmem:[%s18 + $0x228] sm:$0xff]
  %v2693 = vld [vmem:[%s18 + $0x230] sm:$0xff]
  %v2694 = vld [vmem:[%s18 + $0x238] sm:$0xff]
  %v2695 = vpack.c.bf16 %v2513, %v2513
  %v2696 = vpack.c.bf16 %v2632, %v2623
  %v2697 = vpack.c.bf16 %v2633, %v2624
  %v2698 = vpack.c.bf16 %v2634, %v2625
  %v2699 = vpack.c.bf16 %v2635, %v2626
  %v2700 = vpack.c.bf16 %v2636, %v2627
  %v2701 = vpack.c.bf16 %v2637, %v2628
  %v2702 = vpack.c.bf16 %v2638, %v2629
  %v2703 = vpack.c.bf16 %v2639, %v2630
  %v2704 = vpack.c.bf16 %v2640, %v2631
  %v2705 = vpack.c.bf16 %v2650, %v2641
  %v2706 = vpack.c.bf16 %v2651, %v2642
  %v2707 = vpack.c.bf16 %v2652, %v2643
  %v2708 = vpack.c.bf16 %v2653, %v2644
  %v2709 = vpack.c.bf16 %v2654, %v2645
  %v2710 = vpack.c.bf16 %v2655, %v2646
  %v2711 = vpack.c.bf16 %v2656, %v2647
  %v2712 = vpack.c.bf16 %v2657, %v2648
  %v2713 = vpack.c.bf16 %v2658, %v2649
  %v2714 = vpack.c.bf16 %v2668, %v2659
  %v2715 = vpack.c.bf16 %v2669, %v2660
  %v2716 = vpack.c.bf16 %v2670, %v2661
  %v2717 = vpack.c.bf16 %v2671, %v2662
  %v2718 = vpack.c.bf16 %v2672, %v2663
  %v2719 = vpack.c.bf16 %v2673, %v2664
  %v2720 = vpack.c.bf16 %v2674, %v2665
  %v2721 = vpack.c.bf16 %v2675, %v2666
  %v2722 = vpack.c.bf16 %v2676, %v2667
  %v2723 = vpack.c.bf16 %v2686, %v2677
  %v2724 = vpack.c.bf16 %v2687, %v2678
  %v2725 = vpack.c.bf16 %v2688, %v2679
  %v2726 = vpack.c.bf16 %v2689, %v2680
  %v2727 = vpack.c.bf16 %v2690, %v2681
  %v2728 = vpack.c.bf16 %v2691, %v2682
  %v2729 = vpack.c.bf16 %v2692, %v2683
  %v2730 = vpack.c.bf16 %v2693, %v2684
  %v2731 = vpack.c.bf16 %v2694, %v2685
  %v2732 = vld [vmem:[%s19] sm:$0xff]
  %v2733 = vld [vmem:[%s19 + $0x8] sm:$0x1]
  %v2736 = vlaneseq
  %v2737 = vshrl.u32 %v2736, 7
  %v2738 = vsub.s32 0, %v2737
  %v2739 = vrot.slane %v2732, %v2738
  %v2740 = vlaneseq
  %v2741 = vshrl.u32 %v2740, 7
  %v2742 = vsub.s32 1, %v2741
  %v2743 = vrot.slane %v2732, %v2742
  %v2744 = vlaneseq
  %v2745 = vshrl.u32 %v2744, 7
  %v2746 = vsub.s32 2, %v2745
  %v2747 = vrot.slane %v2732, %v2746
  %v2748 = vlaneseq
  %v2749 = vshrl.u32 %v2748, 7
  %v2750 = vsub.s32 3, %v2749
  %v2751 = vrot.slane %v2732, %v2750
  %v2752 = vlaneseq
  %v2753 = vshrl.u32 %v2752, 7
  %v2754 = vsub.s32 4, %v2753
  %v2755 = vrot.slane %v2732, %v2754
  %v2756 = vlaneseq
  %v2757 = vshrl.u32 %v2756, 7
  %v2758 = vsub.s32 5, %v2757
  %v2759 = vrot.slane %v2732, %v2758
  %v2760 = vlaneseq
  %v2761 = vshrl.u32 %v2760, 7
  %v2762 = vsub.s32 6, %v2761
  %v2763 = vrot.slane %v2732, %v2762
  %v2764 = vlaneseq
  %v2765 = vshrl.u32 %v2764, 7
  %v2766 = vsub.s32 7, %v2765
  %v2767 = vrot.slane %v2732, %v2766
  %v2768 = vlaneseq
  %v2769 = vshrl.u32 %v2768, 7
  %v2770 = vsub.s32 0, %v2769
  %v2771 = vrot.slane %v2733, %v2770
  %v2782 = vsel %vm1549, %v2695, 0
  %2784 = vmatprep.subr.bf16.mxu0 %v2697
  %2785 = vmatpush1.bf16.msra.mxu0 %v2696
  %2786 = vmatprep.subr.bf16.mxu0 %v2706
  %2787 = vmatpush1.bf16.msra.mxu0 %v2705
  %2788 = vmatprep.subr.bf16.mxu0 %v2715
  %2789 = vmatpush1.bf16.msra.mxu0 %v2714
  %2790 = vmatprep.subr.bf16.mxu0 %v2724
  %2791 = vmatpush1.bf16.msra.mxu0 %v2723
  %2792 = vmatprep.subr.bf16.mxu0 0
  %2793 = vmatpush1.bf16.msra.mxu0 0
  %2794 = vmatprep.subr.bf16.mxu0 0
  %2795 = vmatpush1.bf16.msra.mxu0 0
  %2796 = vmatprep.subr.bf16.mxu0 0
  %2797 = vmatpush1.bf16.msra.mxu0 0
  %2798 = vmatprep.subr.bf16.mxu0 0
  %2799 = vmatpush1.bf16.msra.mxu0 0
  %2800 = vmatprep.subr.bf16.mxu0 0
  %2801 = vmatpush1.bf16.msra.mxu0 0
  %2802 = vmatprep.subr.bf16.mxu0 0
  %2803 = vmatpush1.bf16.msra.mxu0 0
  %2804 = vmatprep.subr.bf16.mxu0 0
  %2805 = vmatpush1.bf16.msra.mxu0 0
  %2806 = vmatprep.subr.bf16.mxu0 0
  %2807 = vmatpush1.bf16.msra.mxu0 0
  %2808 = vmatprep.subr.bf16.mxu0 0
  %2809 = vmatpush1.bf16.msra.mxu0 0
  %2810 = vmatprep.subr.bf16.mxu0 0
  %2811 = vmatpush1.bf16.msra.mxu0 0
  %2812 = vmatprep.subr.bf16.mxu0 0
  %2813 = vmatpush1.bf16.msra.mxu0 0
  %2814 = vmatprep.subr.bf16.mxu0 0
  %2815 = vmatpush1.bf16.msra.mxu0 0
  %2816 = vmatprep.mubr.bf16.mxu0 0
  %2817 = vmatmul.mubr.bf16.gmra.mrb[0].mxu0 %v2782
  %v2818 = vpop.f32.mrb[0].mxu0
  %v2819 = vadd.f32 %v2739, %v2818
  %v2820 = vpop.f32.mrb[0].mxu0
  %v2821 = vadd.f32 %v2743, %v2820
  %v2822 = vpop.f32.mrb[0].mxu0
  %v2823 = vpop.f32.mrb[0].mxu0
  %2824 = vdwg.mxu0
  %2825 = vmatprep.subr.bf16.mxu0 %v2699
  %2826 = vmatpush1.bf16.msra.mxu0 %v2698
  %2827 = vmatprep.subr.bf16.mxu0 %v2708
  %2828 = vmatpush1.bf16.msra.mxu0 %v2707
  %2829 = vmatprep.subr.bf16.mxu0 %v2717
  %2830 = vmatpush1.bf16.msra.mxu0 %v2716
  %2831 = vmatprep.subr.bf16.mxu0 %v2726
  %2832 = vmatpush1.bf16.msra.mxu0 %v2725
  %2833 = vmatprep.subr.bf16.mxu0 0
  %2834 = vmatpush1.bf16.msra.mxu0 0
  %2835 = vmatprep.subr.bf16.mxu0 0
  %2836 = vmatpush1.bf16.msra.mxu0 0
  %2837 = vmatprep.subr.bf16.mxu0 0
  %2838 = vmatpush1.bf16.msra.mxu0 0
  %2839 = vmatprep.subr.bf16.mxu0 0
  %2840 = vmatpush1.bf16.msra.mxu0 0
  %2841 = vmatprep.subr.bf16.mxu0 0
  %2842 = vmatpush1.bf16.msra.mxu0 0
  %2843 = vmatprep.subr.bf16.mxu0 0
  %2844 = vmatpush1.bf16.msra.mxu0 0
  %2845 = vmatprep.subr.bf16.mxu0 0
  %2846 = vmatpush1.bf16.msra.mxu0 0
  %2847 = vmatprep.subr.bf16.mxu0 0
  %2848 = vmatpush1.bf16.msra.mxu0 0
  %2849 = vmatprep.subr.bf16.mxu0 0
  %2850 = vmatpush1.bf16.msra.mxu0 0
  %2851 = vmatprep.subr.bf16.mxu0 0
  %2852 = vmatpush1.bf16.msra.mxu0 0
  %2853 = vmatprep.subr.bf16.mxu0 0
  %2854 = vmatpush1.bf16.msra.mxu0 0
  %2855 = vmatprep.subr.bf16.mxu0 0
  %2856 = vmatpush1.bf16.msra.mxu0 0
  %2857 = vmatprep.mubr.bf16.mxu0 0
  %2858 = vmatmul.mubr.bf16.gmra.mrb[0].mxu0 %v2782
  %v2859 = vpop.f32.mrb[0].mxu0
  %v2860 = vadd.f32 %v2747, %v2859
  %v2861 = vpop.f32.mrb[0].mxu0
  %v2862 = vadd.f32 %v2751, %v2861
  %v2863 = vpop.f32.mrb[0].mxu0
  %v2864 = vpop.f32.mrb[0].mxu0
  %2865 = vdwg.mxu0
  %2866 = vmatprep.subr.bf16.mxu0 %v2701
  %2867 = vmatpush1.bf16.msra.mxu0 %v2700
  %2868 = vmatprep.subr.bf16.mxu0 %v2710
  %2869 = vmatpush1.bf16.msra.mxu0 %v2709
  %2870 = vmatprep.subr.bf16.mxu0 %v2719
  %2871 = vmatpush1.bf16.msra.mxu0 %v2718
  %2872 = vmatprep.subr.bf16.mxu0 %v2728
  %2873 = vmatpush1.bf16.msra.mxu0 %v2727
  %2874 = vmatprep.subr.bf16.mxu0 0
  %2875 = vmatpush1.bf16.msra.mxu0 0
  %2876 = vmatprep.subr.bf16.mxu0 0
  %2877 = vmatpush1.bf16.msra.mxu0 0
  %2878 = vmatprep.subr.bf16.mxu0 0
  %2879 = vmatpush1.bf16.msra.mxu0 0
  %2880 = vmatprep.subr.bf16.mxu0 0
  %2881 = vmatpush1.bf16.msra.mxu0 0
  %2882 = vmatprep.subr.bf16.mxu0 0
  %2883 = vmatpush1.bf16.msra.mxu0 0
  %2884 = vmatprep.subr.bf16.mxu0 0
  %2885 = vmatpush1.bf16.msra.mxu0 0
  %2886 = vmatprep.subr.bf16.mxu0 0
  %2887 = vmatpush1.bf16.msra.mxu0 0
  %2888 = vmatprep.subr.bf16.mxu0 0
  %2889 = vmatpush1.bf16.msra.mxu0 0
  %2890 = vmatprep.subr.bf16.mxu0 0
  %2891 = vmatpush1.bf16.msra.mxu0 0
  %2892 = vmatprep.subr.bf16.mxu0 0
  %2893 = vmatpush1.bf16.msra.mxu0 0
  %2894 = vmatprep.subr.bf16.mxu0 0
  %2895 = vmatpush1.bf16.msra.mxu0 0
  %2896 = vmatprep.subr.bf16.mxu0 0
  %2897 = vmatpush1.bf16.msra.mxu0 0
  %2898 = vmatprep.mubr.bf16.mxu0 0
  %2899 = vmatmul.mubr.bf16.gmra.mrb[0].mxu0 %v2782
  %v2900 = vpop.f32.mrb[0].mxu0
  %v2901 = vadd.f32 %v2755, %v2900
  %v2902 = vpop.f32.mrb[0].mxu0
  %v2903 = vadd.f32 %v2759, %v2902
  %v2904 = vpop.f32.mrb[0].mxu0
  %v2905 = vpop.f32.mrb[0].mxu0
  %2906 = vdwg.mxu0
  %2907 = vmatprep.subr.bf16.mxu0 %v2703
  %2908 = vmatpush1.bf16.msra.mxu0 %v2702
  %2909 = vmatprep.subr.bf16.mxu0 %v2712
  %2910 = vmatpush1.bf16.msra.mxu0 %v2711
  %2911 = vmatprep.subr.bf16.mxu0 %v2721
  %2912 = vmatpush1.bf16.msra.mxu0 %v2720
  %2913 = vmatprep.subr.bf16.mxu0 %v2730
  %2914 = vmatpush1.bf16.msra.mxu0 %v2729
  %2915 = vmatprep.subr.bf16.mxu0 0
  %2916 = vmatpush1.bf16.msra.mxu0 0
  %2917 = vmatprep.subr.bf16.mxu0 0
  %2918 = vmatpush1.bf16.msra.mxu0 0
  %2919 = vmatprep.subr.bf16.mxu0 0
  %2920 = vmatpush1.bf16.msra.mxu0 0
  %2921 = vmatprep.subr.bf16.mxu0 0
  %2922 = vmatpush1.bf16.msra.mxu0 0
  %2923 = vmatprep.subr.bf16.mxu0 0
  %2924 = vmatpush1.bf16.msra.mxu0 0
  %2925 = vmatprep.subr.bf16.mxu0 0
  %2926 = vmatpush1.bf16.msra.mxu0 0
  %2927 = vmatprep.subr.bf16.mxu0 0
  %2928 = vmatpush1.bf16.msra.mxu0 0
  %2929 = vmatprep.subr.bf16.mxu0 0
  %2930 = vmatpush1.bf16.msra.mxu0 0
  %2931 = vmatprep.subr.bf16.mxu0 0
  %2932 = vmatpush1.bf16.msra.mxu0 0
  %2933 = vmatprep.subr.bf16.mxu0 0
  %2934 = vmatpush1.bf16.msra.mxu0 0
  %2935 = vmatprep.subr.bf16.mxu0 0
  %2936 = vmatpush1.bf16.msra.mxu0 0
  %2937 = vmatprep.subr.bf16.mxu0 0
  %2938 = vmatpush1.bf16.msra.mxu0 0
  %2939 = vmatprep.mubr.bf16.mxu0 0
  %2940 = vmatmul.mubr.bf16.gmra.mrb[0].mxu0 %v2782
  %v2941 = vpop.f32.mrb[0].mxu0
  %v2942 = vadd.f32 %v2763, %v2941
  %v2943 = vpop.f32.mrb[0].mxu0
  %v2944 = vadd.f32 %v2767, %v2943
  %v2945 = vpop.f32.mrb[0].mxu0
  %v2946 = vpop.f32.mrb[0].mxu0
  %2947 = vdwg.mxu0
  %2948 = vmatprep.subr.bf16.mxu0 0
  %2949 = vmatpush1.bf16.msra.mxu0 %v2704
  %2950 = vmatprep.subr.bf16.mxu0 0
  %2951 = vmatpush1.bf16.msra.mxu0 %v2713
  %2952 = vmatprep.subr.bf16.mxu0 0
  %2953 = vmatpush1.bf16.msra.mxu0 %v2722
  %2954 = vmatprep.subr.bf16.mxu0 0
  %2955 = vmatpush1.bf16.msra.mxu0 %v2731
  %2956 = vmatprep.subr.bf16.mxu0 0
  %2957 = vmatpush1.bf16.msra.mxu0 0
  %2958 = vmatprep.subr.bf16.mxu0 0
  %2959 = vmatpush1.bf16.msra.mxu0 0
  %2960 = vmatprep.subr.bf16.mxu0 0
  %2961 = vmatpush1.bf16.msra.mxu0 0
  %2962 = vmatprep.subr.bf16.mxu0 0
  %2963 = vmatpush1.bf16.msra.mxu0 0
  %2964 = vmatprep.subr.bf16.mxu0 0
  %2965 = vmatpush1.bf16.msra.mxu0 0
  %2966 = vmatprep.subr.bf16.mxu0 0
  %2967 = vmatpush1.bf16.msra.mxu0 0
  %2968 = vmatprep.subr.bf16.mxu0 0
  %2969 = vmatpush1.bf16.msra.mxu0 0
  %2970 = vmatprep.subr.bf16.mxu0 0
  %2971 = vmatpush1.bf16.msra.mxu0 0
  %2972 = vmatprep.subr.bf16.mxu0 0
  %2973 = vmatpush1.bf16.msra.mxu0 0
  %2974 = vmatprep.subr.bf16.mxu0 0
  %2975 = vmatpush1.bf16.msra.mxu0 0
  %2976 = vmatprep.subr.bf16.mxu0 0
  %2977 = vmatpush1.bf16.msra.mxu0 0
  %2978 = vmatprep.subr.bf16.mxu0 0
  %2979 = vmatpush1.bf16.msra.mxu0 0
  %2980 = vmatprep.mubr.bf16.mxu0 0
  %2981 = vmatmul.mubr.bf16.gmra.mrb[0].mxu0 %v2782
  %v2982 = vpop.f32.mrb[0].mxu0
  %v2983 = vadd.f32 %v2771, %v2982
  %v2984 = vpop.f32.mrb[0].mxu0
  %v2985 = vpop.f32.mrb[0].mxu0
  %v2986 = vpop.f32.mrb[0].mxu0
  %2987 = vdwg.mxu0
  %v2988 = vsub.f32 %v2819, %v676
  %v2989 = vsub.f32 %v2821, %v684
  %v2990 = vsub.f32 %v2860, %v683
  %v2991 = vsub.f32 %v2862, %v685
  %v2992 = vsub.f32 %v2901, %v693
  %v2993 = vsub.f32 %v2903, %v701
  %v2994 = vsub.f32 %v2942, %v700
  %v2995 = vsub.f32 %v2944, %v702
  %v2996 = vsub.f32 %v2983, %v709
  %v2997 = vmul.f32 %v2988, %v2988
  %v2998 = vmul.f32 %v2989, %v2989
  %v2999 = vmul.f32 %v2990, %v2990
  %v3000 = vmul.f32 %v2991, %v2991
  %v3001 = vmul.f32 %v2992, %v2992
  %v3002 = vmul.f32 %v2993, %v2993
  %v3003 = vmul.f32 %v2994, %v2994
  %v3004 = vmul.f32 %v2995, %v2995
  %v3005 = vmul.f32 %v2996, %v2996
  %v3006 = vld [vmem:[%s20] sm:$0xff]
  %v3007 = vld [vmem:[%s20 + $0x8] sm:$0x1]
  %v3010 = vlaneseq
  %v3011 = vshrl.u32 %v3010, 7
  %v3012 = vsub.s32 0, %v3011
  %v3013 = vrot.slane %v3006, %v3012
  %v3014 = vlaneseq
  %v3015 = vshrl.u32 %v3014, 7
  %v3016 = vsub.s32 1, %v3015
  %v3017 = vrot.slane %v3006, %v3016
  %v3018 = vlaneseq
  %v3019 = vshrl.u32 %v3018, 7
  %v3020 = vsub.s32 2, %v3019
  %v3021 = vrot.slane %v3006, %v3020
  %v3022 = vlaneseq
  %v3023 = vshrl.u32 %v3022, 7
  %v3024 = vsub.s32 3, %v3023
  %v3025 = vrot.slane %v3006, %v3024
  %v3026 = vlaneseq
  %v3027 = vshrl.u32 %v3026, 7
  %v3028 = vsub.s32 4, %v3027
  %v3029 = vrot.slane %v3006, %v3028
  %v3030 = vlaneseq
  %v3031 = vshrl.u32 %v3030, 7
  %v3032 = vsub.s32 5, %v3031
  %v3033 = vrot.slane %v3006, %v3032
  %v3034 = vlaneseq
  %v3035 = vshrl.u32 %v3034, 7
  %v3036 = vsub.s32 6, %v3035
  %v3037 = vrot.slane %v3006, %v3036
  %v3038 = vlaneseq
  %v3039 = vshrl.u32 %v3038, 7
  %v3040 = vsub.s32 7, %v3039
  %v3041 = vrot.slane %v3006, %v3040
  %v3042 = vlaneseq
  %v3043 = vshrl.u32 %v3042, 7
  %v3044 = vsub.s32 0, %v3043
  %v3045 = vrot.slane %v3007, %v3044
  %v3055 = vmul.f32 %v2997, %v3013
  %v3056 = vmul.f32 %v2998, %v3017
  %v3057 = vmul.f32 %v2999, %v3021
  %v3058 = vmul.f32 %v3000, %v3025
  %v3059 = vmul.f32 %v3001, %v3029
  %v3060 = vmul.f32 %v3002, %v3033
  %v3061 = vmul.f32 %v3003, %v3037
  %v3062 = vmul.f32 %v3004, %v3041
  %v3063 = vmul.f32 %v3005, %v3045
  %vm3064 = vcmask 1041408
  %v3065 = vsel %vm3064, %v3055, 0.0
  %v3066 = vsel %vm3064, %v3056, 0.0
  %v3067 = vadd.f32 %v3065, %v3066
  %v3068 = vsel %vm3064, %v3057, 0.0
  %v3069 = vadd.f32 %v3067, %v3068
  %v3070 = vsel %vm3064, %v3058, 0.0
  %v3071 = vadd.f32 %v3069, %v3070
  %v3072 = vsel %vm3064, %v3059, 0.0
  %v3073 = vadd.f32 %v3071, %v3072
  %v3074 = vsel %vm3064, %v3060, 0.0
  %v3075 = vadd.f32 %v3073, %v3074
  %v3076 = vsel %vm3064, %v3061, 0.0
  %v3077 = vadd.f32 %v3075, %v3076
  %v3078 = vsel %vm3064, %v3062, 0.0
  %v3079 = vadd.f32 %v3077, %v3078
  %v3080 = vsel %vm3064, %v3063, 0.0
  %v3081 = vadd.f32 %v3079, %v3080
  %3082 = vadd.xlane.f32.xlu0 %v3081
  %v3083 = vpop.xlane.xlu0 %3082
  %v3084 = vrot.slane %v3083, 4
  %v3085 = vadd.f32 %v3083, %v3084
  %v3086 = vrot.slane %v3085, 2
  %v3087 = vadd.f32 %v3085, %v3086
  %v3088 = vrot.slane %v3087, 1
  %v3089 = vadd.f32 %v3087, %v3088
  %s3090 = vtos %v3089
  %v3091 = vld [vmem:[%s6] sm:$0x3]
  %v3092 = vpack.c.bf16 %v3091, %v3091
  %v3093 = vpack.c.bf16 %v1462, %v1462
  %3095 = vrot.lane.b32.xlu0 %v3093, 64
  %v3096 = vpop.permute.xlu0 %3095
  %vm3097 = vcmask 15360
  %v3099 = vsel %vm3097, %v3092, 0
  %vm3101 = vcmask 1040384
  %v3103 = vsel %vm3101, %v3096, 0
  %3105 = vmatprep.subr.bf16.mxu0 0
  %3106 = vmatpush1.bf16.msra.mxu0 %v3103
  %3107 = vmatprep.subr.bf16.mxu0 0
  %3108 = vmatpush1.bf16.msra.mxu0 0
  %3109 = vmatprep.subr.bf16.mxu0 0
  %3110 = vmatpush1.bf16.msra.mxu0 0
  %3111 = vmatprep.subr.bf16.mxu0 0
  %3112 = vmatpush1.bf16.msra.mxu0 0
  %3113 = vmatprep.subr.bf16.mxu0 0
  %3114 = vmatpush1.bf16.msra.mxu0 0
  %3115 = vmatprep.subr.bf16.mxu0 0
  %3116 = vmatpush1.bf16.msra.mxu0 0
  %3117 = vmatprep.subr.bf16.mxu0 0
  %3118 = vmatpush1.bf16.msra.mxu0 0
  %3119 = vmatprep.subr.bf16.mxu0 0
  %3120 = vmatpush1.bf16.msra.mxu0 0
  %3121 = vmatprep.subr.bf16.mxu0 0
  %3122 = vmatpush1.bf16.msra.mxu0 0
  %3123 = vmatprep.subr.bf16.mxu0 0
  %3124 = vmatpush1.bf16.msra.mxu0 0
  %3125 = vmatprep.subr.bf16.mxu0 0
  %3126 = vmatpush1.bf16.msra.mxu0 0
  %3127 = vmatprep.subr.bf16.mxu0 0
  %3128 = vmatpush1.bf16.msra.mxu0 0
  %3129 = vmatprep.subr.bf16.mxu0 0
  %3130 = vmatpush1.bf16.msra.mxu0 0
  %3131 = vmatprep.subr.bf16.mxu0 0
  %3132 = vmatpush1.bf16.msra.mxu0 0
  %3133 = vmatprep.subr.bf16.mxu0 0
  %3134 = vmatpush1.bf16.msra.mxu0 0
  %3135 = vmatprep.subr.bf16.mxu0 0
  %3136 = vmatpush1.bf16.msra.mxu0 0
  %3137 = vmatprep.mubr.bf16.mxu0 0
  %3138 = vmatmul.mubr.bf16.gmra.mrb[0].mxu0 %v3099
  %v3139 = vpop.f32.mrb[0].mxu0
  %v3140 = vadd.f32 0.0, %v3139
  %v3141 = vpop.f32.mrb[0].mxu0
  %v3142 = vpop.f32.mrb[0].mxu0
  %v3143 = vpop.f32.mrb[0].mxu0
  %3144 = vdwg.mxu0
  %v3145 = vpack.c.bf16 %v2518, %v2518
  %v3147 = vrot.slane %v3145, 1
  %v3149 = vsel %vm3101, %v3147, 0
  %3151 = vmatprep.subr.bf16.mxu0 0
  %3152 = vmatpush1.bf16.msra.mxu0 %v3149
  %3153 = vmatprep.subr.bf16.mxu0 0
  %3154 = vmatpush1.bf16.msra.mxu0 0
  %3155 = vmatprep.subr.bf16.mxu0 0
  %3156 = vmatpush1.bf16.msra.mxu0 0
  %3157 = vmatprep.subr.bf16.mxu0 0
  %3158 = vmatpush1.bf16.msra.mxu0 0
  %3159 = vmatprep.subr.bf16.mxu0 0
  %3160 = vmatpush1.bf16.msra.mxu0 0
  %3161 = vmatprep.subr.bf16.mxu0 0
  %3162 = vmatpush1.bf16.msra.mxu0 0
  %3163 = vmatprep.subr.bf16.mxu0 0
  %3164 = vmatpush1.bf16.msra.mxu0 0
  %3165 = vmatprep.subr.bf16.mxu0 0
  %3166 = vmatpush1.bf16.msra.mxu0 0
  %3167 = vmatprep.subr.bf16.mxu0 0
  %3168 = vmatpush1.bf16.msra.mxu0 0
  %3169 = vmatprep.subr.bf16.mxu0 0
  %3170 = vmatpush1.bf16.msra.mxu0 0
  %3171 = vmatprep.subr.bf16.mxu0 0
  %3172 = vmatpush1.bf16.msra.mxu0 0
  %3173 = vmatprep.subr.bf16.mxu0 0
  %3174 = vmatpush1.bf16.msra.mxu0 0
  %3175 = vmatprep.subr.bf16.mxu0 0
  %3176 = vmatpush1.bf16.msra.mxu0 0
  %3177 = vmatprep.subr.bf16.mxu0 0
  %3178 = vmatpush1.bf16.msra.mxu0 0
  %3179 = vmatprep.subr.bf16.mxu0 0
  %3180 = vmatpush1.bf16.msra.mxu0 0
  %3181 = vmatprep.subr.bf16.mxu0 0
  %3182 = vmatpush1.bf16.msra.mxu0 0
  %3183 = vmatprep.mubr.bf16.mxu0 0
  %3184 = vmatmul.mubr.bf16.gmra.mrb[0].mxu0 %v3099
  %v3185 = vpop.f32.mrb[0].mxu0
  %v3186 = vadd.f32 0.0, %v3185
  %v3187 = vpop.f32.mrb[0].mxu0
  %v3188 = vpop.f32.mrb[0].mxu0
  %v3189 = vpop.f32.mrb[0].mxu0
  %3190 = vdwg.mxu0
  %v3191 = vld [vmem:[%s25] sm:$0x1]
  %v3192 = vld [vmem:[%s21] sm:$0xff]
  %v3193 = vld [vmem:[%s21 + $0x8] sm:$0xff]
  %v3194 = vld [vmem:[%s21 + $0x10] sm:$0xff]
  %v3195 = vld [vmem:[%s21 + $0x18] sm:$0xff]
  %v3196 = vld [vmem:[%s21 + $0x20] sm:$0xff]
  %v3197 = vld [vmem:[%s21 + $0x28] sm:$0xff]
  %v3198 = vld [vmem:[%s21 + $0x30] sm:$0xff]
  %v3199 = vld [vmem:[%s21 + $0x38] sm:$0xff]
  %v3200 = vld [vmem:[%s21 + $0x40] sm:$0xff]
  %v3201 = vld [vmem:[%s21 + $0x48] sm:$0xff]
  %v3202 = vld [vmem:[%s21 + $0x50] sm:$0xff]
  %v3203 = vld [vmem:[%s21 + $0x58] sm:$0xff]
  %v3204 = vld [vmem:[%s21 + $0x60] sm:$0xff]
  %v3205 = vld [vmem:[%s21 + $0x68] sm:$0xff]
  %v3206 = vld [vmem:[%s21 + $0x70] sm:$0xff]
  %v3207 = vld [vmem:[%s21 + $0x78] sm:$0xff]
  %v3208 = vld [vmem:[%s22] sm:$0x1]
  %v3209 = vld [vmem:[%s23] sm:$0x1]
  %v3210 = vld [vmem:[%s24] sm:$0x1]
  %v3211 = vpack.c.bf16 %v1455, %v1455
  %v3212 = vpack.c.bf16 %v3193, %v3192
  %v3213 = vpack.c.bf16 %v3195, %v3194
  %v3214 = vpack.c.bf16 %v3197, %v3196
  %v3215 = vpack.c.bf16 %v3199, %v3198
  %v3217 = vsel %vm1549, %v3211, 0
  %3219 = vmatprep.subr.bf16.mxu0 0
  %3220 = vmatpush1.bf16.msra.mxu0 %v3212
  %3221 = vmatprep.subr.bf16.mxu0 0
  %3222 = vmatpush1.bf16.msra.mxu0 %v3213
  %3223 = vmatprep.subr.bf16.mxu0 0
  %3224 = vmatpush1.bf16.msra.mxu0 %v3214
  %3225 = vmatprep.subr.bf16.mxu0 0
  %3226 = vmatpush1.bf16.msra.mxu0 %v3215
  %3227 = vmatprep.subr.bf16.mxu0 0
  %3228 = vmatpush1.bf16.msra.mxu0 0
  %3229 = vmatprep.subr.bf16.mxu0 0
  %3230 = vmatpush1.bf16.msra.mxu0 0
  %3231 = vmatprep.subr.bf16.mxu0 0
  %3232 = vmatpush1.bf16.msra.mxu0 0
  %3233 = vmatprep.subr.bf16.mxu0 0
  %3234 = vmatpush1.bf16.msra.mxu0 0
  %3235 = vmatprep.subr.bf16.mxu0 0
  %3236 = vmatpush1.bf16.msra.mxu0 0
  %3237 = vmatprep.subr.bf16.mxu0 0
  %3238 = vmatpush1.bf16.msra.mxu0 0
  %3239 = vmatprep.subr.bf16.mxu0 0
  %3240 = vmatpush1.bf16.msra.mxu0 0
  %3241 = vmatprep.subr.bf16.mxu0 0
  %3242 = vmatpush1.bf16.msra.mxu0 0
  %3243 = vmatprep.subr.bf16.mxu0 0
  %3244 = vmatpush1.bf16.msra.mxu0 0
  %3245 = vmatprep.subr.bf16.mxu0 0
  %3246 = vmatpush1.bf16.msra.mxu0 0
  %3247 = vmatprep.subr.bf16.mxu0 0
  %3248 = vmatpush1.bf16.msra.mxu0 0
  %3249 = vmatprep.subr.bf16.mxu0 0
  %3250 = vmatpush1.bf16.msra.mxu0 0
  %3251 = vmatprep.mubr.bf16.mxu0 0
  %3252 = vmatmul.mubr.bf16.gmra.mrb[0].mxu0 %v3217
  %v3253 = vpop.f32.mrb[0].mxu0
  %v3254 = vadd.f32 0.0, %v3253
  %v3255 = vpop.f32.mrb[0].mxu0
  %v3256 = vpop.f32.mrb[0].mxu0
  %v3257 = vpop.f32.mrb[0].mxu0
  %3258 = vdwg.mxu0
  %v3259 = vpack.c.bf16 %v3201, %v3200
  %v3260 = vpack.c.bf16 %v3203, %v3202
  %v3261 = vpack.c.bf16 %v3205, %v3204
  %v3262 = vpack.c.bf16 %v3207, %v3206
  %v3263 = vsel %vm1549, %v3096, 0
  %3265 = vmatprep.subr.bf16.mxu0 0
  %3266 = vmatpush1.bf16.msra.mxu0 %v3259
  %3267 = vmatprep.subr.bf16.mxu0 0
  %3268 = vmatpush1.bf16.msra.mxu0 %v3260
  %3269 = vmatprep.subr.bf16.mxu0 0
  %3270 = vmatpush1.bf16.msra.mxu0 %v3261
  %3271 = vmatprep.subr.bf16.mxu0 0
  %3272 = vmatpush1.bf16.msra.mxu0 %v3262
  %3273 = vmatprep.subr.bf16.mxu0 0
  %3274 = vmatpush1.bf16.msra.mxu0 0
  %3275 = vmatprep.subr.bf16.mxu0 0
  %3276 = vmatpush1.bf16.msra.mxu0 0
  %3277 = vmatprep.subr.bf16.mxu0 0
  %3278 = vmatpush1.bf16.msra.mxu0 0
  %3279 = vmatprep.subr.bf16.mxu0 0
  %3280 = vmatpush1.bf16.msra.mxu0 0
  %3281 = vmatprep.subr.bf16.mxu0 0
  %3282 = vmatpush1.bf16.msra.mxu0 0
  %3283 = vmatprep.subr.bf16.mxu0 0
  %3284 = vmatpush1.bf16.msra.mxu0 0
  %3285 = vmatprep.subr.bf16.mxu0 0
  %3286 = vmatpush1.bf16.msra.mxu0 0
  %3287 = vmatprep.subr.bf16.mxu0 0
  %3288 = vmatpush1.bf16.msra.mxu0 0
  %3289 = vmatprep.subr.bf16.mxu0 0
  %3290 = vmatpush1.bf16.msra.mxu0 0
  %3291 = vmatprep.subr.bf16.mxu0 0
  %3292 = vmatpush1.bf16.msra.mxu0 0
  %3293 = vmatprep.subr.bf16.mxu0 0
  %3294 = vmatpush1.bf16.msra.mxu0 0
  %3295 = vmatprep.subr.bf16.mxu0 0
  %3296 = vmatpush1.bf16.msra.mxu0 0
  %3297 = vmatprep.mubr.bf16.mxu0 0
  %3298 = vmatmul.mubr.bf16.gmra.mrb[0].mxu0 %v3263
  %v3299 = vpop.f32.mrb[0].mxu0
  %v3300 = vadd.f32 0.0, %v3299
  %v3301 = vpop.f32.mrb[0].mxu0
  %v3302 = vpop.f32.mrb[0].mxu0
  %v3303 = vpop.f32.mrb[0].mxu0
  %3304 = vdwg.mxu0
  %v3305 = vadd.f32 %v3254, %v3300
  %v3306 = vlaneseq
  %v3307 = vshrl.u32 %v3306, 7
  %v3308 = vsub.s32 0, %v3307
  %v3309 = vrot.slane %v3208, %v3308
  %v3310 = vadd.f32 %v3305, %v3309
  %v3311 = vmax.f32 %v3310, 0.0
  %v3312 = vlaneseq
  %v3313 = vshrl.u32 %v3312, 7
  %v3314 = vsub.s32 0, %v3313
  %v3315 = vrot.slane %v3209, %v3314
  %v3316 = vmul.f32 %v3311, %v3315
  %vm3317 = vcmask 517120
  %v3318 = vsel %vm3317, %v3316, 0.0
  %3319 = vadd.xlane.f32.xlu0 %v3318
  %v3320 = vpop.xlane.xlu0 %3319
  %v3321 = vlaneseq
  %v3322 = vshrl.u32 %v3321, 7
  %v3323 = vsub.s32 0, %v3322
  %v3324 = vrot.slane %v3210, %v3323
  %v3325 = vadd.f32 %v3320, %v3324
  %v3326 = vpack.c.bf16 %v3140, %v3140
  %v3328 = vsel %vm1549, %v3326, 0
  %3330 = vmatprep.subr.bf16.mxu0 0
  %3331 = vmatpush1.bf16.msra.mxu0 %v3259
  %3332 = vmatprep.subr.bf16.mxu0 0
  %3333 = vmatpush1.bf16.msra.mxu0 %v3260
  %3334 = vmatprep.subr.bf16.mxu0 0
  %3335 = vmatpush1.bf16.msra.mxu0 %v3261
  %3336 = vmatprep.subr.bf16.mxu0 0
  %3337 = vmatpush1.bf16.msra.mxu0 %v3262
  %3338 = vmatprep.subr.bf16.mxu0 0
  %3339 = vmatpush1.bf16.msra.mxu0 0
  %3340 = vmatprep.subr.bf16.mxu0 0
  %3341 = vmatpush1.bf16.msra.mxu0 0
  %3342 = vmatprep.subr.bf16.mxu0 0
  %3343 = vmatpush1.bf16.msra.mxu0 0
  %3344 = vmatprep.subr.bf16.mxu0 0
  %3345 = vmatpush1.bf16.msra.mxu0 0
  %3346 = vmatprep.subr.bf16.mxu0 0
  %3347 = vmatpush1.bf16.msra.mxu0 0
  %3348 = vmatprep.subr.bf16.mxu0 0
  %3349 = vmatpush1.bf16.msra.mxu0 0
  %3350 = vmatprep.subr.bf16.mxu0 0
  %3351 = vmatpush1.bf16.msra.mxu0 0
  %3352 = vmatprep.subr.bf16.mxu0 0
  %3353 = vmatpush1.bf16.msra.mxu0 0
  %3354 = vmatprep.subr.bf16.mxu0 0
  %3355 = vmatpush1.bf16.msra.mxu0 0
  %3356 = vmatprep.subr.bf16.mxu0 0
  %3357 = vmatpush1.bf16.msra.mxu0 0
  %3358 = vmatprep.subr.bf16.mxu0 0
  %3359 = vmatpush1.bf16.msra.mxu0 0
  %3360 = vmatprep.subr.bf16.mxu0 0
  %3361 = vmatpush1.bf16.msra.mxu0 0
  %3362 = vmatprep.mubr.bf16.mxu0 0
  %3363 = vmatmul.mubr.bf16.gmra.mrb[0].mxu0 %v3328
  %v3364 = vpop.f32.mrb[0].mxu0
  %v3365 = vadd.f32 0.0, %v3364
  %v3366 = vpop.f32.mrb[0].mxu0
  %v3367 = vpop.f32.mrb[0].mxu0
  %v3368 = vpop.f32.mrb[0].mxu0
  %3369 = vdwg.mxu0
  %v3370 = vadd.f32 %v3254, %v3365
  %v3371 = vadd.f32 %v3370, %v3309
  %v3372 = vmax.f32 %v3371, 0.0
  %v3373 = vmul.f32 %v3372, %v3315
  %v3374 = vsel %vm3317, %v3373, 0.0
  %3375 = vadd.xlane.f32.xlu0 %v3374
  %v3376 = vpop.xlane.xlu0 %3375
  %v3377 = vadd.f32 %v3376, %v3324
  %vm3378 = vcmask 1024
  %v3379 = vsel %vm3378, %v3325, 0.0
  %v3380 = vrot.slane %v3379, 4
  %v3381 = vadd.f32 %v3379, %v3380
  %v3382 = vrot.slane %v3381, 2
  %v3383 = vadd.f32 %v3381, %v3382
  %v3384 = vrot.slane %v3383, 1
  %v3385 = vadd.f32 %v3383, %v3384
  %v3386 = vrcp.pop 2.0
  %v3387 = vmul.f32 %v3385, %v3386
  %v3388 = vmul.f32 %v3377, 1.442695
  %v3389 = vpow.pop %v3388
  %v3390 = vsel %vm3378, %v3389, 0.0
  %v3391 = vrot.slane %v3390, 4
  %v3392 = vadd.f32 %v3390, %v3391
  %v3393 = vrot.slane %v3392, 2
  %v3394 = vadd.f32 %v3392, %v3393
  %v3395 = vrot.slane %v3394, 1
  %v3396 = vadd.f32 %v3394, %v3395
  %v3397 = vmul.f32 %v3396, %v3386
  %v3398 = vadd.f32 %v3397, 1e-08
  %v3399 = vlog2.pop %v3398
  %v3400 = vmul.f32 %v3399, 0.6931472
  %v3401 = vsub.f32 %v3387, %v3400
  %s3402 = scalar_lea.vmem %s21, 128
  %v3403 = vld [vmem:[%s3402] sm:$0xff]
  %v3404 = vld [vmem:[%s3402 + $0x8] sm:$0xff]
  %v3405 = vld [vmem:[%s3402 + $0x10] sm:$0xff]
  %v3406 = vld [vmem:[%s3402 + $0x18] sm:$0xff]
  %v3407 = vld [vmem:[%s3402 + $0x20] sm:$0xff]
  %v3408 = vld [vmem:[%s3402 + $0x28] sm:$0xff]
  %v3409 = vld [vmem:[%s3402 + $0x30] sm:$0xff]
  %v3410 = vld [vmem:[%s3402 + $0x38] sm:$0xff]
  %v3411 = vld [vmem:[%s3402 + $0x40] sm:$0xff]
  %v3412 = vld [vmem:[%s3402 + $0x48] sm:$0xff]
  %v3413 = vld [vmem:[%s3402 + $0x50] sm:$0xff]
  %v3414 = vld [vmem:[%s3402 + $0x58] sm:$0xff]
  %v3415 = vld [vmem:[%s3402 + $0x60] sm:$0xff]
  %v3416 = vld [vmem:[%s3402 + $0x68] sm:$0xff]
  %v3417 = vld [vmem:[%s3402 + $0x70] sm:$0xff]
  %v3418 = vld [vmem:[%s3402 + $0x78] sm:$0xff]
  %v3419 = vld [vmem:[%s22 + $0x1] sm:$0x1]
  %v3420 = vld [vmem:[%s23 + $0x1] sm:$0x1]
  %v3421 = vld [vmem:[%s24 + $0x1] sm:$0x1]
  %v3422 = vpack.c.bf16 %v3404, %v3403
  %v3423 = vpack.c.bf16 %v3406, %v3405
  %v3424 = vpack.c.bf16 %v3408, %v3407
  %v3425 = vpack.c.bf16 %v3410, %v3409
  %v3426 = vsel %vm1549, %v3147, 0
  %3428 = vmatprep.subr.bf16.mxu0 0
  %3429 = vmatpush1.bf16.msra.mxu0 %v3422
  %3430 = vmatprep.subr.bf16.mxu0 0
  %3431 = vmatpush1.bf16.msra.mxu0 %v3423
  %3432 = vmatprep.subr.bf16.mxu0 0
  %3433 = vmatpush1.bf16.msra.mxu0 %v3424
  %3434 = vmatprep.subr.bf16.mxu0 0
  %3435 = vmatpush1.bf16.msra.mxu0 %v3425
  %3436 = vmatprep.subr.bf16.mxu0 0
  %3437 = vmatpush1.bf16.msra.mxu0 0
  %3438 = vmatprep.subr.bf16.mxu0 0
  %3439 = vmatpush1.bf16.msra.mxu0 0
  %3440 = vmatprep.subr.bf16.mxu0 0
  %3441 = vmatpush1.bf16.msra.mxu0 0
  %3442 = vmatprep.subr.bf16.mxu0 0
  %3443 = vmatpush1.bf16.msra.mxu0 0
  %3444 = vmatprep.subr.bf16.mxu0 0
  %3445 = vmatpush1.bf16.msra.mxu0 0
  %3446 = vmatprep.subr.bf16.mxu0 0
  %3447 = vmatpush1.bf16.msra.mxu0 0
  %3448 = vmatprep.subr.bf16.mxu0 0
  %3449 = vmatpush1.bf16.msra.mxu0 0
  %3450 = vmatprep.subr.bf16.mxu0 0
  %3451 = vmatpush1.bf16.msra.mxu0 0
  %3452 = vmatprep.subr.bf16.mxu0 0
  %3453 = vmatpush1.bf16.msra.mxu0 0
  %3454 = vmatprep.subr.bf16.mxu0 0
  %3455 = vmatpush1.bf16.msra.mxu0 0
  %3456 = vmatprep.subr.bf16.mxu0 0
  %3457 = vmatpush1.bf16.msra.mxu0 0
  %3458 = vmatprep.subr.bf16.mxu0 0
  %3459 = vmatpush1.bf16.msra.mxu0 0
  %3460 = vmatprep.mubr.bf16.mxu0 0
  %3461 = vmatmul.mubr.bf16.gmra.mrb[0].mxu0 %v3426
  %v3462 = vpop.f32.mrb[0].mxu0
  %v3463 = vadd.f32 0.0, %v3462
  %v3464 = vpop.f32.mrb[0].mxu0
  %v3465 = vpop.f32.mrb[0].mxu0
  %v3466 = vpop.f32.mrb[0].mxu0
  %3467 = vdwg.mxu0
  %v3468 = vpack.c.bf16 %v3412, %v3411
  %v3469 = vpack.c.bf16 %v3414, %v3413
  %v3470 = vpack.c.bf16 %v3416, %v3415
  %v3471 = vpack.c.bf16 %v3418, %v3417
  %3472 = vmatprep.subr.bf16.mxu0 0
  %3473 = vmatpush1.bf16.msra.mxu0 %v3468
  %3474 = vmatprep.subr.bf16.mxu0 0
  %3475 = vmatpush1.bf16.msra.mxu0 %v3469
  %3476 = vmatprep.subr.bf16.mxu0 0
  %3477 = vmatpush1.bf16.msra.mxu0 %v3470
  %3478 = vmatprep.subr.bf16.mxu0 0
  %3479 = vmatpush1.bf16.msra.mxu0 %v3471
  %3480 = vmatprep.subr.bf16.mxu0 0
  %3481 = vmatpush1.bf16.msra.mxu0 0
  %3482 = vmatprep.subr.bf16.mxu0 0
  %3483 = vmatpush1.bf16.msra.mxu0 0
  %3484 = vmatprep.subr.bf16.mxu0 0
  %3485 = vmatpush1.bf16.msra.mxu0 0
  %3486 = vmatprep.subr.bf16.mxu0 0
  %3487 = vmatpush1.bf16.msra.mxu0 0
  %3488 = vmatprep.subr.bf16.mxu0 0
  %3489 = vmatpush1.bf16.msra.mxu0 0
  %3490 = vmatprep.subr.bf16.mxu0 0
  %3491 = vmatpush1.bf16.msra.mxu0 0
  %3492 = vmatprep.subr.bf16.mxu0 0
  %3493 = vmatpush1.bf16.msra.mxu0 0
  %3494 = vmatprep.subr.bf16.mxu0 0
  %3495 = vmatpush1.bf16.msra.mxu0 0
  %3496 = vmatprep.subr.bf16.mxu0 0
  %3497 = vmatpush1.bf16.msra.mxu0 0
  %3498 = vmatprep.subr.bf16.mxu0 0
  %3499 = vmatpush1.bf16.msra.mxu0 0
  %3500 = vmatprep.subr.bf16.mxu0 0
  %3501 = vmatpush1.bf16.msra.mxu0 0
  %3502 = vmatprep.subr.bf16.mxu0 0
  %3503 = vmatpush1.bf16.msra.mxu0 0
  %3504 = vmatprep.mubr.bf16.mxu0 0
  %3505 = vmatmul.mubr.bf16.gmra.mrb[0].mxu0 %v3263
  %v3506 = vpop.f32.mrb[0].mxu0
  %v3507 = vadd.f32 0.0, %v3506
  %v3508 = vpop.f32.mrb[0].mxu0
  %v3509 = vpop.f32.mrb[0].mxu0
  %v3510 = vpop.f32.mrb[0].mxu0
  %3511 = vdwg.mxu0
  %v3512 = vadd.f32 %v3463, %v3507
  %v3513 = vlaneseq
  %v3514 = vshrl.u32 %v3513, 7
  %v3515 = vsub.s32 0, %v3514
  %v3516 = vrot.slane %v3419, %v3515
  %v3517 = vadd.f32 %v3512, %v3516
  %v3518 = vmax.f32 %v3517, 0.0
  %v3519 = vlaneseq
  %v3520 = vshrl.u32 %v3519, 7
  %v3521 = vsub.s32 0, %v3520
  %v3522 = vrot.slane %v3420, %v3521
  %v3523 = vmul.f32 %v3518, %v3522
  %v3524 = vsel %vm3317, %v3523, 0.0
  %3525 = vadd.xlane.f32.xlu0 %v3524
  %v3526 = vpop.xlane.xlu0 %3525
  %v3527 = vlaneseq
  %v3528 = vshrl.u32 %v3527, 7
  %v3529 = vsub.s32 0, %v3528
  %v3530 = vrot.slane %v3421, %v3529
  %v3531 = vadd.f32 %v3526, %v3530
  %3532 = vmatprep.subr.bf16.mxu0 0
  %3533 = vmatpush1.bf16.msra.mxu0 %v3468
  %3534 = vmatprep.subr.bf16.mxu0 0
  %3535 = vmatpush1.bf16.msra.mxu0 %v3469
  %3536 = vmatprep.subr.bf16.mxu0 0
  %3537 = vmatpush1.bf16.msra.mxu0 %v3470
  %3538 = vmatprep.subr.bf16.mxu0 0
  %3539 = vmatpush1.bf16.msra.mxu0 %v3471
  %3540 = vmatprep.subr.bf16.mxu0 0
  %3541 = vmatpush1.bf16.msra.mxu0 0
  %3542 = vmatprep.subr.bf16.mxu0 0
  %3543 = vmatpush1.bf16.msra.mxu0 0
  %3544 = vmatprep.subr.bf16.mxu0 0
  %3545 = vmatpush1.bf16.msra.mxu0 0
  %3546 = vmatprep.subr.bf16.mxu0 0
  %3547 = vmatpush1.bf16.msra.mxu0 0
  %3548 = vmatprep.subr.bf16.mxu0 0
  %3549 = vmatpush1.bf16.msra.mxu0 0
  %3550 = vmatprep.subr.bf16.mxu0 0
  %3551 = vmatpush1.bf16.msra.mxu0 0
  %3552 = vmatprep.subr.bf16.mxu0 0
  %3553 = vmatpush1.bf16.msra.mxu0 0
  %3554 = vmatprep.subr.bf16.mxu0 0
  %3555 = vmatpush1.bf16.msra.mxu0 0
  %3556 = vmatprep.subr.bf16.mxu0 0
  %3557 = vmatpush1.bf16.msra.mxu0 0
  %3558 = vmatprep.subr.bf16.mxu0 0
  %3559 = vmatpush1.bf16.msra.mxu0 0
  %3560 = vmatprep.subr.bf16.mxu0 0
  %3561 = vmatpush1.bf16.msra.mxu0 0
  %3562 = vmatprep.subr.bf16.mxu0 0
  %3563 = vmatpush1.bf16.msra.mxu0 0
  %3564 = vmatprep.mubr.bf16.mxu0 0
  %3565 = vmatmul.mubr.bf16.gmra.mrb[0].mxu0 %v3328
  %v3566 = vpop.f32.mrb[0].mxu0
  %v3567 = vadd.f32 0.0, %v3566
  %v3568 = vpop.f32.mrb[0].mxu0
  %v3569 = vpop.f32.mrb[0].mxu0
  %v3570 = vpop.f32.mrb[0].mxu0
  %3571 = vdwg.mxu0
  %v3572 = vadd.f32 %v3463, %v3567
  %v3573 = vadd.f32 %v3572, %v3516
  %v3574 = vmax.f32 %v3573, 0.0
  %v3575 = vmul.f32 %v3574, %v3522
  %v3576 = vsel %vm3317, %v3575, 0.0
  %3577 = vadd.xlane.f32.xlu0 %v3576
  %v3578 = vpop.xlane.xlu0 %3577
  %v3579 = vadd.f32 %v3578, %v3530
  %v3580 = vsel %vm3378, %v3531, 0.0
  %v3581 = vrot.slane %v3580, 4
  %v3582 = vadd.f32 %v3580, %v3581
  %v3583 = vrot.slane %v3582, 2
  %v3584 = vadd.f32 %v3582, %v3583
  %v3585 = vrot.slane %v3584, 1
  %v3586 = vadd.f32 %v3584, %v3585
  %v3587 = vmul.f32 %v3586, %v3386
  %v3588 = vmul.f32 %v3579, 1.442695
  %v3589 = vpow.pop %v3588
  %v3590 = vsel %vm3378, %v3589, 0.0
  %v3591 = vrot.slane %v3590, 4
  %v3592 = vadd.f32 %v3590, %v3591
  %v3593 = vrot.slane %v3592, 2
  %v3594 = vadd.f32 %v3592, %v3593
  %v3595 = vrot.slane %v3594, 1
  %v3596 = vadd.f32 %v3594, %v3595
  %v3597 = vmul.f32 %v3596, %v3386
  %v3598 = vadd.f32 %v3597, 1e-08
  %v3599 = vlog2.pop %v3598
  %v3600 = vmul.f32 %v3599, 0.6931472
  %v3601 = vsub.f32 %v3587, %v3600
  %v3602 = vmul.f32 %v3191, %v3601
  %v3603 = vsub.f32 %v3401, %v3602
  %s3604 = scalar_lea.vmem %s21, 256
  %v3605 = vld [vmem:[%s3604] sm:$0xff]
  %v3606 = vld [vmem:[%s3604 + $0x8] sm:$0xff]
  %v3607 = vld [vmem:[%s3604 + $0x10] sm:$0xff]
  %v3608 = vld [vmem:[%s3604 + $0x18] sm:$0xff]
  %v3609 = vld [vmem:[%s3604 + $0x20] sm:$0xff]
  %v3610 = vld [vmem:[%s3604 + $0x28] sm:$0xff]
  %v3611 = vld [vmem:[%s3604 + $0x30] sm:$0xff]
  %v3612 = vld [vmem:[%s3604 + $0x38] sm:$0xff]
  %v3613 = vld [vmem:[%s3604 + $0x40] sm:$0xff]
  %v3614 = vld [vmem:[%s3604 + $0x48] sm:$0xff]
  %v3615 = vld [vmem:[%s3604 + $0x50] sm:$0xff]
  %v3616 = vld [vmem:[%s3604 + $0x58] sm:$0xff]
  %v3617 = vld [vmem:[%s3604 + $0x60] sm:$0xff]
  %v3618 = vld [vmem:[%s3604 + $0x68] sm:$0xff]
  %v3619 = vld [vmem:[%s3604 + $0x70] sm:$0xff]
  %v3620 = vld [vmem:[%s3604 + $0x78] sm:$0xff]
  %v3621 = vld [vmem:[%s22 + $0x2] sm:$0x1]
  %v3622 = vld [vmem:[%s23 + $0x2] sm:$0x1]
  %v3623 = vld [vmem:[%s24 + $0x2] sm:$0x1]
  %v3624 = vpack.c.bf16 %v3606, %v3605
  %v3625 = vpack.c.bf16 %v3608, %v3607
  %v3626 = vpack.c.bf16 %v3610, %v3609
  %v3627 = vpack.c.bf16 %v3612, %v3611
  %3628 = vmatprep.subr.bf16.mxu0 0
  %3629 = vmatpush1.bf16.msra.mxu0 %v3624
  %3630 = vmatprep.subr.bf16.mxu0 0
  %3631 = vmatpush1.bf16.msra.mxu0 %v3625
  %3632 = vmatprep.subr.bf16.mxu0 0
  %3633 = vmatpush1.bf16.msra.mxu0 %v3626
  %3634 = vmatprep.subr.bf16.mxu0 0
  %3635 = vmatpush1.bf16.msra.mxu0 %v3627
  %3636 = vmatprep.subr.bf16.mxu0 0
  %3637 = vmatpush1.bf16.msra.mxu0 0
  %3638 = vmatprep.subr.bf16.mxu0 0
  %3639 = vmatpush1.bf16.msra.mxu0 0
  %3640 = vmatprep.subr.bf16.mxu0 0
  %3641 = vmatpush1.bf16.msra.mxu0 0
  %3642 = vmatprep.subr.bf16.mxu0 0
  %3643 = vmatpush1.bf16.msra.mxu0 0
  %3644 = vmatprep.subr.bf16.mxu0 0
  %3645 = vmatpush1.bf16.msra.mxu0 0
  %3646 = vmatprep.subr.bf16.mxu0 0
  %3647 = vmatpush1.bf16.msra.mxu0 0
  %3648 = vmatprep.subr.bf16.mxu0 0
  %3649 = vmatpush1.bf16.msra.mxu0 0
  %3650 = vmatprep.subr.bf16.mxu0 0
  %3651 = vmatpush1.bf16.msra.mxu0 0
  %3652 = vmatprep.subr.bf16.mxu0 0
  %3653 = vmatpush1.bf16.msra.mxu0 0
  %3654 = vmatprep.subr.bf16.mxu0 0
  %3655 = vmatpush1.bf16.msra.mxu0 0
  %3656 = vmatprep.subr.bf16.mxu0 0
  %3657 = vmatpush1.bf16.msra.mxu0 0
  %3658 = vmatprep.subr.bf16.mxu0 0
  %3659 = vmatpush1.bf16.msra.mxu0 0
  %3660 = vmatprep.mubr.bf16.mxu0 0
  %3661 = vmatmul.mubr.bf16.gmra.mrb[0].mxu0 %v3217
  %v3662 = vpop.f32.mrb[0].mxu0
  %v3663 = vadd.f32 0.0, %v3662
  %v3664 = vpop.f32.mrb[0].mxu0
  %v3665 = vpop.f32.mrb[0].mxu0
  %v3666 = vpop.f32.mrb[0].mxu0
  %3667 = vdwg.mxu0
  %v3668 = vpack.c.bf16 %v3614, %v3613
  %v3669 = vpack.c.bf16 %v3616, %v3615
  %v3670 = vpack.c.bf16 %v3618, %v3617
  %v3671 = vpack.c.bf16 %v3620, %v3619
  %3672 = vmatprep.subr.bf16.mxu0 0
  %3673 = vmatpush1.bf16.msra.mxu0 %v3668
  %3674 = vmatprep.subr.bf16.mxu0 0
  %3675 = vmatpush1.bf16.msra.mxu0 %v3669
  %3676 = vmatprep.subr.bf16.mxu0 0
  %3677 = vmatpush1.bf16.msra.mxu0 %v3670
  %3678 = vmatprep.subr.bf16.mxu0 0
  %3679 = vmatpush1.bf16.msra.mxu0 %v3671
  %3680 = vmatprep.subr.bf16.mxu0 0
  %3681 = vmatpush1.bf16.msra.mxu0 0
  %3682 = vmatprep.subr.bf16.mxu0 0
  %3683 = vmatpush1.bf16.msra.mxu0 0
  %3684 = vmatprep.subr.bf16.mxu0 0
  %3685 = vmatpush1.bf16.msra.mxu0 0
  %3686 = vmatprep.subr.bf16.mxu0 0
  %3687 = vmatpush1.bf16.msra.mxu0 0
  %3688 = vmatprep.subr.bf16.mxu0 0
  %3689 = vmatpush1.bf16.msra.mxu0 0
  %3690 = vmatprep.subr.bf16.mxu0 0
  %3691 = vmatpush1.bf16.msra.mxu0 0
  %3692 = vmatprep.subr.bf16.mxu0 0
  %3693 = vmatpush1.bf16.msra.mxu0 0
  %3694 = vmatprep.subr.bf16.mxu0 0
  %3695 = vmatpush1.bf16.msra.mxu0 0
  %3696 = vmatprep.subr.bf16.mxu0 0
  %3697 = vmatpush1.bf16.msra.mxu0 0
  %3698 = vmatprep.subr.bf16.mxu0 0
  %3699 = vmatpush1.bf16.msra.mxu0 0
  %3700 = vmatprep.subr.bf16.mxu0 0
  %3701 = vmatpush1.bf16.msra.mxu0 0
  %3702 = vmatprep.subr.bf16.mxu0 0
  %3703 = vmatpush1.bf16.msra.mxu0 0
  %3704 = vmatprep.mubr.bf16.mxu0 0
  %3705 = vmatmul.mubr.bf16.gmra.mrb[0].mxu0 %v3426
  %v3706 = vpop.f32.mrb[0].mxu0
  %v3707 = vadd.f32 0.0, %v3706
  %v3708 = vpop.f32.mrb[0].mxu0
  %v3709 = vpop.f32.mrb[0].mxu0
  %v3710 = vpop.f32.mrb[0].mxu0
  %3711 = vdwg.mxu0
  %v3712 = vadd.f32 %v3663, %v3707
  %v3713 = vlaneseq
  %v3714 = vshrl.u32 %v3713, 7
  %v3715 = vsub.s32 0, %v3714
  %v3716 = vrot.slane %v3621, %v3715
  %v3717 = vadd.f32 %v3712, %v3716
  %v3718 = vmax.f32 %v3717, 0.0
  %v3719 = vlaneseq
  %v3720 = vshrl.u32 %v3719, 7
  %v3721 = vsub.s32 0, %v3720
  %v3722 = vrot.slane %v3622, %v3721
  %v3723 = vmul.f32 %v3718, %v3722
  %v3724 = vsel %vm3317, %v3723, 0.0
  %3725 = vadd.xlane.f32.xlu0 %v3724
  %v3726 = vpop.xlane.xlu0 %3725
  %v3727 = vlaneseq
  %v3728 = vshrl.u32 %v3727, 7
  %v3729 = vsub.s32 0, %v3728
  %v3730 = vrot.slane %v3623, %v3729
  %v3731 = vadd.f32 %v3726, %v3730
  %v3732 = vpack.c.bf16 %v3186, %v3186
  %v3734 = vsel %vm1549, %v3732, 0
  %3736 = vmatprep.subr.bf16.mxu0 0
  %3737 = vmatpush1.bf16.msra.mxu0 %v3668
  %3738 = vmatprep.subr.bf16.mxu0 0
  %3739 = vmatpush1.bf16.msra.mxu0 %v3669
  %3740 = vmatprep.subr.bf16.mxu0 0
  %3741 = vmatpush1.bf16.msra.mxu0 %v3670
  %3742 = vmatprep.subr.bf16.mxu0 0
  %3743 = vmatpush1.bf16.msra.mxu0 %v3671
  %3744 = vmatprep.subr.bf16.mxu0 0
  %3745 = vmatpush1.bf16.msra.mxu0 0
  %3746 = vmatprep.subr.bf16.mxu0 0
  %3747 = vmatpush1.bf16.msra.mxu0 0
  %3748 = vmatprep.subr.bf16.mxu0 0
  %3749 = vmatpush1.bf16.msra.mxu0 0
  %3750 = vmatprep.subr.bf16.mxu0 0
  %3751 = vmatpush1.bf16.msra.mxu0 0
  %3752 = vmatprep.subr.bf16.mxu0 0
  %3753 = vmatpush1.bf16.msra.mxu0 0
  %3754 = vmatprep.subr.bf16.mxu0 0
  %3755 = vmatpush1.bf16.msra.mxu0 0
  %3756 = vmatprep.subr.bf16.mxu0 0
  %3757 = vmatpush1.bf16.msra.mxu0 0
  %3758 = vmatprep.subr.bf16.mxu0 0
  %3759 = vmatpush1.bf16.msra.mxu0 0
  %3760 = vmatprep.subr.bf16.mxu0 0
  %3761 = vmatpush1.bf16.msra.mxu0 0
  %3762 = vmatprep.subr.bf16.mxu0 0
  %3763 = vmatpush1.bf16.msra.mxu0 0
  %3764 = vmatprep.subr.bf16.mxu0 0
  %3765 = vmatpush1.bf16.msra.mxu0 0
  %3766 = vmatprep.subr.bf16.mxu0 0
  %3767 = vmatpush1.bf16.msra.mxu0 0
  %3768 = vmatprep.mubr.bf16.mxu0 0
  %3769 = vmatmul.mubr.bf16.gmra.mrb[0].mxu0 %v3734
  %v3770 = vpop.f32.mrb[0].mxu0
  %v3771 = vadd.f32 0.0, %v3770
  %v3772 = vpop.f32.mrb[0].mxu0
  %v3773 = vpop.f32.mrb[0].mxu0
  %v3774 = vpop.f32.mrb[0].mxu0
  %3775 = vdwg.mxu0
  %v3776 = vadd.f32 %v3663, %v3771
  %v3777 = vadd.f32 %v3776, %v3716
  %v3778 = vmax.f32 %v3777, 0.0
  %v3779 = vmul.f32 %v3778, %v3722
  %v3780 = vsel %vm3317, %v3779, 0.0
  %3781 = vadd.xlane.f32.xlu0 %v3780
  %v3782 = vpop.xlane.xlu0 %3781
  %v3783 = vadd.f32 %v3782, %v3730
  %v3784 = vsel %vm3378, %v3731, 0.0
  %v3785 = vrot.slane %v3784, 4
  %v3786 = vadd.f32 %v3784, %v3785
  %v3787 = vrot.slane %v3786, 2
  %v3788 = vadd.f32 %v3786, %v3787
  %v3789 = vrot.slane %v3788, 1
  %v3790 = vadd.f32 %v3788, %v3789
  %v3791 = vmul.f32 %v3790, %v3386
  %v3792 = vmul.f32 %v3783, 1.442695
  %v3793 = vpow.pop %v3792
  %v3794 = vsel %vm3378, %v3793, 0.0
  %v3795 = vrot.slane %v3794, 4
  %v3796 = vadd.f32 %v3794, %v3795
  %v3797 = vrot.slane %v3796, 2
  %v3798 = vadd.f32 %v3796, %v3797
  %v3799 = vrot.slane %v3798, 1
  %v3800 = vadd.f32 %v3798, %v3799
  %v3801 = vmul.f32 %v3800, %v3386
  %v3802 = vadd.f32 %v3801, 1e-08
  %v3803 = vlog2.pop %v3802
  %v3804 = vmul.f32 %v3803, 0.6931472
  %v3805 = vsub.f32 %v3791, %v3804
  %v3808 = vunpack.c.l.s4 1966171168
  %v3809 = vunpack.c.0.s8 %v3808
  %v3810 = vlaneseq
  %v3811 = vshrl.u32 %v3810, 7
  %v3812 = vsub.s32 %v3809, %v3811
  %v3813 = vrot.slane %v3805, %v3812
  %v3815 = vunpack.c.l.s4 1966171168
  %v3816 = vunpack.c.0.s8 %v3815
  %v3817 = vlaneseq
  %v3818 = vshrl.u32 %v3817, 7
  %v3819 = vsub.s32 %v3816, %v3818
  %v3820 = vrot.slane %v3813, %v3819
  %3821 = vrot.lane.b32.xlu0 %v3820, 1
  %v3822 = vpop.permute.xlu0 %3821
  %v3824 = vmul.f32 %v3191, %v3822
  %v3826 = vlaneseq
  %v3827 = vshrl.u32 %v3826, 7
  %v3828 = vsub.s32 0, %v3827
  %v3829 = vrot.slane %v3824, %v3828
  %3830 = vrot.lane.b32.xlu0 %v3829, 127
  %v3831 = vpop.permute.xlu0 %3830
  %v3833 = vsub.f32 %v3603, %v3831
  %v3835 = vrot.slane %v2518, 2
  %v3837 = vcombine.low %v2523, %v3835
  %v3839 = vunpack.c.l.s4 1983009808
  %v3840 = vunpack.c.0.s8 %v3839
  %v3841 = vlaneseq
  %v3842 = vshrl.u32 %v3841, 7
  %v3843 = vsub.s32 %v3840, %v3842
  %v3844 = vrot.slane %v3837, %v3843
  %vm3846 = vcmask 519170
  %vm3847 = vmor %vm3846, %vm3064
  %3848 = vst.msk [vmem:[%s27] sm:$0xf] %vm3847, %v3844
  %v3849 = vlaneseq
  %v3850 = vand.u32 %v3849, 127
  %vm3851 = vcmp.eq.s32.totalorder %v3850, 0
  %v3852 = vstv %s3090
  %v3853 = vsel %vm3851, %v3852, 0.0
  %vm3854 = vcmp.eq.s32.totalorder %v3850, 1
  %3856 = vset.pattern.permute.xlu0 0
  %3857 = vperm.xlu0 %3856, %v3833
  %v3858 = vpop.permute.xlu0 %3857
  %v3860 = vsel %vm3854, %v3858, 0.0
  %v3861 = vadd.f32 %v3853, %v3860
  %3862 = vst [vmem:[%s28] sm:$0x1] %v3861
  // Predicated region
  $region106: #{mma_forward.1} parent=0 // pred_check
    _
  $region107: #{mma_forward.1} parent=0 // pred_check_branch
    %3864 = sbr.rel (0) target = $region109
  $region108: #{mma_forward.1} parent=0 // pred_region
    _
  $region109: #{mma_forward.1} parent=0 // pred_fallthru
    _
  // Predicated region
  $region110: #{mma_forward.1} parent=0 // pred_check
    _
  $region111: #{mma_forward.1} parent=0 // pred_check_branch
    %3866 = sbr.rel (0) target = $region113
  $region112: #{mma_forward.1} parent=0 // pred_region
    _
  $region113: #{mma_forward.1} parent=0 // pred_fallthru
    _
  // Predicated region
  $region114: #{mma_forward.1} parent=0 // pred_check
    _
  $region115: #{mma_forward.1} parent=0 // pred_check_branch
    %3868 = sbr.rel (0) target = $region117
  $region116: #{mma_forward.1} parent=0 // pred_region
    _
  $region117: #{mma_forward.1} parent=0 // pred_fallthru
    _
  // Predicated region
  $region118: #{mma_forward.1} parent=0 // pred_check
    _
  $region119: #{mma_forward.1} parent=0 // pred_check_branch
    %3870 = sbr.rel (0) target = $region121
  $region120: #{mma_forward.1} parent=0 // pred_region
    _
  $region121: #{mma_forward.1} parent=0 // pred_fallthru
    _
  // Predicated region
  $region122: #{mma_forward.1} parent=0 // pred_check
    _
  $region123: #{mma_forward.1} parent=0 // pred_check_branch
    %3872 = sbr.rel (0) target = $region125
  $region124: #{mma_forward.1} parent=0 // pred_region
    _
  $region125: #{mma_forward.1} parent=0 // pred_fallthru
    _
  // Predicated region
  $region126: #{mma_forward.1} parent=0 // pred_check
    _
  $region127: #{mma_forward.1} parent=0 // pred_check_branch
    %3874 = sbr.rel (0) target = $region129
  $region128: #{mma_forward.1} parent=0 // pred_region
    _
  $region129: #{mma_forward.1} parent=0 // pred_fallthru
    _

</llo_original>
